<compile_context>
chip_gen: v7x
topology: tpu7x:2x2x1
jax: 0.10.0
libtpu: 0.0.40
codegen_flags: <defaults>
</compile_context>

<pallas_src>
import jax
import jax.numpy as jnp
from jax.experimental import pallas as pl
from jax.experimental.pallas import tpu as pltpu


def _round_up(x, m):
    return (x + m - 1) // m * m


# ------------------------------- wrapper ----------------------------------- #

def single_conv_forward(x_ncdhw, weight, bias, gamma, beta, eps=1e-5,
                        max_tile_cols=4096):
    """Forward of single_conv (Conv3d 3x3x3 s=1 p=1 -> BatchNorm3d(train) -> ReLU).

    x_ncdhw: (N, Cin, D, H, W) f32
    weight : (Cout, Cin, 3, 3, 3) f32 (PyTorch Conv3d layout)
    bias   : (Cout,) f32 -- ignored: exact forward no-op under train-mode BN
    gamma, beta: (Cout,) BatchNorm affine params
    returns: (N, Cout, D, H, W) f32
    """
    del bias  # train-mode BN subtracts the batch mean, which absorbs the bias.

    N, Cin, D, H, W = x_ncdhw.shape
    Cout = weight.shape[0]
    Cin_p = _round_up(Cin, 16)     # bf16 packs 16 sublanes per vreg
    Cout_p = _round_up(Cout, 16)

    Dp, Hp, Wp = D + 2, H + 2, W + 2
    HWp = Hp * Wp
    P = Dp * HWp                        # flattened padded volume
    delta = HWp + Wp + 1                # flat offset of the (1,1,1) center tap
    M = D * HWp                         # conv columns: q = d*HWp + h*Wp + w

    # ---- spatial tiling along the flat column axis (lane-dense, with halo) ----
    halo = 2 * delta                    # look-ahead columns each tile needs
    Bh = _round_up(halo, 128)           # lane-aligned halo block (divides Mt)
    Mt = min(max(Bh, _round_up(max_tile_cols, Bh)), _round_up(M, Bh))
    nt = -(-M // Mt)                    # number of spatial tiles
    rblk = Mt // Bh                     # halo-blocks per tile (Bh | Mt)
    L = (nt + 1) * Mt                   # padded flat length (room for the halo)

    # ---- input: bf16, pad channels + 'same' spatial pad, flatten, pad flat ----
    xpad = jnp.pad(x_ncdhw.astype(jnp.bfloat16),
                   ((0, 0), (0, Cin_p - Cin), (1, 1), (1, 1), (1, 1)))
    xf = jnp.pad(xpad.reshape(N, Cin_p, P), ((0, 0), (0, 0), (0, L - P)))

    # ---- weights: (Cout,Cin,3,3,3) -> (27, Cout_p, Cin_p), tap-major ---------
    wpad = jnp.pad(weight.astype(jnp.bfloat16),
                   ((0, Cout_p - Cout), (0, Cin_p - Cin), (0, 0), (0, 0), (0, 0)))
    wtap = jnp.transpose(wpad, (2, 3, 4, 0, 1)).reshape(27, Cout_p, Cin_p)

    # flat tap offsets: column q reads input flat positions q + s for each tap
    tap_starts = tuple(kd * HWp + kh * Wp + kw
                       for kd in range(3) for kh in range(3) for kw in range(3))

    # interior mask over columns (1 = real output voxel), tiled as (nt, 1, Mt)
    interior = jnp.zeros((D, Hp, Wp), jnp.float32).at[:, :H, :W].set(1.0)
    mask = jnp.pad(interior.reshape(M), (0, nt * Mt - M)).reshape(nt, 1, Mt)

    # ------------------------------ shared specs ------------------------------ #
    w_spec = pl.BlockSpec((27, Cout_p, Cin_p), lambda n, t: (0, 0, 0))
    lo_spec = pl.BlockSpec((1, Cin_p, Mt), lambda n, t: (n, 0, t))
    hi_spec = pl.BlockSpec((1, Cin_p, Bh), lambda n, t: (n, 0, (t + 1) * rblk))
    mask_spec = pl.BlockSpec((1, 1, Mt), lambda n, t: (t, 0, 0))

    def stage(lo_ref, hi_ref, buf_ref):
        # One lane-aligned staging copy per step (tile + halo), so every tap
        # slice below is a contiguous static-offset read of a single buffer.
        buf_ref[:, pl.ds(0, Mt)] = lo_ref[0]
        buf_ref[:, pl.ds(Mt, Bh)] = hi_ref[0]

    def conv_tile(w_ref, buf_ref):
        # 27 accumulating MXU dots (bf16 in, f32 accumulate), no im2col.
        acc = None
        for ti, s in enumerate(tap_starts):
            part = jnp.dot(w_ref[ti], buf_ref[:, pl.ds(s, Mt)],
                           preferred_element_type=jnp.float32)
            acc = part if acc is None else acc + part
        return acc

    conv_flops = 2 * 27 * Cin_p * Cout_p * Mt * nt * N
    x_bytes = N * nt * Cin_p * (Mt + Bh) * 2

    # ----------------------- pass 1: conv -> BN statistics -------------------- #
    def stats_kernel(w_ref, lo_ref, hi_ref, mask_ref, sum_ref, ssq_ref, buf_ref):
        stage(lo_ref, hi_ref, buf_ref)
        y = conv_tile(w_ref, buf_ref)
        ym = y * mask_ref[0]                       # zero non-interior columns
        sum_ref[0, 0] = jnp.sum(ym, axis=1, keepdims=True)
        ssq_ref[0, 0] = jnp.sum(ym * y, axis=1, keepdims=True)

    sums, ssqs = pl.pallas_call(
        stats_kernel,
        out_shape=(jax.ShapeDtypeStruct((N, nt, Cout_p, 1), jnp.float32),
                   jax.ShapeDtypeStruct((N, nt, Cout_p, 1), jnp.float32)),
        grid=(N, nt),
        in_specs=[w_spec, lo_spec, hi_spec, mask_spec],
        out_specs=(pl.BlockSpec((1, 1, Cout_p, 1), lambda n, t: (n, t, 0, 0)),
                   pl.BlockSpec((1, 1, Cout_p, 1), lambda n, t: (n, t, 0, 0))),
        scratch_shapes=[pltpu.VMEM((Cin_p, Mt + Bh), jnp.bfloat16)],
        compiler_params=pltpu.CompilerParams(
            dimension_semantics=("parallel", "parallel"),
            vmem_limit_bytes=32 * 1024 * 1024),
        cost_estimate=pl.CostEstimate(
            flops=conv_flops, transcendentals=0,
            bytes_accessed=x_bytes + N * nt * Mt * 4),
    )(wtap, xf, xf, mask)

    # ------- finish the tiny (N*nt, Cout) reduction; fold BN into scale/shift --
    count = jnp.float32(N * D * H * W)
    tot = jnp.sum(sums[..., 0], axis=(0, 1))                 # (Cout_p,)
    tot2 = jnp.sum(ssqs[..., 0], axis=(0, 1))
    mean = tot / count
    var = jnp.maximum(tot2 / count - mean * mean, 0.0)       # biased var (PyTorch)
    gamma_p = jnp.pad(gamma, (0, Cout_p - Cout))
    beta_p = jnp.pad(beta, (0, Cout_p - Cout))
    scale1 = gamma_p * jax.lax.rsqrt(var + eps)
    shift1 = beta_p - mean * scale1
    scale = scale1.reshape(1, Cout_p, 1).astype(jnp.float32)
    shift = shift1.reshape(1, Cout_p, 1).astype(jnp.float32)

    # -------------- pass 2: recompute conv, apply folded BN + ReLU ------------ #
    def conv_bn_relu_kernel(w_ref, lo_ref, hi_ref, sc_ref, sh_ref, o_ref, buf_ref):
        stage(lo_ref, hi_ref, buf_ref)
        y = conv_tile(w_ref, buf_ref)
        o_ref[0] = jnp.maximum(y * sc_ref[0] + sh_ref[0], 0.0)

    out_flat = pl.pallas_call(
        conv_bn_relu_kernel,
        out_shape=jax.ShapeDtypeStruct((N, Cout_p, nt * Mt), jnp.float32),
        grid=(N, nt),
        in_specs=[w_spec, lo_spec, hi_spec,
                  pl.BlockSpec((1, Cout_p, 1), lambda n, t: (0, 0, 0)),
                  pl.BlockSpec((1, Cout_p, 1), lambda n, t: (0, 0, 0))],
        out_specs=pl.BlockSpec((1, Cout_p, Mt), lambda n, t: (n, 0, t)),
        scratch_shapes=[pltpu.VMEM((Cin_p, Mt + Bh), jnp.bfloat16)],
        compiler_params=pltpu.CompilerParams(
            dimension_semantics=("parallel", "parallel"),
            vmem_limit_bytes=32 * 1024 * 1024),
        cost_estimate=pl.CostEstimate(
            flops=conv_flops, transcendentals=0,
            bytes_accessed=x_bytes + N * nt * Cout_p * Mt * 4),
    )(wtap, xf, xf, scale, shift)

    # --- interior extraction: layout is already NCDHW-flat (no pad round trip) -
    out = out_flat[:, :Cout, :M].reshape(N, Cout, D, Hp, Wp)[:, :, :, :H, :W]
    return out


# ---------------------------- reference (JAX) ------------------------------- #

def reference_forward(x_ncdhw, weight, bias, gamma, beta, eps=1e-5):
    # Same math as the PyTorch module in training mode. Conv inputs are quantized
    # to bf16 (accumulated in f32) to mirror the Pallas path's MXU precision
    # choice, so the comparison tolerance can stay tight.
    x = jnp.transpose(x_ncdhw, (0, 2, 3, 4, 1)).astype(jnp.bfloat16)
    w = jnp.transpose(weight, (2, 3, 4, 1, 0)).astype(jnp.bfloat16)
    y = jax.lax.conv_general_dilated(
        x, w, window_strides=(1, 1, 1), padding="SAME",
        dimension_numbers=("NDHWC", "DHWIO", "NDHWC"),
        preferred_element_type=jnp.float32) + bias
    mean = jnp.mean(y, axis=(0, 1, 2, 3))
    var = jnp.mean(jnp.square(y - mean), axis=(0, 1, 2, 3))
    out = jnp.maximum((y - mean) / jnp.sqrt(var + eps) * gamma + beta, 0.0)
    return jnp.transpose(out, (0, 4, 1, 2, 3))


# --------------------------------- main ------------------------------------ #

if __name__ == "__main__":
    N, Cin, Cout, D, H, W = 2, 4, 8, 8, 8, 8

    key = jax.random.PRNGKey(0)
    kx, kw_, kb = jax.random.split(key, 3)

    x = jax.random.normal(kx, (N, Cin, D, H, W), dtype=jnp.float32)
    weight = jax.random.normal(kw_, (Cout, Cin, 3, 3, 3), dtype=jnp.float32) * 0.1
    bias = jax.random.normal(kb, (Cout,), dtype=jnp.float32) * 0.1
    gamma = jnp.ones((Cout,), jnp.float32)    # BatchNorm3d default affine params
    beta = jnp.zeros((Cout,), jnp.float32)

    # max_tile_cols=512 forces >1 spatial tile at this toy size, exercising the
    # halo-tiled pipeline; raise it (and the VMEM limit) for real volumes.
    out = jax.block_until_ready(
        single_conv_forward(x, weight, bias, gamma, beta, max_tile_cols=512))
    ref = jax.block_until_ready(reference_forward(x, weight, bias, gamma, beta))

    assert out.shape == (N, Cout, D, H, W)
    assert jnp.allclose(out, ref, rtol=2e-3, atol=2e-3), "mismatch vs reference"

    print("KERNEL_OK")
</pallas_src>

<mosaic_0001>
module attributes {stable_mosaic.version = 11 : i64} {
  func.func @stats_kernel(%arg0: i32, %arg1: i32, %arg2: memref<27x16x16xbf16, #tpu.memory_space<vmem>>, %arg3: memref<1x16x512xbf16, #tpu.memory_space<vmem>>, %arg4: memref<1x16x256xbf16, #tpu.memory_space<vmem>>, %arg5: memref<1x1x512xf32, #tpu.memory_space<vmem>>, %arg6: memref<1x1x16x1xf32, #tpu.memory_space<vmem>>, %arg7: memref<1x1x16x1xf32, #tpu.memory_space<vmem>>, %arg8: memref<16x768xbf16, #tpu.memory_space<vmem>>) attributes {dimension_semantics = [#tpu.dimension_semantics<parallel>, #tpu.dimension_semantics<parallel>], iteration_bounds = array<i64: 2, 2>, scalar_prefetch = 0 : i64, scratch_operands = 1 : i64, tpu.core_type = #tpu.core_type<tc>, window_params = [{pipeline_mode = #tpu.pipeline_mode<synchronous>, transform_indices = @transform_0, window_bounds = array<i64: 27, 16, 16>}, {transform_indices = @transform_1, window_bounds = array<i64: 1, 16, 512>}, {transform_indices = @transform_2, window_bounds = array<i64: 1, 16, 256>}, {transform_indices = @transform_3, window_bounds = array<i64: 1, 1, 512>}, {transform_indices = @transform_4, window_bounds = array<i64: 1, 1, 16, 1>}, {transform_indices = @transform_5, window_bounds = array<i64: 1, 1, 16, 1>}]} {
    %c0 = arith.constant 0 : index
    %c0_0 = arith.constant 0 : index
    %c0_1 = arith.constant 0 : index
    %0 = vector.load %arg3[%c0, %c0_0, %c0_1] : memref<1x16x512xbf16, #tpu.memory_space<vmem>>, vector<1x16x512xbf16>
    %1 = vector.shape_cast %0 : vector<1x16x512xbf16> to vector<16x512xbf16>
    %c0_2 = arith.constant 0 : index
    %c0_3 = arith.constant 0 : index
    %2 = vector.load %arg8[%c0_2, %c0_3] : memref<16x768xbf16, #tpu.memory_space<vmem>>, vector<16x512xbf16>
    tpu.vector_store %arg8[%c0_2, %c0_3], %1 {strides = array<i32>} : memref<16x768xbf16, #tpu.memory_space<vmem>>, vector<16x512xbf16>,
    %c0_4 = arith.constant 0 : index
    %c0_5 = arith.constant 0 : index
    %c0_6 = arith.constant 0 : index
    %3 = vector.load %arg4[%c0_4, %c0_5, %c0_6] : memref<1x16x256xbf16, #tpu.memory_space<vmem>>, vector<1x16x256xbf16>
    %4 = vector.shape_cast %3 : vector<1x16x256xbf16> to vector<16x256xbf16>
    %c0_7 = arith.constant 0 : index
    %c512 = arith.constant 512 : index
    %5 = vector.load %arg8[%c0_7, %c512] : memref<16x768xbf16, #tpu.memory_space<vmem>>, vector<16x256xbf16>
    tpu.vector_store %arg8[%c0_7, %c512], %4 {strides = array<i32>} : memref<16x768xbf16, #tpu.memory_space<vmem>>, vector<16x256xbf16>,
    %c0_8 = arith.constant 0 : index
    %c0_9 = arith.constant 0 : index
    %c0_10 = arith.constant 0 : index
    %6 = vector.load %arg2[%c0_8, %c0_9, %c0_10] : memref<27x16x16xbf16, #tpu.memory_space<vmem>>, vector<1x16x16xbf16>
    %7 = vector.shape_cast %6 : vector<1x16x16xbf16> to vector<16x16xbf16>
    %c0_11 = arith.constant 0 : index
    %c0_12 = arith.constant 0 : index
    %8 = vector.load %arg8[%c0_11, %c0_12] : memref<16x768xbf16, #tpu.memory_space<vmem>>, vector<16x512xbf16>
    %cst = arith.constant dense<0.000000e+00> : vector<16x512xf32>
    %9 = tpu.matmul %7, %8, %cst {dimension_numbers = #tpu.dot_dimension_numbers<[1], [0], [0], [1], [0, 0, 1, 1], [], []>} : vector<16x16xbf16>, vector<16x512xbf16>, vector<16x512xf32> -> vector<16x512xf32>
    %c1 = arith.constant 1 : index
    %c0_13 = arith.constant 0 : index
    %c0_14 = arith.constant 0 : index
    %10 = vector.load %arg2[%c1, %c0_13, %c0_14] : memref<27x16x16xbf16, #tpu.memory_space<vmem>>, vector<1x16x16xbf16>
    %11 = vector.shape_cast %10 : vector<1x16x16xbf16> to vector<16x16xbf16>
    %c0_15 = arith.constant 0 : index
    %c1_16 = arith.constant 1 : index
    %12 = vector.load %arg8[%c0_15, %c1_16] : memref<16x768xbf16, #tpu.memory_space<vmem>>, vector<16x512xbf16>
    %cst_17 = arith.constant dense<0.000000e+00> : vector<16x512xf32>
    %13 = tpu.matmul %11, %12, %cst_17 {dimension_numbers = #tpu.dot_dimension_numbers<[1], [0], [0], [1], [0, 0, 1, 1], [], []>} : vector<16x16xbf16>, vector<16x512xbf16>, vector<16x512xf32> -> vector<16x512xf32>
    %14 = arith.addf %9, %13 : vector<16x512xf32>
    %c2 = arith.constant 2 : index
    %c0_18 = arith.constant 0 : index
    %c0_19 = arith.constant 0 : index
    %15 = vector.load %arg2[%c2, %c0_18, %c0_19] : memref<27x16x16xbf16, #tpu.memory_space<vmem>>, vector<1x16x16xbf16>
    %16 = vector.shape_cast %15 : vector<1x16x16xbf16> to vector<16x16xbf16>
    %c0_20 = arith.constant 0 : index
    %c2_21 = arith.constant 2 : index
    %17 = vector.load %arg8[%c0_20, %c2_21] : memref<16x768xbf16, #tpu.memory_space<vmem>>, vector<16x512xbf16>
    %cst_22 = arith.constant dense<0.000000e+00> : vector<16x512xf32>
    %18 = tpu.matmul %16, %17, %cst_22 {dimension_numbers = #tpu.dot_dimension_numbers<[1], [0], [0], [1], [0, 0, 1, 1], [], []>} : vector<16x16xbf16>, vector<16x512xbf16>, vector<16x512xf32> -> vector<16x512xf32>
    %19 = arith.addf %14, %18 : vector<16x512xf32>
    %c3 = arith.constant 3 : index
    %c0_23 = arith.constant 0 : index
    %c0_24 = arith.constant 0 : index
    %20 = vector.load %arg2[%c3, %c0_23, %c0_24] : memref<27x16x16xbf16, #tpu.memory_space<vmem>>, vector<1x16x16xbf16>
    %21 = vector.shape_cast %20 : vector<1x16x16xbf16> to vector<16x16xbf16>
    %c0_25 = arith.constant 0 : index
    %c10 = arith.constant 10 : index
    %22 = vector.load %arg8[%c0_25, %c10] : memref<16x768xbf16, #tpu.memory_space<vmem>>, vector<16x512xbf16>
    %cst_26 = arith.constant dense<0.000000e+00> : vector<16x512xf32>
    %23 = tpu.matmul %21, %22, %cst_26 {dimension_numbers = #tpu.dot_dimension_numbers<[1], [0], [0], [1], [0, 0, 1, 1], [], []>} : vector<16x16xbf16>, vector<16x512xbf16>, vector<16x512xf32> -> vector<16x512xf32>
    %24 = arith.addf %19, %23 : vector<16x512xf32>
    %c4 = arith.constant 4 : index
    %c0_27 = arith.constant 0 : index
    %c0_28 = arith.constant 0 : index
    %25 = vector.load %arg2[%c4, %c0_27, %c0_28] : memref<27x16x16xbf16, #tpu.memory_space<vmem>>, vector<1x16x16xbf16>
    %26 = vector.shape_cast %25 : vector<1x16x16xbf16> to vector<16x16xbf16>
    %c0_29 = arith.constant 0 : index
    %c11 = arith.constant 11 : index
    %27 = vector.load %arg8[%c0_29, %c11] : memref<16x768xbf16, #tpu.memory_space<vmem>>, vector<16x512xbf16>
    %cst_30 = arith.constant dense<0.000000e+00> : vector<16x512xf32>
    %28 = tpu.matmul %26, %27, %cst_30 {dimension_numbers = #tpu.dot_dimension_numbers<[1], [0], [0], [1], [0, 0, 1, 1], [], []>} : vector<16x16xbf16>, vector<16x512xbf16>, vector<16x512xf32> -> vector<16x512xf32>
    %29 = arith.addf %24, %28 : vector<16x512xf32>
    %c5 = arith.constant 5 : index
    %c0_31 = arith.constant 0 : index
    %c0_32 = arith.constant 0 : index
    %30 = vector.load %arg2[%c5, %c0_31, %c0_32] : memref<27x16x16xbf16, #tpu.memory_space<vmem>>, vector<1x16x16xbf16>
    %31 = vector.shape_cast %30 : vector<1x16x16xbf16> to vector<16x16xbf16>
    %c0_33 = arith.constant 0 : index
    %c12 = arith.constant 12 : index
    %32 = vector.load %arg8[%c0_33, %c12] : memref<16x768xbf16, #tpu.memory_space<vmem>>, vector<16x512xbf16>
    %cst_34 = arith.constant dense<0.000000e+00> : vector<16x512xf32>
    %33 = tpu.matmul %31, %32, %cst_34 {dimension_numbers = #tpu.dot_dimension_numbers<[1], [0], [0], [1], [0, 0, 1, 1], [], []>} : vector<16x16xbf16>, vector<16x512xbf16>, vector<16x512xf32> -> vector<16x512xf32>
    %34 = arith.addf %29, %33 : vector<16x512xf32>
    %c6 = arith.constant 6 : index
    %c0_35 = arith.constant 0 : index
    %c0_36 = arith.constant 0 : index
    %35 = vector.load %arg2[%c6, %c0_35, %c0_36] : memref<27x16x16xbf16, #tpu.memory_space<vmem>>, vector<1x16x16xbf16>
    %36 = vector.shape_cast %35 : vector<1x16x16xbf16> to vector<16x16xbf16>
    %c0_37 = arith.constant 0 : index
    %c20 = arith.constant 20 : index
    %37 = vector.load %arg8[%c0_37, %c20] : memref<16x768xbf16, #tpu.memory_space<vmem>>, vector<16x512xbf16>
    %cst_38 = arith.constant dense<0.000000e+00> : vector<16x512xf32>
    %38 = tpu.matmul %36, %37, %cst_38 {dimension_numbers = #tpu.dot_dimension_numbers<[1], [0], [0], [1], [0, 0, 1, 1], [], []>} : vector<16x16xbf16>, vector<16x512xbf16>, vector<16x512xf32> -> vector<16x512xf32>
    %39 = arith.addf %34, %38 : vector<16x512xf32>
    %c7 = arith.constant 7 : index
    %c0_39 = arith.constant 0 : index
    %c0_40 = arith.constant 0 : index
    %40 = vector.load %arg2[%c7, %c0_39, %c0_40] : memref<27x16x16xbf16, #tpu.memory_space<vmem>>, vector<1x16x16xbf16>
    %41 = vector.shape_cast %40 : vector<1x16x16xbf16> to vector<16x16xbf16>
    %c0_41 = arith.constant 0 : index
    %c21 = arith.constant 21 : index
    %42 = vector.load %arg8[%c0_41, %c21] : memref<16x768xbf16, #tpu.memory_space<vmem>>, vector<16x512xbf16>
    %cst_42 = arith.constant dense<0.000000e+00> : vector<16x512xf32>
    %43 = tpu.matmul %41, %42, %cst_42 {dimension_numbers = #tpu.dot_dimension_numbers<[1], [0], [0], [1], [0, 0, 1, 1], [], []>} : vector<16x16xbf16>, vector<16x512xbf16>, vector<16x512xf32> -> vector<16x512xf32>
    %44 = arith.addf %39, %43 : vector<16x512xf32>
    %c8 = arith.constant 8 : index
    %c0_43 = arith.constant 0 : index
    %c0_44 = arith.constant 0 : index
    %45 = vector.load %arg2[%c8, %c0_43, %c0_44] : memref<27x16x16xbf16, #tpu.memory_space<vmem>>, vector<1x16x16xbf16>
    %46 = vector.shape_cast %45 : vector<1x16x16xbf16> to vector<16x16xbf16>
    %c0_45 = arith.constant 0 : index
    %c22 = arith.constant 22 : index
    %47 = vector.load %arg8[%c0_45, %c22] : memref<16x768xbf16, #tpu.memory_space<vmem>>, vector<16x512xbf16>
    %cst_46 = arith.constant dense<0.000000e+00> : vector<16x512xf32>
    %48 = tpu.matmul %46, %47, %cst_46 {dimension_numbers = #tpu.dot_dimension_numbers<[1], [0], [0], [1], [0, 0, 1, 1], [], []>} : vector<16x16xbf16>, vector<16x512xbf16>, vector<16x512xf32> -> vector<16x512xf32>
    %49 = arith.addf %44, %48 : vector<16x512xf32>
    %c9 = arith.constant 9 : index
    %c0_47 = arith.constant 0 : index
    %c0_48 = arith.constant 0 : index
    %50 = vector.load %arg2[%c9, %c0_47, %c0_48] : memref<27x16x16xbf16, #tpu.memory_space<vmem>>, vector<1x16x16xbf16>
    %51 = vector.shape_cast %50 : vector<1x16x16xbf16> to vector<16x16xbf16>
    %c0_49 = arith.constant 0 : index
    %c100 = arith.constant 100 : index
    %52 = vector.load %arg8[%c0_49, %c100] : memref<16x768xbf16, #tpu.memory_space<vmem>>, vector<16x512xbf16>
    %cst_50 = arith.constant dense<0.000000e+00> : vector<16x512xf32>
    %53 = tpu.matmul %51, %52, %cst_50 {dimension_numbers = #tpu.dot_dimension_numbers<[1], [0], [0], [1], [0, 0, 1, 1], [], []>} : vector<16x16xbf16>, vector<16x512xbf16>, vector<16x512xf32> -> vector<16x512xf32>
    %54 = arith.addf %49, %53 : vector<16x512xf32>
    %c10_51 = arith.constant 10 : index
    %c0_52 = arith.constant 0 : index
    %c0_53 = arith.constant 0 : index
    %55 = vector.load %arg2[%c10_51, %c0_52, %c0_53] : memref<27x16x16xbf16, #tpu.memory_space<vmem>>, vector<1x16x16xbf16>
    %56 = vector.shape_cast %55 : vector<1x16x16xbf16> to vector<16x16xbf16>
    %c0_54 = arith.constant 0 : index
    %c101 = arith.constant 101 : index
    %57 = vector.load %arg8[%c0_54, %c101] : memref<16x768xbf16, #tpu.memory_space<vmem>>, vector<16x512xbf16>
    %cst_55 = arith.constant dense<0.000000e+00> : vector<16x512xf32>
    %58 = tpu.matmul %56, %57, %cst_55 {dimension_numbers = #tpu.dot_dimension_numbers<[1], [0], [0], [1], [0, 0, 1, 1], [], []>} : vector<16x16xbf16>, vector<16x512xbf16>, vector<16x512xf32> -> vector<16x512xf32>
    %59 = arith.addf %54, %58 : vector<16x512xf32>
    %c11_56 = arith.constant 11 : index
    %c0_57 = arith.constant 0 : index
    %c0_58 = arith.constant 0 : index
    %60 = vector.load %arg2[%c11_56, %c0_57, %c0_58] : memref<27x16x16xbf16, #tpu.memory_space<vmem>>, vector<1x16x16xbf16>
    %61 = vector.shape_cast %60 : vector<1x16x16xbf16> to vector<16x16xbf16>
    %c0_59 = arith.constant 0 : index
    %c102 = arith.constant 102 : index
    %62 = vector.load %arg8[%c0_59, %c102] : memref<16x768xbf16, #tpu.memory_space<vmem>>, vector<16x512xbf16>
    %cst_60 = arith.constant dense<0.000000e+00> : vector<16x512xf32>
    %63 = tpu.matmul %61, %62, %cst_60 {dimension_numbers = #tpu.dot_dimension_numbers<[1], [0], [0], [1], [0, 0, 1, 1], [], []>} : vector<16x16xbf16>, vector<16x512xbf16>, vector<16x512xf32> -> vector<16x512xf32>
    %64 = arith.addf %59, %63 : vector<16x512xf32>
    %c12_61 = arith.constant 12 : index
    %c0_62 = arith.constant 0 : index
    %c0_63 = arith.constant 0 : index
    %65 = vector.load %arg2[%c12_61, %c0_62, %c0_63] : memref<27x16x16xbf16, #tpu.memory_space<vmem>>, vector<1x16x16xbf16>
    %66 = vector.shape_cast %65 : vector<1x16x16xbf16> to vector<16x16xbf16>
    %c0_64 = arith.constant 0 : index
    %c110 = arith.constant 110 : index
    %67 = vector.load %arg8[%c0_64, %c110] : memref<16x768xbf16, #tpu.memory_space<vmem>>, vector<16x512xbf16>
    %cst_65 = arith.constant dense<0.000000e+00> : vector<16x512xf32>
    %68 = tpu.matmul %66, %67, %cst_65 {dimension_numbers = #tpu.dot_dimension_numbers<[1], [0], [0], [1], [0, 0, 1, 1], [], []>} : vector<16x16xbf16>, vector<16x512xbf16>, vector<16x512xf32> -> vector<16x512xf32>
    %69 = arith.addf %64, %68 : vector<16x512xf32>
    %c13 = arith.constant 13 : index
    %c0_66 = arith.constant 0 : index
    %c0_67 = arith.constant 0 : index
    %70 = vector.load %arg2[%c13, %c0_66, %c0_67] : memref<27x16x16xbf16, #tpu.memory_space<vmem>>, vector<1x16x16xbf16>
    %71 = vector.shape_cast %70 : vector<1x16x16xbf16> to vector<16x16xbf16>
    %c0_68 = arith.constant 0 : index
    %c111 = arith.constant 111 : index
    %72 = vector.load %arg8[%c0_68, %c111] : memref<16x768xbf16, #tpu.memory_space<vmem>>, vector<16x512xbf16>
    %cst_69 = arith.constant dense<0.000000e+00> : vector<16x512xf32>
    %73 = tpu.matmul %71, %72, %cst_69 {dimension_numbers = #tpu.dot_dimension_numbers<[1], [0], [0], [1], [0, 0, 1, 1], [], []>} : vector<16x16xbf16>, vector<16x512xbf16>, vector<16x512xf32> -> vector<16x512xf32>
    %74 = arith.addf %69, %73 : vector<16x512xf32>
    %c14 = arith.constant 14 : index
    %c0_70 = arith.constant 0 : index
    %c0_71 = arith.constant 0 : index
    %75 = vector.load %arg2[%c14, %c0_70, %c0_71] : memref<27x16x16xbf16, #tpu.memory_space<vmem>>, vector<1x16x16xbf16>
    %76 = vector.shape_cast %75 : vector<1x16x16xbf16> to vector<16x16xbf16>
    %c0_72 = arith.constant 0 : index
    %c112 = arith.constant 112 : index
    %77 = vector.load %arg8[%c0_72, %c112] : memref<16x768xbf16, #tpu.memory_space<vmem>>, vector<16x512xbf16>
    %cst_73 = arith.constant dense<0.000000e+00> : vector<16x512xf32>
    %78 = tpu.matmul %76, %77, %cst_73 {dimension_numbers = #tpu.dot_dimension_numbers<[1], [0], [0], [1], [0, 0, 1, 1], [], []>} : vector<16x16xbf16>, vector<16x512xbf16>, vector<16x512xf32> -> vector<16x512xf32>
    %79 = arith.addf %74, %78 : vector<16x512xf32>
    %c15 = arith.constant 15 : index
    %c0_74 = arith.constant 0 : index
    %c0_75 = arith.constant 0 : index
    %80 = vector.load %arg2[%c15, %c0_74, %c0_75] : memref<27x16x16xbf16, #tpu.memory_space<vmem>>, vector<1x16x16xbf16>
    %81 = vector.shape_cast %80 : vector<1x16x16xbf16> to vector<16x16xbf16>
    %c0_76 = arith.constant 0 : index
    %c120 = arith.constant 120 : index
    %82 = vector.load %arg8[%c0_76, %c120] : memref<16x768xbf16, #tpu.memory_space<vmem>>, vector<16x512xbf16>
    %cst_77 = arith.constant dense<0.000000e+00> : vector<16x512xf32>
    %83 = tpu.matmul %81, %82, %cst_77 {dimension_numbers = #tpu.dot_dimension_numbers<[1], [0], [0], [1], [0, 0, 1, 1], [], []>} : vector<16x16xbf16>, vector<16x512xbf16>, vector<16x512xf32> -> vector<16x512xf32>
    %84 = arith.addf %79, %83 : vector<16x512xf32>
    %c16 = arith.constant 16 : index
    %c0_78 = arith.constant 0 : index
    %c0_79 = arith.constant 0 : index
    %85 = vector.load %arg2[%c16, %c0_78, %c0_79] : memref<27x16x16xbf16, #tpu.memory_space<vmem>>, vector<1x16x16xbf16>
    %86 = vector.shape_cast %85 : vector<1x16x16xbf16> to vector<16x16xbf16>
    %c0_80 = arith.constant 0 : index
    %c121 = arith.constant 121 : index
    %87 = vector.load %arg8[%c0_80, %c121] : memref<16x768xbf16, #tpu.memory_space<vmem>>, vector<16x512xbf16>
    %cst_81 = arith.constant dense<0.000000e+00> : vector<16x512xf32>
    %88 = tpu.matmul %86, %87, %cst_81 {dimension_numbers = #tpu.dot_dimension_numbers<[1], [0], [0], [1], [0, 0, 1, 1], [], []>} : vector<16x16xbf16>, vector<16x512xbf16>, vector<16x512xf32> -> vector<16x512xf32>
    %89 = arith.addf %84, %88 : vector<16x512xf32>
    %c17 = arith.constant 17 : index
    %c0_82 = arith.constant 0 : index
    %c0_83 = arith.constant 0 : index
    %90 = vector.load %arg2[%c17, %c0_82, %c0_83] : memref<27x16x16xbf16, #tpu.memory_space<vmem>>, vector<1x16x16xbf16>
    %91 = vector.shape_cast %90 : vector<1x16x16xbf16> to vector<16x16xbf16>
    %c0_84 = arith.constant 0 : index
    %c122 = arith.constant 122 : index
    %92 = vector.load %arg8[%c0_84, %c122] : memref<16x768xbf16, #tpu.memory_space<vmem>>, vector<16x512xbf16>
    %cst_85 = arith.constant dense<0.000000e+00> : vector<16x512xf32>
    %93 = tpu.matmul %91, %92, %cst_85 {dimension_numbers = #tpu.dot_dimension_numbers<[1], [0], [0], [1], [0, 0, 1, 1], [], []>} : vector<16x16xbf16>, vector<16x512xbf16>, vector<16x512xf32> -> vector<16x512xf32>
    %94 = arith.addf %89, %93 : vector<16x512xf32>
    %c18 = arith.constant 18 : index
    %c0_86 = arith.constant 0 : index
    %c0_87 = arith.constant 0 : index
    %95 = vector.load %arg2[%c18, %c0_86, %c0_87] : memref<27x16x16xbf16, #tpu.memory_space<vmem>>, vector<1x16x16xbf16>
    %96 = vector.shape_cast %95 : vector<1x16x16xbf16> to vector<16x16xbf16>
    %c0_88 = arith.constant 0 : index
    %c200 = arith.constant 200 : index
    %97 = vector.load %arg8[%c0_88, %c200] : memref<16x768xbf16, #tpu.memory_space<vmem>>, vector<16x512xbf16>
    %cst_89 = arith.constant dense<0.000000e+00> : vector<16x512xf32>
    %98 = tpu.matmul %96, %97, %cst_89 {dimension_numbers = #tpu.dot_dimension_numbers<[1], [0], [0], [1], [0, 0, 1, 1], [], []>} : vector<16x16xbf16>, vector<16x512xbf16>, vector<16x512xf32> -> vector<16x512xf32>
    %99 = arith.addf %94, %98 : vector<16x512xf32>
    %c19 = arith.constant 19 : index
    %c0_90 = arith.constant 0 : index
    %c0_91 = arith.constant 0 : index
    %100 = vector.load %arg2[%c19, %c0_90, %c0_91] : memref<27x16x16xbf16, #tpu.memory_space<vmem>>, vector<1x16x16xbf16>
    %101 = vector.shape_cast %100 : vector<1x16x16xbf16> to vector<16x16xbf16>
    %c0_92 = arith.constant 0 : index
    %c201 = arith.constant 201 : index
    %102 = vector.load %arg8[%c0_92, %c201] : memref<16x768xbf16, #tpu.memory_space<vmem>>, vector<16x512xbf16>
    %cst_93 = arith.constant dense<0.000000e+00> : vector<16x512xf32>
    %103 = tpu.matmul %101, %102, %cst_93 {dimension_numbers = #tpu.dot_dimension_numbers<[1], [0], [0], [1], [0, 0, 1, 1], [], []>} : vector<16x16xbf16>, vector<16x512xbf16>, vector<16x512xf32> -> vector<16x512xf32>
    %104 = arith.addf %99, %103 : vector<16x512xf32>
    %c20_94 = arith.constant 20 : index
    %c0_95 = arith.constant 0 : index
    %c0_96 = arith.constant 0 : index
    %105 = vector.load %arg2[%c20_94, %c0_95, %c0_96] : memref<27x16x16xbf16, #tpu.memory_space<vmem>>, vector<1x16x16xbf16>
    %106 = vector.shape_cast %105 : vector<1x16x16xbf16> to vector<16x16xbf16>
    %c0_97 = arith.constant 0 : index
    %c202 = arith.constant 202 : index
    %107 = vector.load %arg8[%c0_97, %c202] : memref<16x768xbf16, #tpu.memory_space<vmem>>, vector<16x512xbf16>
    %cst_98 = arith.constant dense<0.000000e+00> : vector<16x512xf32>
    %108 = tpu.matmul %106, %107, %cst_98 {dimension_numbers = #tpu.dot_dimension_numbers<[1], [0], [0], [1], [0, 0, 1, 1], [], []>} : vector<16x16xbf16>, vector<16x512xbf16>, vector<16x512xf32> -> vector<16x512xf32>
    %109 = arith.addf %104, %108 : vector<16x512xf32>
    %c21_99 = arith.constant 21 : index
    %c0_100 = arith.constant 0 : index
    %c0_101 = arith.constant 0 : index
    %110 = vector.load %arg2[%c21_99, %c0_100, %c0_101] : memref<27x16x16xbf16, #tpu.memory_space<vmem>>, vector<1x16x16xbf16>
    %111 = vector.shape_cast %110 : vector<1x16x16xbf16> to vector<16x16xbf16>
    %c0_102 = arith.constant 0 : index
    %c210 = arith.constant 210 : index
    %112 = vector.load %arg8[%c0_102, %c210] : memref<16x768xbf16, #tpu.memory_space<vmem>>, vector<16x512xbf16>
    %cst_103 = arith.constant dense<0.000000e+00> : vector<16x512xf32>
    %113 = tpu.matmul %111, %112, %cst_103 {dimension_numbers = #tpu.dot_dimension_numbers<[1], [0], [0], [1], [0, 0, 1, 1], [], []>} : vector<16x16xbf16>, vector<16x512xbf16>, vector<16x512xf32> -> vector<16x512xf32>
    %114 = arith.addf %109, %113 : vector<16x512xf32>
    %c22_104 = arith.constant 22 : index
    %c0_105 = arith.constant 0 : index
    %c0_106 = arith.constant 0 : index
    %115 = vector.load %arg2[%c22_104, %c0_105, %c0_106] : memref<27x16x16xbf16, #tpu.memory_space<vmem>>, vector<1x16x16xbf16>
    %116 = vector.shape_cast %115 : vector<1x16x16xbf16> to vector<16x16xbf16>
    %c0_107 = arith.constant 0 : index
    %c211 = arith.constant 211 : index
    %117 = vector.load %arg8[%c0_107, %c211] : memref<16x768xbf16, #tpu.memory_space<vmem>>, vector<16x512xbf16>
    %cst_108 = arith.constant dense<0.000000e+00> : vector<16x512xf32>
    %118 = tpu.matmul %116, %117, %cst_108 {dimension_numbers = #tpu.dot_dimension_numbers<[1], [0], [0], [1], [0, 0, 1, 1], [], []>} : vector<16x16xbf16>, vector<16x512xbf16>, vector<16x512xf32> -> vector<16x512xf32>
    %119 = arith.addf %114, %118 : vector<16x512xf32>
    %c23 = arith.constant 23 : index
    %c0_109 = arith.constant 0 : index
    %c0_110 = arith.constant 0 : index
    %120 = vector.load %arg2[%c23, %c0_109, %c0_110] : memref<27x16x16xbf16, #tpu.memory_space<vmem>>, vector<1x16x16xbf16>
    %121 = vector.shape_cast %120 : vector<1x16x16xbf16> to vector<16x16xbf16>
    %c0_111 = arith.constant 0 : index
    %c212 = arith.constant 212 : index
    %122 = vector.load %arg8[%c0_111, %c212] : memref<16x768xbf16, #tpu.memory_space<vmem>>, vector<16x512xbf16>
    %cst_112 = arith.constant dense<0.000000e+00> : vector<16x512xf32>
    %123 = tpu.matmul %121, %122, %cst_112 {dimension_numbers = #tpu.dot_dimension_numbers<[1], [0], [0], [1], [0, 0, 1, 1], [], []>} : vector<16x16xbf16>, vector<16x512xbf16>, vector<16x512xf32> -> vector<16x512xf32>
    %124 = arith.addf %119, %123 : vector<16x512xf32>
    %c24 = arith.constant 24 : index
    %c0_113 = arith.constant 0 : index
    %c0_114 = arith.constant 0 : index
    %125 = vector.load %arg2[%c24, %c0_113, %c0_114] : memref<27x16x16xbf16, #tpu.memory_space<vmem>>, vector<1x16x16xbf16>
    %126 = vector.shape_cast %125 : vector<1x16x16xbf16> to vector<16x16xbf16>
    %c0_115 = arith.constant 0 : index
    %c220 = arith.constant 220 : index
    %127 = vector.load %arg8[%c0_115, %c220] : memref<16x768xbf16, #tpu.memory_space<vmem>>, vector<16x512xbf16>
    %cst_116 = arith.constant dense<0.000000e+00> : vector<16x512xf32>
    %128 = tpu.matmul %126, %127, %cst_116 {dimension_numbers = #tpu.dot_dimension_numbers<[1], [0], [0], [1], [0, 0, 1, 1], [], []>} : vector<16x16xbf16>, vector<16x512xbf16>, vector<16x512xf32> -> vector<16x512xf32>
    %129 = arith.addf %124, %128 : vector<16x512xf32>
    %c25 = arith.constant 25 : index
    %c0_117 = arith.constant 0 : index
    %c0_118 = arith.constant 0 : index
    %130 = vector.load %arg2[%c25, %c0_117, %c0_118] : memref<27x16x16xbf16, #tpu.memory_space<vmem>>, vector<1x16x16xbf16>
    %131 = vector.shape_cast %130 : vector<1x16x16xbf16> to vector<16x16xbf16>
    %c0_119 = arith.constant 0 : index
    %c221 = arith.constant 221 : index
    %132 = vector.load %arg8[%c0_119, %c221] : memref<16x768xbf16, #tpu.memory_space<vmem>>, vector<16x512xbf16>
    %cst_120 = arith.constant dense<0.000000e+00> : vector<16x512xf32>
    %133 = tpu.matmul %131, %132, %cst_120 {dimension_numbers = #tpu.dot_dimension_numbers<[1], [0], [0], [1], [0, 0, 1, 1], [], []>} : vector<16x16xbf16>, vector<16x512xbf16>, vector<16x512xf32> -> vector<16x512xf32>
    %134 = arith.addf %129, %133 : vector<16x512xf32>
    %c26 = arith.constant 26 : index
    %c0_121 = arith.constant 0 : index
    %c0_122 = arith.constant 0 : index
    %135 = vector.load %arg2[%c26, %c0_121, %c0_122] : memref<27x16x16xbf16, #tpu.memory_space<vmem>>, vector<1x16x16xbf16>
    %136 = vector.shape_cast %135 : vector<1x16x16xbf16> to vector<16x16xbf16>
    %c0_123 = arith.constant 0 : index
    %c222 = arith.constant 222 : index
    %137 = vector.load %arg8[%c0_123, %c222] : memref<16x768xbf16, #tpu.memory_space<vmem>>, vector<16x512xbf16>
    %cst_124 = arith.constant dense<0.000000e+00> : vector<16x512xf32>
    %138 = tpu.matmul %136, %137, %cst_124 {dimension_numbers = #tpu.dot_dimension_numbers<[1], [0], [0], [1], [0, 0, 1, 1], [], []>} : vector<16x16xbf16>, vector<16x512xbf16>, vector<16x512xf32> -> vector<16x512xf32>
    %139 = arith.addf %134, %138 : vector<16x512xf32>
    %c0_125 = arith.constant 0 : index
    %c0_126 = arith.constant 0 : index
    %c0_127 = arith.constant 0 : index
    %140 = vector.load %arg5[%c0_125, %c0_126, %c0_127] : memref<1x1x512xf32, #tpu.memory_space<vmem>>, vector<1x1x512xf32>
    %141 = vector.shape_cast %140 : vector<1x1x512xf32> to vector<1x512xf32>
    %142 = vector.broadcast %141 : vector<1x512xf32> to vector<16x512xf32>
    %143 = arith.mulf %139, %142 : vector<16x512xf32>
    %cst_128 = arith.constant dense<0.000000e+00> : vector<16xf32>
    %144 = vector.multi_reduction <add>, %143, %cst_128 [1] : vector<16x512xf32> to vector<16xf32>
    %145 = vector.shape_cast %144 : vector<16xf32> to vector<16x1xf32>
    %c0_129 = arith.constant 0 : index
    %c0_130 = arith.constant 0 : index
    %c0_131 = arith.constant 0 : index
    %c0_132 = arith.constant 0 : index
    %146 = vector.load %arg6[%c0_129, %c0_130, %c0_131, %c0_132] : memref<1x1x16x1xf32, #tpu.memory_space<vmem>>, vector<1x1x16x1xf32>
    %147 = vector.shape_cast %146 : vector<1x1x16x1xf32> to vector<16x1xf32>
    %148 = vector.shape_cast %145 : vector<16x1xf32> to vector<1x1x16x1xf32>
    tpu.vector_store %arg6[%c0_129, %c0_130, %c0_131, %c0_132], %148 {strides = array<i32>} : memref<1x1x16x1xf32, #tpu.memory_space<vmem>>, vector<1x1x16x1xf32>,
    %149 = arith.mulf %143, %139 : vector<16x512xf32>
    %cst_133 = arith.constant dense<0.000000e+00> : vector<16xf32>
    %150 = vector.multi_reduction <add>, %149, %cst_133 [1] : vector<16x512xf32> to vector<16xf32>
    %151 = vector.shape_cast %150 : vector<16xf32> to vector<16x1xf32>
    %c0_134 = arith.constant 0 : index
    %c0_135 = arith.constant 0 : index
    %c0_136 = arith.constant 0 : index
    %c0_137 = arith.constant 0 : index
    %152 = vector.load %arg7[%c0_134, %c0_135, %c0_136, %c0_137] : memref<1x1x16x1xf32, #tpu.memory_space<vmem>>, vector<1x1x16x1xf32>
    %153 = vector.shape_cast %152 : vector<1x1x16x1xf32> to vector<16x1xf32>
    %154 = vector.shape_cast %151 : vector<16x1xf32> to vector<1x1x16x1xf32>
    tpu.vector_store %arg7[%c0_134, %c0_135, %c0_136, %c0_137], %154 {strides = array<i32>} : memref<1x1x16x1xf32, #tpu.memory_space<vmem>>, vector<1x1x16x1xf32>,
    return
  }
  func.func @transform_0(%arg0: i32, %arg1: i32) -> (i32, i32, i32) {
    %c0_i32 = arith.constant 0 : i32
    %c0_i32_0 = arith.constant 0 : i32
    %c0_i32_1 = arith.constant 0 : i32
    %c0_i32_2 = arith.constant 0 : i32
    return %c0_i32, %c0_i32_0, %c0_i32_1 : i32, i32, i32
  }
  func.func @transform_1(%arg0: i32, %arg1: i32) -> (i32, i32, i32) {
    %c0_i32 = arith.constant 0 : i32
    %c0_i32_0 = arith.constant 0 : i32
    return %arg0, %c0_i32, %arg1 : i32, i32, i32
  }
  func.func @transform_2(%arg0: i32, %arg1: i32) -> (i32, i32, i32) {
    %c1_i32 = arith.constant 1 : i32
    %0 = arith.addi %arg1, %c1_i32 : i32
    %c2_i32 = arith.constant 2 : i32
    %1 = arith.muli %0, %c2_i32 : i32
    %c0_i32 = arith.constant 0 : i32
    %c0_i32_0 = arith.constant 0 : i32
    return %arg0, %c0_i32, %1 : i32, i32, i32
  }
  func.func @transform_3(%arg0: i32, %arg1: i32) -> (i32, i32, i32) {
    %c0_i32 = arith.constant 0 : i32
    %c0_i32_0 = arith.constant 0 : i32
    %c0_i32_1 = arith.constant 0 : i32
    return %arg1, %c0_i32, %c0_i32_0 : i32, i32, i32
  }
  func.func @transform_4(%arg0: i32, %arg1: i32) -> (i32, i32, i32, i32) {
    %c0_i32 = arith.constant 0 : i32
    %c0_i32_0 = arith.constant 0 : i32
    %c0_i32_1 = arith.constant 0 : i32
    return %arg0, %arg1, %c0_i32, %c0_i32_0 : i32, i32, i32, i32
  }
  func.func @transform_5(%arg0: i32, %arg1: i32) -> (i32, i32, i32, i32) {
    %c0_i32 = arith.constant 0 : i32
    %c0_i32_0 = arith.constant 0 : i32
    %c0_i32_1 = arith.constant 0 : i32
    return %arg0, %arg1, %c0_i32, %c0_i32_0 : i32, i32, i32, i32
  }
}

</mosaic_0001>

<llo_original>
// kernel: tpu_custom_call.1
$region0: #{tpu_custom_call.1}
  #allocation0 [shape = 'u32[]', space=smem, size = 0x4, offset = 0x4, fixed_abs, tag = 'smem constant byte address 0x4 - core index']
  #allocation1 [shape = 'u32[144,128]{1,0:T(1,128)}', space=vmem, size = 0x12000, scoped, tag = 'internal scratch']
  #allocation2 [shape = 'bf16[16,768]{1,0:T(16,128)(2,1)}', space=vmem, size = 0x6000, scoped, tag = 'scratch operand']
  %s0 = inlined_call_operand.vmem [shape: bf16[27,16,16], index: 0, kind: input, shape index: {}]
  %s1 = inlined_call_operand.vmem [shape: bf16[2,16,1536], index: 1, kind: input, shape index: {}]
  %s2 = inlined_call_operand.hbm [shape: bf16[2,16,1536], index: 2, kind: input, shape index: {}]
  %s3 = inlined_call_operand.vmem [shape: f32[2,1,512], index: 3, kind: input, shape index: {}]
  %s4 = inlined_call_operand.vmem [shape: f32[2,2,16,1], index: 4, kind: output, shape index: {0}]
  %s5 = inlined_call_operand.vmem [shape: f32[2,2,16,1], index: 5, kind: output, shape index: {1}]
  %6 = xla_tuple %s4, %s5
  %s7 = sld [smem:[#allocation0]]
  $region84: #{tpu_custom_call.1} parent=0
    _
  %s9 = ssub.s32 1, %s7
  %s10 = scalar_select 0, %s9, %s7
  $region1: #{tpu_custom_call.1} parent=0
    #allocation3 [shape = 'u8[32768]{0}', space=vmem, size = 0x8000, scoped, tag = 'input window, operand 1']
    #allocation4 [shape = 'u8[16384]{0}', space=vmem, size = 0x4000, scoped, tag = 'input window, operand 2']
    #allocation5 [shape = 's32[2]{0}', space=sflag, size = 0x8, scoped, tag = 'scoped memory for tpu_custom_call.1']
    %11 = vsyncpa [#allocation5], 0
    %s12 = scalar_lea.sflag [#allocation5], 1
    %13 = vsyncpa %s12, 0
    loop: start=0, step=1, limit=6
    $region2: #{tpu_custom_call.1} parent=1 // loop_pre_header
      _
    $region3: #{tpu_custom_call.1} parent=1 // loop_header
      %s15 = sphi 0, %s19
      %p16 = scmp.ge.s32.totalorder %s15, 6
      %s22 = sphi 0, %s34
      %s23 = sphi 0, %s30
      %s24 = sphi 0, %s22
      %s25 = sphi 0, %s23
      %s26 = sphi 0, %s24
      %s27 = sphi 0, %s25
      %s35 = sphi 0, %s35
      %s37 = sphi 0, %s35
      %s38 = sphi 0, %s37
      %s52 = sphi 0, %s38
      %s60 = sphi 0, %s62
      %s63 = sphi 0, %s60
      %s64 = sphi 0, %s63
      %s80 = sphi 0, %s64
      %s92 = sphi 0, %s94
      %s95 = sphi 0, %s92
      %s96 = sphi 0, %s95
      %s112 = sphi 0, %s96
      %s118 = sphi 0, %s120
      %s121 = sphi 0, %s118
      %s122 = sphi 0, %s121
      %s138 = sphi 0, %s122
      %s146 = sphi 0, %s148
      %s149 = sphi 0, %s146
      %s150 = sphi 0, %s149
      %s166 = sphi 0, %s150
      %s174 = sphi 0, %s176
      %s177 = sphi 0, %s174
      %s178 = sphi 0, %s177
      %s194 = sphi 0, %s178
    $region4: #{tpu_custom_call.1} parent=1 // loop_header_branch
      %18 = sbr.rel (%p16) target = $region8
    $region5: #{tpu_custom_call.1} parent=1 // loop_body
      %s20 = ssub.s32 %s15, 1
      %s21 = ssub.s32 %s15, 2
      %s28 = sadd.s32 1, %s23
      %p29 = scmp.ge.s32.totalorder %s28, 2
      %s30 = scalar_select %p29, 0, %s28
      %s31 = sadd.s32 1, %s22
      %s32 = scalar_select %p29, %s31, %s22
      %p33 = scmp.ge.s32.totalorder %s32, 2
      %s34 = scalar_select %p33, 0, %s32
      %s36 = sadd.s32 %s35, 1
      %p39 = scmp.eq.s32.totalorder %s15, 3
      %p40 = scmp.ne.s32.totalorder %s35, %s37
      %p41 = scmp.eq.s32.totalorder %s15, 0
      %p42 = por %p40, %p41
      %p43 = scmp.ne.s32.totalorder %s35, %s37
      %p44 = scmp.eq.s32.totalorder %s20, 3
      %p45 = por %p43, %p44
      %p46 = scmp.ne.s32.totalorder %s37, %s38
      %p47 = scmp.eq.s32.totalorder %s20, 0
      %p48 = por %p46, %p47
      %p49 = scmp.ne.s32.totalorder %s37, %s38
      %p50 = scmp.eq.s32.totalorder %s21, 3
      %p51 = por %p49, %p50
      %p53 = scmp.ne.s32.totalorder %s38, %s52
      %p54 = scmp.eq.s32.totalorder %s21, 0
      %p55 = por %p53, %p54
      %s56 = ssub.s32 %s22, %s34
      %s57 = ssub.s32 %s23, %s30
      %s58 = sor.u32 %s56, %s57
      %p59 = scmp.eq.s32.totalorder %s58, 0
      %s61 = sadd.s32 %s60, 1
      %s62 = scalar_select %p59, %s60, %s61
      %p65 = pneg %p59
      %p66 = scmp.eq.s32.totalorder %s15, 3
      %p67 = por %p65, %p66
      %p68 = scmp.ne.s32.totalorder %s60, %s63
      %p69 = scmp.eq.s32.totalorder %s15, 0
      %p70 = por %p68, %p69
      %p71 = scmp.ne.s32.totalorder %s60, %s63
      %p72 = scmp.eq.s32.totalorder %s20, 3
      %p73 = por %p71, %p72
      %p74 = scmp.ne.s32.totalorder %s63, %s64
      %p75 = scmp.eq.s32.totalorder %s20, 0
      %p76 = por %p74, %p75
      %p77 = scmp.ne.s32.totalorder %s63, %s64
      %p78 = scmp.eq.s32.totalorder %s21, 3
      %p79 = por %p77, %p78
      %p81 = scmp.ne.s32.totalorder %s64, %s80
      %p82 = scmp.eq.s32.totalorder %s21, 0
      %p83 = por %p81, %p82
      %s84 = sadd.s32 %s23, 1
      %s85 = smul.u32 %s84, 2
      %s86 = sadd.s32 %s30, 1
      %s87 = smul.u32 %s86, 2
      %s88 = ssub.s32 %s22, %s34
      %s89 = ssub.s32 %s85, %s87
      %s90 = sor.u32 %s88, %s89
      %p91 = scmp.eq.s32.totalorder %s90, 0
      %s93 = sadd.s32 %s92, 1
      %s94 = scalar_select %p91, %s92, %s93
      %p97 = pneg %p91
      %p98 = scmp.eq.s32.totalorder %s15, 3
      %p99 = por %p97, %p98
      %p100 = scmp.ne.s32.totalorder %s92, %s95
      %p101 = scmp.eq.s32.totalorder %s15, 0
      %p102 = por %p100, %p101
      %p103 = scmp.ne.s32.totalorder %s92, %s95
      %p104 = scmp.eq.s32.totalorder %s20, 3
      %p105 = por %p103, %p104
      %p106 = scmp.ne.s32.totalorder %s95, %s96
      %p107 = scmp.eq.s32.totalorder %s20, 0
      %p108 = por %p106, %p107
      %p109 = scmp.ne.s32.totalorder %s95, %s96
      %p110 = scmp.eq.s32.totalorder %s21, 3
      %p111 = por %p109, %p110
      %p113 = scmp.ne.s32.totalorder %s96, %s112
      %p114 = scmp.eq.s32.totalorder %s21, 0
      %p115 = por %p113, %p114
      %s116 = ssub.s32 %s23, %s30
      %p117 = scmp.eq.s32.totalorder %s116, 0
      %s119 = sadd.s32 %s118, 1
      %s120 = scalar_select %p117, %s118, %s119
      %p123 = pneg %p117
      %p124 = scmp.eq.s32.totalorder %s15, 3
      %p125 = por %p123, %p124
      %p126 = scmp.ne.s32.totalorder %s118, %s121
      %p127 = scmp.eq.s32.totalorder %s15, 0
      %p128 = por %p126, %p127
      %p129 = scmp.ne.s32.totalorder %s118, %s121
      %p130 = scmp.eq.s32.totalorder %s20, 3
      %p131 = por %p129, %p130
      %p132 = scmp.ne.s32.totalorder %s121, %s122
      %p133 = scmp.eq.s32.totalorder %s20, 0
      %p134 = por %p132, %p133
      %p135 = scmp.ne.s32.totalorder %s121, %s122
      %p136 = scmp.eq.s32.totalorder %s21, 3
      %p137 = por %p135, %p136
      %p139 = scmp.ne.s32.totalorder %s122, %s138
      %p140 = scmp.eq.s32.totalorder %s21, 0
      %p141 = por %p139, %p140
      %s142 = ssub.s32 %s22, %s34
      %s143 = ssub.s32 %s23, %s30
      %s144 = sor.u32 %s142, %s143
      %p145 = scmp.eq.s32.totalorder %s144, 0
      %s147 = sadd.s32 %s146, 1
      %s148 = scalar_select %p145, %s146, %s147
      %p151 = pneg %p145
      %p152 = scmp.eq.s32.totalorder %s15, 3
      %p153 = por %p151, %p152
      %p154 = scmp.ne.s32.totalorder %s146, %s149
      %p155 = scmp.eq.s32.totalorder %s15, 0
      %p156 = por %p154, %p155
      %p157 = scmp.ne.s32.totalorder %s146, %s149
      %p158 = scmp.eq.s32.totalorder %s20, 3
      %p159 = por %p157, %p158
      %p160 = scmp.ne.s32.totalorder %s149, %s150
      %p161 = scmp.eq.s32.totalorder %s20, 0
      %p162 = por %p160, %p161
      %p163 = scmp.ne.s32.totalorder %s149, %s150
      %p164 = scmp.eq.s32.totalorder %s21, 3
      %p165 = por %p163, %p164
      %p167 = scmp.ne.s32.totalorder %s150, %s166
      %p168 = scmp.eq.s32.totalorder %s21, 0
      %p169 = por %p167, %p168
      %s170 = ssub.s32 %s22, %s34
      %s171 = ssub.s32 %s23, %s30
      %s172 = sor.u32 %s170, %s171
      %p173 = scmp.eq.s32.totalorder %s172, 0
      %s175 = sadd.s32 %s174, 1
      %s176 = scalar_select %p173, %s174, %s175
      %p179 = pneg %p173
      %p180 = scmp.eq.s32.totalorder %s15, 3
      %p181 = por %p179, %p180
      %p182 = scmp.ne.s32.totalorder %s174, %s177
      %p183 = scmp.eq.s32.totalorder %s15, 0
      %p184 = por %p182, %p183
      %p185 = scmp.ne.s32.totalorder %s174, %s177
      %p186 = scmp.eq.s32.totalorder %s20, 3
      %p187 = por %p185, %p186
      %p188 = scmp.ne.s32.totalorder %s177, %s178
      %p189 = scmp.eq.s32.totalorder %s20, 0
      %p190 = por %p188, %p189
      %p191 = scmp.ne.s32.totalorder %s177, %s178
      %p192 = scmp.eq.s32.totalorder %s21, 3
      %p193 = por %p191, %p192
      %p195 = scmp.ne.s32.totalorder %s178, %s194
      %p196 = scmp.eq.s32.totalorder %s21, 0
      %p197 = por %p195, %p196
      %p198 = scmp.le.s32.totalorder 1, %s15
      %p199 = scmp.lt.s32.totalorder %s15, 5
      %p200 = pnand %p198, %p199
      %p201 = pneg %p200
      // Predicated region
      $region9: #{tpu_custom_call.1} parent=5 // pred_check
        _
      $region10: #{tpu_custom_call.1} parent=5 // pred_check_branch
        %203 = sbr.rel (%p200) target = $region12
      $region11: #{tpu_custom_call.1} parent=5 // pred_region
        %s204 = ssub.s32 %s15, 1
        // Predicated region
        $region13: #{tpu_custom_call.1} parent=11 // pred_check
          %p205 = pneg %p48
        $region14: #{tpu_custom_call.1} parent=11 // pred_check_branch
          %207 = sbr.rel (%p205) target = $region16
        $region15: #{tpu_custom_call.1} parent=11 // pred_region
          _
        $region16: #{tpu_custom_call.1} parent=11 // pred_fallthru
          _
      $region12: #{tpu_custom_call.1} parent=5 // pred_fallthru
        _
      %p208 = scmp.lt.s32.totalorder %s15, 4
      // Predicated region
      $region17: #{tpu_custom_call.1} parent=5 // pred_check
        %p209 = pneg %p208
      $region18: #{tpu_custom_call.1} parent=5 // pred_check_branch
        %211 = sbr.rel (%p209) target = $region20
      $region19: #{tpu_custom_call.1} parent=5 // pred_region
        // Predicated region
        $region21: #{tpu_custom_call.1} parent=19 // pred_check
          %p212 = pneg %p70
        $region22: #{tpu_custom_call.1} parent=19 // pred_check_branch
          %214 = sbr.rel (%p212) target = $region24
        $region23: #{tpu_custom_call.1} parent=19 // pred_region
          %s215 = sand.u32 %s60, 1
          %s216 = sand.u32 %s60, 1
          %s217 = smul.addr %s216, 32
          %s218 = scalar_lea.vmem [#allocation3], %s217
          %s219 = smul.u32 4, %s23
          %s220 = smul.addr %s22, 24
          %s221 = sadd.s32 %s219, %s220
          %s222 = smul.addr %s221, 4
          %s223 = scalar_lea.vmem %s1, %s222
          // Predicated region
          $region25: #{tpu_custom_call.1} parent=23 // pred_check
            _
          $region26: #{tpu_custom_call.1} parent=23 // pred_check_branch
            %225 = sbr.rel (0) target = $region28
          $region27: #{tpu_custom_call.1} parent=23 // pred_region
            // Predicated region
            $region29: #{tpu_custom_call.1} parent=27 // pred_check
              _
            $region30: #{tpu_custom_call.1} parent=27 // pred_check_branch
              %227 = sbr.rel (0) target = $region32
            $region31: #{tpu_custom_call.1} parent=27 // pred_region
              loop: start=0, step=1, limit=1
              $region33: #{tpu_custom_call.1} parent=31 // loop_pre_header
                _
              $region34: #{tpu_custom_call.1} parent=31 // loop_header
                %s229 = sphi 0, %s233
                %p230 = scmp.ge.s32.totalorder %s229, 1
                %s234 = sphi %s223, %s223
                %s235 = sphi %s218, %s218
              $region35: #{tpu_custom_call.1} parent=31 // loop_header_branch
                %232 = sbr.rel (%p230) target = $region39
              $region36: #{tpu_custom_call.1} parent=31 // loop_body
                %v236 = vld [vmem:[%s234] sm:$0xff]
                %237 = vst [vmem:[%s235] sm:$0xff] %v236
                %v238 = vld [vmem:[%s234 + $0x8] sm:$0xff]
                %239 = vst [vmem:[%s235 + $0x8] sm:$0xff] %v238
                %v240 = vld [vmem:[%s234 + $0x30] sm:$0xff]
                %241 = vst [vmem:[%s235 + $0x10] sm:$0xff] %v240
                %v242 = vld [vmem:[%s234 + $0x38] sm:$0xff]
                %243 = vst [vmem:[%s235 + $0x18] sm:$0xff] %v242
              $region37: #{tpu_custom_call.1} parent=31 // loop_footer
                %s233 = sadd.s32 1, %s229
              $region38: #{tpu_custom_call.1} parent=31 // loop_footer_branch
                %228 = sbr.rel target = $region34
              $region39: #{tpu_custom_call.1} parent=31 // loop_exit
                _
            $region32: #{tpu_custom_call.1} parent=27 // pred_fallthru
              _
            // Predicated region
            $region40: #{tpu_custom_call.1} parent=27 // pred_check
              _
            $region41: #{tpu_custom_call.1} parent=27 // pred_check_branch
              %245 = sbr.rel target = $region43
            $region42: #{tpu_custom_call.1} parent=27 // pred_region
              _
            $region43: #{tpu_custom_call.1} parent=27 // pred_fallthru
              _
          $region28: #{tpu_custom_call.1} parent=23 // pred_fallthru
            _
          %246 = vnop
        $region24: #{tpu_custom_call.1} parent=19 // pred_fallthru
          _
        // Predicated region
        $region44: #{tpu_custom_call.1} parent=19 // pred_check
          %p247 = pneg %p102
        $region45: #{tpu_custom_call.1} parent=19 // pred_check_branch
          %249 = sbr.rel (%p247) target = $region47
        $region46: #{tpu_custom_call.1} parent=19 // pred_region
          %s250 = sand.u32 %s92, 1
          %s251 = scalar_lea.sflag [#allocation5], %s250
          %s252 = sand.u32 %s92, 1
          %s253 = smul.addr %s252, 16
          %s254 = scalar_lea.vmem [#allocation4], %s253
          %s255 = sadd.s32 %s23, 1
          %s256 = smul.u32 %s255, 2
          %s257 = smul.u32 2, %s256
          %s259 = ssub.s32 256, 256
          %260 = vsyncadd %s251, %s259
          %s261 = smul.addr %s22, 24
          %s262 = sadd.s32 %s257, %s261
          %s263 = smul.addr %s262, 64
          %s264 = scalar_lea.hbm %s2, %s263
          %s265 = sshll.u32 %s254, 4
          %s266 = int_to_ptr.vmem [resolvable:$true] %s265
          %271 = dma.hbm_to_vmem [thread:$0]  %s264, 256, %s266, %s251, 768, 128, 8
        $region47: #{tpu_custom_call.1} parent=19 // pred_fallthru
          _
        // Predicated region
        $region48: #{tpu_custom_call.1} parent=19 // pred_check
          %p272 = pneg %p128
        $region49: #{tpu_custom_call.1} parent=19 // pred_check_branch
          %274 = sbr.rel (%p272) target = $region51
        $region50: #{tpu_custom_call.1} parent=19 // pred_region
          %p275 = scmp.lt.s32.totalorder %s23, 1
          %s276 = scalar_select %p275, %s23, 1
          %s277 = smul.addr %s276, 4
          %s278 = scalar_lea.vmem %s3, %s277
        $region51: #{tpu_custom_call.1} parent=19 // pred_fallthru
          _
      $region20: #{tpu_custom_call.1} parent=5 // pred_fallthru
        _
      %p279 = scmp.le.s32.totalorder 1, %s15
      %p280 = scmp.lt.s32.totalorder %s15, 5
      %p281 = pnand %p279, %p280
      %p282 = pneg %p281
      // Predicated region
      $region52: #{tpu_custom_call.1} parent=5 // pred_check
        _
      $region53: #{tpu_custom_call.1} parent=5 // pred_check_branch
        %284 = sbr.rel (%p281) target = $region55
      $region54: #{tpu_custom_call.1} parent=5 // pred_region
        %s285 = ssub.s32 %s15, 1
        %s286 = sand.u32 %s63, 1
        %s287 = sand.u32 %s63, 1
        %s288 = smul.addr %s287, 32
        %s289 = scalar_lea.vmem [#allocation3], %s288
        // Predicated region
        $region56: #{tpu_custom_call.1} parent=54 // pred_check
          %p290 = pneg %p76
        $region57: #{tpu_custom_call.1} parent=54 // pred_check_branch
          %292 = sbr.rel (%p290) target = $region59
        $region58: #{tpu_custom_call.1} parent=54 // pred_region
          _
        $region59: #{tpu_custom_call.1} parent=54 // pred_fallthru
          _
        %s293 = sand.u32 %s95, 1
        %s294 = scalar_lea.sflag [#allocation5], %s293
        %s295 = sand.u32 %s95, 1
        %s296 = smul.addr %s295, 16
        %s297 = scalar_lea.vmem [#allocation4], %s296
        // Predicated region
        $region60: #{tpu_custom_call.1} parent=54 // pred_check
          %p298 = pneg %p108
        $region61: #{tpu_custom_call.1} parent=54 // pred_check_branch
          %300 = sbr.rel (%p298) target = $region63
        $region62: #{tpu_custom_call.1} parent=54 // pred_region
          %301 = dma.done %s294, 256
        $region63: #{tpu_custom_call.1} parent=54 // pred_fallthru
          _
        %p302 = pneg %p48
        %p303 = pneg %p45
        %s304 = sand.u32 %s63, 1
        %s305 = sand.u32 %s63, 1
        %s306 = smul.addr %s305, 32
        %s307 = scalar_lea.vmem [#allocation3], %s306
        %p308 = pneg %p76
        %p309 = pneg %p73
        %s310 = sand.u32 %s95, 1
        %s311 = scalar_lea.sflag [#allocation5], %s310
        %s312 = sand.u32 %s95, 1
        %s313 = smul.addr %s312, 16
        %s314 = scalar_lea.vmem [#allocation4], %s313
        %p315 = pneg %p108
        %p316 = pneg %p105
        %p317 = scmp.lt.s32.totalorder %s25, 1
        %s318 = scalar_select %p317, %s25, 1
        %s319 = smul.addr %s318, 4
        %s320 = scalar_lea.vmem %s3, %s319
        %p321 = pneg %p134
        %p322 = pneg %p131
        %p323 = pneg %p162
        %p324 = pneg %p159
        %p325 = scmp.lt.s32.totalorder %s24, 1
        %s326 = scalar_select %p325, %s24, 1
        %p327 = scmp.lt.s32.totalorder %s25, 1
        %s328 = scalar_select %p327, %s25, 1
        %s329 = smul.addr %s328, 2
        %s330 = smul.addr %s326, 4
        %s331 = sadd.s32 %s329, %s330
        %s332 = smul.addr %s331, 8
        %s333 = scalar_lea.vmem %s4, %s332
        %p334 = pneg %p190
        %p335 = pneg %p187
        %p336 = scmp.lt.s32.totalorder %s24, 1
        %s337 = scalar_select %p336, %s24, 1
        %p338 = scmp.lt.s32.totalorder %s25, 1
        %s339 = scalar_select %p338, %s25, 1
        %s340 = smul.addr %s339, 2
        %s341 = smul.addr %s337, 4
        %s342 = sadd.s32 %s340, %s341
        %s343 = smul.addr %s342, 8
        %s344 = scalar_lea.vmem %s5, %s343
        %s345 = smul.u32 4, %s25
        %s346 = sadd.s32 %s25, 1
        %s347 = smul.u32 %s346, 2
        %s348 = smul.u32 2, %s347
        %p349 = scmp.lt.s32.totalorder %s25, 1
        %s350 = scalar_select %p349, %s25, 1
        %s351 = smul.addr %s350, 4
        %s352 = scalar_lea.vmem %s3, %s351
        %p353 = scmp.lt.s32.totalorder %s24, 1
        %s354 = scalar_select %p353, %s24, 1
        %p355 = scmp.lt.s32.totalorder %s25, 1
        %s356 = scalar_select %p355, %s25, 1
        %s357 = smul.addr %s356, 2
        %s358 = smul.addr %s354, 4
        %s359 = sadd.s32 %s357, %s358
        %s360 = smul.addr %s359, 8
        %s361 = scalar_lea.vmem %s4, %s360
        %p362 = scmp.lt.s32.totalorder %s24, 1
        %s363 = scalar_select %p362, %s24, 1
        %p364 = scmp.lt.s32.totalorder %s25, 1
        %s365 = scalar_select %p364, %s25, 1
        %s366 = smul.addr %s365, 2
        %s367 = smul.addr %s363, 4
        %s368 = sadd.s32 %s366, %s367
        %s369 = smul.addr %s368, 8
        %s370 = scalar_lea.vmem %s5, %s369
        %v372 = vld [vmem:[%s289] sm:$0xff]
        %v373 = vld [vmem:[%s289 + $0x8] sm:$0xff]
        %v374 = vld [vmem:[%s289 + $0x10] sm:$0xff]
        %v375 = vld [vmem:[%s289 + $0x18] sm:$0xff]
        %v380 = vunpack.c.l.b16 %v372
        %v381 = vunpack.c.h.b16 %v372
        %v382 = vunpack.c.l.b16 %v373
        %v383 = vunpack.c.h.b16 %v373
        %v384 = vunpack.c.l.b16 %v374
        %v385 = vunpack.c.h.b16 %v374
        %v386 = vunpack.c.l.b16 %v375
        %v387 = vunpack.c.h.b16 %v375
        %v388 = vpack.c.b16 %v384, %v380
        %v389 = vpack.c.b16 %v385, %v381
        %v390 = vpack.c.b16 %v386, %v382
        %v391 = vpack.c.b16 %v387, %v383
        %396 = vst [vmem:[#allocation2] sm:$0xff] %v388
        %397 = vst [vmem:[#allocation2 + $0x8] sm:$0xff] %v389
        %398 = vst [vmem:[#allocation2 + $0x10] sm:$0xff] %v390
        %399 = vst [vmem:[#allocation2 + $0x18] sm:$0xff] %v391
        %v400 = vld [vmem:[%s297] sm:$0xff]
        %v401 = vld [vmem:[%s297 + $0x8] sm:$0xff]
        %v404 = vunpack.c.l.b16 %v400
        %v405 = vunpack.c.h.b16 %v400
        %v406 = vunpack.c.l.b16 %v401
        %v407 = vunpack.c.h.b16 %v401
        %v408 = vpack.c.b16 %v406, %v404
        %v409 = vpack.c.b16 %v407, %v405
        %412 = vst [vmem:[#allocation2 + $0x20] sm:$0xff] %v408
        %413 = vst [vmem:[#allocation2 + $0x28] sm:$0xff] %v409
        %v414 = vld [vmem:[%s0] sm:$0xf]
        %v415 = vld [vmem:[%s0 + $0x4] sm:$0xf]
        %v416 = vld [vmem:[#allocation2] sm:$0xff]
        %v417 = vld [vmem:[#allocation2 + $0x8] sm:$0xff]
        %v418 = vld [vmem:[#allocation2 + $0x10] sm:$0xff]
        %v419 = vld [vmem:[#allocation2 + $0x18] sm:$0xff]
        %s420 = scalar_lea.vmem %s0, 8
        %v421 = vld [vmem:[%s420] sm:$0xf]
        %v422 = vld [vmem:[%s420 + $0x4] sm:$0xf]
        %v423 = vld [vmem:[#allocation2 + $0x20] sm:$0xff]
        %v426 = vunpack.c.l.b16 %v421
        %v427 = vunpack.c.l.b16 %v422
        %v428 = vpack.c.b16 %v427, %v426
        %434 = vrot.lane.b32.xlu0 %v416, 127
        %v435 = vpop.permute.xlu0 %434
        %436 = vrot.lane.b32.xlu0 %v417, 127
        %v437 = vpop.permute.xlu0 %436
        %438 = vrot.lane.b32.xlu0 %v418, 127
        %v439 = vpop.permute.xlu0 %438
        %440 = vrot.lane.b32.xlu0 %v419, 127
        %v441 = vpop.permute.xlu0 %440
        %442 = vrot.lane.b32.xlu0 %v423, 127
        %v443 = vpop.permute.xlu0 %442
        %vm444 = vcmask 1039360
        %v445 = vsel %vm444, %v435, %v437
        %v446 = vsel %vm444, %v437, %v439
        %v447 = vsel %vm444, %v439, %v441
        %v448 = vsel %vm444, %v441, %v443
        %vm453 = vcmask 130048
        %v455 = vsel %vm453, %v428, 0
        %457 = vmatprep.subr.bf16.mxu0 %v446
        %458 = vmatpush1.bf16.msra.mxu0 %v445
        %459 = vmatprep.subr.bf16.mxu0 0
        %460 = vmatpush1.bf16.msra.mxu0 0
        %461 = vmatprep.subr.bf16.mxu0 0
        %462 = vmatpush1.bf16.msra.mxu0 0
        %463 = vmatprep.subr.bf16.mxu0 0
        %464 = vmatpush1.bf16.msra.mxu0 0
        %465 = vmatprep.subr.bf16.mxu0 0
        %466 = vmatpush1.bf16.msra.mxu0 0
        %467 = vmatprep.subr.bf16.mxu0 0
        %468 = vmatpush1.bf16.msra.mxu0 0
        %469 = vmatprep.subr.bf16.mxu0 0
        %470 = vmatpush1.bf16.msra.mxu0 0
        %471 = vmatprep.subr.bf16.mxu0 0
        %472 = vmatpush1.bf16.msra.mxu0 0
        %473 = vmatprep.subr.bf16.mxu0 0
        %474 = vmatpush1.bf16.msra.mxu0 0
        %475 = vmatprep.subr.bf16.mxu0 0
        %476 = vmatpush1.bf16.msra.mxu0 0
        %477 = vmatprep.subr.bf16.mxu0 0
        %478 = vmatpush1.bf16.msra.mxu0 0
        %479 = vmatprep.subr.bf16.mxu0 0
        %480 = vmatpush1.bf16.msra.mxu0 0
        %481 = vmatprep.subr.bf16.mxu0 0
        %482 = vmatpush1.bf16.msra.mxu0 0
        %483 = vmatprep.subr.bf16.mxu0 0
        %484 = vmatpush1.bf16.msra.mxu0 0
        %485 = vmatprep.subr.bf16.mxu0 0
        %486 = vmatpush1.bf16.msra.mxu0 0
        %487 = vmatprep.subr.bf16.mxu0 0
        %488 = vmatpush1.bf16.msra.mxu0 0
        %489 = vmatprep.mubr.bf16.mxu0 0
        %490 = vmatmul.mubr.bf16.gmra.mrb[0].mxu0 %v455
        %v491 = vpop.f32.mrb[0].mxu0
        %v492 = vadd.f32 0.0, %v491
        %v493 = vpop.f32.mrb[0].mxu0
        %v494 = vadd.f32 0.0, %v493
        %v495 = vpop.f32.mrb[0].mxu0
        %v496 = vadd.f32 0.0, %v495
        %v497 = vpop.f32.mrb[0].mxu0
        %v498 = vadd.f32 0.0, %v497
        %499 = vdwg.mxu0
        %500 = vmatprep.subr.bf16.mxu0 %v448
        %501 = vmatpush1.bf16.msra.mxu0 %v447
        %502 = vmatprep.subr.bf16.mxu0 0
        %503 = vmatpush1.bf16.msra.mxu0 0
        %504 = vmatprep.subr.bf16.mxu0 0
        %505 = vmatpush1.bf16.msra.mxu0 0
        %506 = vmatprep.subr.bf16.mxu0 0
        %507 = vmatpush1.bf16.msra.mxu0 0
        %508 = vmatprep.subr.bf16.mxu0 0
        %509 = vmatpush1.bf16.msra.mxu0 0
        %510 = vmatprep.subr.bf16.mxu0 0
        %511 = vmatpush1.bf16.msra.mxu0 0
        %512 = vmatprep.subr.bf16.mxu0 0
        %513 = vmatpush1.bf16.msra.mxu0 0
        %514 = vmatprep.subr.bf16.mxu0 0
        %515 = vmatpush1.bf16.msra.mxu0 0
        %516 = vmatprep.subr.bf16.mxu0 0
        %517 = vmatpush1.bf16.msra.mxu0 0
        %518 = vmatprep.subr.bf16.mxu0 0
        %519 = vmatpush1.bf16.msra.mxu0 0
        %520 = vmatprep.subr.bf16.mxu0 0
        %521 = vmatpush1.bf16.msra.mxu0 0
        %522 = vmatprep.subr.bf16.mxu0 0
        %523 = vmatpush1.bf16.msra.mxu0 0
        %524 = vmatprep.subr.bf16.mxu0 0
        %525 = vmatpush1.bf16.msra.mxu0 0
        %526 = vmatprep.subr.bf16.mxu0 0
        %527 = vmatpush1.bf16.msra.mxu0 0
        %528 = vmatprep.subr.bf16.mxu0 0
        %529 = vmatpush1.bf16.msra.mxu0 0
        %530 = vmatprep.subr.bf16.mxu0 0
        %531 = vmatpush1.bf16.msra.mxu0 0
        %532 = vmatprep.mubr.bf16.mxu0 0
        %533 = vmatmul.mubr.bf16.gmra.mrb[0].mxu0 %v455
        %v534 = vpop.f32.mrb[0].mxu0
        %v535 = vadd.f32 0.0, %v534
        %v536 = vpop.f32.mrb[0].mxu0
        %v537 = vadd.f32 0.0, %v536
        %v538 = vpop.f32.mrb[0].mxu0
        %v539 = vadd.f32 0.0, %v538
        %v540 = vpop.f32.mrb[0].mxu0
        %v541 = vadd.f32 0.0, %v540
        %542 = vdwg.mxu0
        %v545 = vunpack.c.l.b16 %v414
        %v546 = vunpack.c.l.b16 %v415
        %v547 = vpack.c.b16 %v546, %v545
        %v549 = vsel %vm453, %v547, 0
        %551 = vmatprep.subr.bf16.mxu0 %v417
        %552 = vmatpush1.bf16.msra.mxu0 %v416
        %553 = vmatprep.subr.bf16.mxu0 0
        %554 = vmatpush1.bf16.msra.mxu0 0
        %555 = vmatprep.subr.bf16.mxu0 0
        %556 = vmatpush1.bf16.msra.mxu0 0
        %557 = vmatprep.subr.bf16.mxu0 0
        %558 = vmatpush1.bf16.msra.mxu0 0
        %559 = vmatprep.subr.bf16.mxu0 0
        %560 = vmatpush1.bf16.msra.mxu0 0
        %561 = vmatprep.subr.bf16.mxu0 0
        %562 = vmatpush1.bf16.msra.mxu0 0
        %563 = vmatprep.subr.bf16.mxu0 0
        %564 = vmatpush1.bf16.msra.mxu0 0
        %565 = vmatprep.subr.bf16.mxu0 0
        %566 = vmatpush1.bf16.msra.mxu0 0
        %567 = vmatprep.subr.bf16.mxu0 0
        %568 = vmatpush1.bf16.msra.mxu0 0
        %569 = vmatprep.subr.bf16.mxu0 0
        %570 = vmatpush1.bf16.msra.mxu0 0
        %571 = vmatprep.subr.bf16.mxu0 0
        %572 = vmatpush1.bf16.msra.mxu0 0
        %573 = vmatprep.subr.bf16.mxu0 0
        %574 = vmatpush1.bf16.msra.mxu0 0
        %575 = vmatprep.subr.bf16.mxu0 0
        %576 = vmatpush1.bf16.msra.mxu0 0
        %577 = vmatprep.subr.bf16.mxu0 0
        %578 = vmatpush1.bf16.msra.mxu0 0
        %579 = vmatprep.subr.bf16.mxu0 0
        %580 = vmatpush1.bf16.msra.mxu0 0
        %581 = vmatprep.subr.bf16.mxu0 0
        %582 = vmatpush1.bf16.msra.mxu0 0
        %583 = vmatprep.mubr.bf16.mxu0 0
        %584 = vmatmul.mubr.bf16.gmra.mrb[0].mxu0 %v549
        %v585 = vpop.f32.mrb[0].mxu0
        %v586 = vadd.f32 %v492, %v585
        %v587 = vpop.f32.mrb[0].mxu0
        %v588 = vadd.f32 %v494, %v587
        %v589 = vpop.f32.mrb[0].mxu0
        %v590 = vadd.f32 %v496, %v589
        %v591 = vpop.f32.mrb[0].mxu0
        %v592 = vadd.f32 %v498, %v591
        %593 = vdwg.mxu0
        %594 = vmatprep.subr.bf16.mxu0 %v419
        %595 = vmatpush1.bf16.msra.mxu0 %v418
        %596 = vmatprep.subr.bf16.mxu0 0
        %597 = vmatpush1.bf16.msra.mxu0 0
        %598 = vmatprep.subr.bf16.mxu0 0
        %599 = vmatpush1.bf16.msra.mxu0 0
        %600 = vmatprep.subr.bf16.mxu0 0
        %601 = vmatpush1.bf16.msra.mxu0 0
        %602 = vmatprep.subr.bf16.mxu0 0
        %603 = vmatpush1.bf16.msra.mxu0 0
        %604 = vmatprep.subr.bf16.mxu0 0
        %605 = vmatpush1.bf16.msra.mxu0 0
        %606 = vmatprep.subr.bf16.mxu0 0
        %607 = vmatpush1.bf16.msra.mxu0 0
        %608 = vmatprep.subr.bf16.mxu0 0
        %609 = vmatpush1.bf16.msra.mxu0 0
        %610 = vmatprep.subr.bf16.mxu0 0
        %611 = vmatpush1.bf16.msra.mxu0 0
        %612 = vmatprep.subr.bf16.mxu0 0
        %613 = vmatpush1.bf16.msra.mxu0 0
        %614 = vmatprep.subr.bf16.mxu0 0
        %615 = vmatpush1.bf16.msra.mxu0 0
        %616 = vmatprep.subr.bf16.mxu0 0
        %617 = vmatpush1.bf16.msra.mxu0 0
        %618 = vmatprep.subr.bf16.mxu0 0
        %619 = vmatpush1.bf16.msra.mxu0 0
        %620 = vmatprep.subr.bf16.mxu0 0
        %621 = vmatpush1.bf16.msra.mxu0 0
        %622 = vmatprep.subr.bf16.mxu0 0
        %623 = vmatpush1.bf16.msra.mxu0 0
        %624 = vmatprep.subr.bf16.mxu0 0
        %625 = vmatpush1.bf16.msra.mxu0 0
        %626 = vmatprep.mubr.bf16.mxu0 0
        %627 = vmatmul.mubr.bf16.gmra.mrb[0].mxu0 %v549
        %v628 = vpop.f32.mrb[0].mxu0
        %v629 = vadd.f32 %v535, %v628
        %v630 = vpop.f32.mrb[0].mxu0
        %v631 = vadd.f32 %v537, %v630
        %v632 = vpop.f32.mrb[0].mxu0
        %v633 = vadd.f32 %v539, %v632
        %v634 = vpop.f32.mrb[0].mxu0
        %v635 = vadd.f32 %v541, %v634
        %636 = vdwg.mxu0
        %s637 = scalar_lea.vmem %s0, 16
        %v638 = vld [vmem:[%s637] sm:$0xf]
        %v639 = vld [vmem:[%s637 + $0x4] sm:$0xf]
        %v642 = vunpack.c.l.b16 %v638
        %v643 = vunpack.c.l.b16 %v639
        %v644 = vpack.c.b16 %v643, %v642
        %645 = vrot.lane.b32.xlu0 %v416, 126
        %v646 = vpop.permute.xlu0 %645
        %647 = vrot.lane.b32.xlu0 %v417, 126
        %v648 = vpop.permute.xlu0 %647
        %649 = vrot.lane.b32.xlu0 %v418, 126
        %v650 = vpop.permute.xlu0 %649
        %651 = vrot.lane.b32.xlu0 %v419, 126
        %v652 = vpop.permute.xlu0 %651
        %653 = vrot.lane.b32.xlu0 %v423, 126
        %v654 = vpop.permute.xlu0 %653
        %vm655 = vcmask 1031168
        %v656 = vsel %vm655, %v646, %v648
        %v657 = vsel %vm655, %v648, %v650
        %v658 = vsel %vm655, %v650, %v652
        %v659 = vsel %vm655, %v652, %v654
        %v665 = vsel %vm453, %v644, 0
        %667 = vmatprep.subr.bf16.mxu0 %v657
        %668 = vmatpush1.bf16.msra.mxu0 %v656
        %669 = vmatprep.subr.bf16.mxu0 0
        %670 = vmatpush1.bf16.msra.mxu0 0
        %671 = vmatprep.subr.bf16.mxu0 0
        %672 = vmatpush1.bf16.msra.mxu0 0
        %673 = vmatprep.subr.bf16.mxu0 0
        %674 = vmatpush1.bf16.msra.mxu0 0
        %675 = vmatprep.subr.bf16.mxu0 0
        %676 = vmatpush1.bf16.msra.mxu0 0
        %677 = vmatprep.subr.bf16.mxu0 0
        %678 = vmatpush1.bf16.msra.mxu0 0
        %679 = vmatprep.subr.bf16.mxu0 0
        %680 = vmatpush1.bf16.msra.mxu0 0
        %681 = vmatprep.subr.bf16.mxu0 0
        %682 = vmatpush1.bf16.msra.mxu0 0
        %683 = vmatprep.subr.bf16.mxu0 0
        %684 = vmatpush1.bf16.msra.mxu0 0
        %685 = vmatprep.subr.bf16.mxu0 0
        %686 = vmatpush1.bf16.msra.mxu0 0
        %687 = vmatprep.subr.bf16.mxu0 0
        %688 = vmatpush1.bf16.msra.mxu0 0
        %689 = vmatprep.subr.bf16.mxu0 0
        %690 = vmatpush1.bf16.msra.mxu0 0
        %691 = vmatprep.subr.bf16.mxu0 0
        %692 = vmatpush1.bf16.msra.mxu0 0
        %693 = vmatprep.subr.bf16.mxu0 0
        %694 = vmatpush1.bf16.msra.mxu0 0
        %695 = vmatprep.subr.bf16.mxu0 0
        %696 = vmatpush1.bf16.msra.mxu0 0
        %697 = vmatprep.subr.bf16.mxu0 0
        %698 = vmatpush1.bf16.msra.mxu0 0
        %699 = vmatprep.mubr.bf16.mxu0 0
        %700 = vmatmul.mubr.bf16.gmra.mrb[0].mxu0 %v665
        %v701 = vpop.f32.mrb[0].mxu0
        %v702 = vadd.f32 0.0, %v701
        %v703 = vpop.f32.mrb[0].mxu0
        %v704 = vadd.f32 0.0, %v703
        %v705 = vpop.f32.mrb[0].mxu0
        %v706 = vadd.f32 0.0, %v705
        %v707 = vpop.f32.mrb[0].mxu0
        %v708 = vadd.f32 0.0, %v707
        %709 = vdwg.mxu0
        %710 = vmatprep.subr.bf16.mxu0 %v659
        %711 = vmatpush1.bf16.msra.mxu0 %v658
        %712 = vmatprep.subr.bf16.mxu0 0
        %713 = vmatpush1.bf16.msra.mxu0 0
        %714 = vmatprep.subr.bf16.mxu0 0
        %715 = vmatpush1.bf16.msra.mxu0 0
        %716 = vmatprep.subr.bf16.mxu0 0
        %717 = vmatpush1.bf16.msra.mxu0 0
        %718 = vmatprep.subr.bf16.mxu0 0
        %719 = vmatpush1.bf16.msra.mxu0 0
        %720 = vmatprep.subr.bf16.mxu0 0
        %721 = vmatpush1.bf16.msra.mxu0 0
        %722 = vmatprep.subr.bf16.mxu0 0
        %723 = vmatpush1.bf16.msra.mxu0 0
        %724 = vmatprep.subr.bf16.mxu0 0
        %725 = vmatpush1.bf16.msra.mxu0 0
        %726 = vmatprep.subr.bf16.mxu0 0
        %727 = vmatpush1.bf16.msra.mxu0 0
        %728 = vmatprep.subr.bf16.mxu0 0
        %729 = vmatpush1.bf16.msra.mxu0 0
        %730 = vmatprep.subr.bf16.mxu0 0
        %731 = vmatpush1.bf16.msra.mxu0 0
        %732 = vmatprep.subr.bf16.mxu0 0
        %733 = vmatpush1.bf16.msra.mxu0 0
        %734 = vmatprep.subr.bf16.mxu0 0
        %735 = vmatpush1.bf16.msra.mxu0 0
        %736 = vmatprep.subr.bf16.mxu0 0
        %737 = vmatpush1.bf16.msra.mxu0 0
        %738 = vmatprep.subr.bf16.mxu0 0
        %739 = vmatpush1.bf16.msra.mxu0 0
        %740 = vmatprep.subr.bf16.mxu0 0
        %741 = vmatpush1.bf16.msra.mxu0 0
        %742 = vmatprep.mubr.bf16.mxu0 0
        %743 = vmatmul.mubr.bf16.gmra.mrb[0].mxu0 %v665
        %v744 = vpop.f32.mrb[0].mxu0
        %v745 = vadd.f32 0.0, %v744
        %v746 = vpop.f32.mrb[0].mxu0
        %v747 = vadd.f32 0.0, %v746
        %v748 = vpop.f32.mrb[0].mxu0
        %v749 = vadd.f32 0.0, %v748
        %v750 = vpop.f32.mrb[0].mxu0
        %v751 = vadd.f32 0.0, %v750
        %752 = vdwg.mxu0
        %v753 = vadd.f32 %v586, %v702
        %v754 = vadd.f32 %v588, %v704
        %v755 = vadd.f32 %v629, %v745
        %v756 = vadd.f32 %v631, %v747
        %v757 = vadd.f32 %v590, %v706
        %v758 = vadd.f32 %v592, %v708
        %v759 = vadd.f32 %v633, %v749
        %v760 = vadd.f32 %v635, %v751
        %s761 = scalar_lea.vmem %s0, 24
        %v762 = vld [vmem:[%s761] sm:$0xf]
        %v763 = vld [vmem:[%s761 + $0x4] sm:$0xf]
        %v766 = vunpack.c.l.b16 %v762
        %v767 = vunpack.c.l.b16 %v763
        %v768 = vpack.c.b16 %v767, %v766
        %769 = vrot.lane.b32.xlu0 %v416, 118
        %v770 = vpop.permute.xlu0 %769
        %771 = vrot.lane.b32.xlu0 %v417, 118
        %v772 = vpop.permute.xlu0 %771
        %773 = vrot.lane.b32.xlu0 %v418, 118
        %v774 = vpop.permute.xlu0 %773
        %775 = vrot.lane.b32.xlu0 %v419, 118
        %v776 = vpop.permute.xlu0 %775
        %777 = vrot.lane.b32.xlu0 %v423, 118
        %v778 = vpop.permute.xlu0 %777
        %vm779 = vcmask 965632
        %v780 = vsel %vm779, %v770, %v772
        %v781 = vsel %vm779, %v772, %v774
        %v782 = vsel %vm779, %v774, %v776
        %v783 = vsel %vm779, %v776, %v778
        %v789 = vsel %vm453, %v768, 0
        %791 = vmatprep.subr.bf16.mxu0 %v781
        %792 = vmatpush1.bf16.msra.mxu0 %v780
        %793 = vmatprep.subr.bf16.mxu0 0
        %794 = vmatpush1.bf16.msra.mxu0 0
        %795 = vmatprep.subr.bf16.mxu0 0
        %796 = vmatpush1.bf16.msra.mxu0 0
        %797 = vmatprep.subr.bf16.mxu0 0
        %798 = vmatpush1.bf16.msra.mxu0 0
        %799 = vmatprep.subr.bf16.mxu0 0
        %800 = vmatpush1.bf16.msra.mxu0 0
        %801 = vmatprep.subr.bf16.mxu0 0
        %802 = vmatpush1.bf16.msra.mxu0 0
        %803 = vmatprep.subr.bf16.mxu0 0
        %804 = vmatpush1.bf16.msra.mxu0 0
        %805 = vmatprep.subr.bf16.mxu0 0
        %806 = vmatpush1.bf16.msra.mxu0 0
        %807 = vmatprep.subr.bf16.mxu0 0
        %808 = vmatpush1.bf16.msra.mxu0 0
        %809 = vmatprep.subr.bf16.mxu0 0
        %810 = vmatpush1.bf16.msra.mxu0 0
        %811 = vmatprep.subr.bf16.mxu0 0
        %812 = vmatpush1.bf16.msra.mxu0 0
        %813 = vmatprep.subr.bf16.mxu0 0
        %814 = vmatpush1.bf16.msra.mxu0 0
        %815 = vmatprep.subr.bf16.mxu0 0
        %816 = vmatpush1.bf16.msra.mxu0 0
        %817 = vmatprep.subr.bf16.mxu0 0
        %818 = vmatpush1.bf16.msra.mxu0 0
        %819 = vmatprep.subr.bf16.mxu0 0
        %820 = vmatpush1.bf16.msra.mxu0 0
        %821 = vmatprep.subr.bf16.mxu0 0
        %822 = vmatpush1.bf16.msra.mxu0 0
        %823 = vmatprep.mubr.bf16.mxu0 0
        %824 = vmatmul.mubr.bf16.gmra.mrb[0].mxu0 %v789
        %v825 = vpop.f32.mrb[0].mxu0
        %v826 = vadd.f32 0.0, %v825
        %v827 = vpop.f32.mrb[0].mxu0
        %v828 = vadd.f32 0.0, %v827
        %v829 = vpop.f32.mrb[0].mxu0
        %v830 = vadd.f32 0.0, %v829
        %v831 = vpop.f32.mrb[0].mxu0
        %v832 = vadd.f32 0.0, %v831
        %833 = vdwg.mxu0
        %834 = vmatprep.subr.bf16.mxu0 %v783
        %835 = vmatpush1.bf16.msra.mxu0 %v782
        %836 = vmatprep.subr.bf16.mxu0 0
        %837 = vmatpush1.bf16.msra.mxu0 0
        %838 = vmatprep.subr.bf16.mxu0 0
        %839 = vmatpush1.bf16.msra.mxu0 0
        %840 = vmatprep.subr.bf16.mxu0 0
        %841 = vmatpush1.bf16.msra.mxu0 0
        %842 = vmatprep.subr.bf16.mxu0 0
        %843 = vmatpush1.bf16.msra.mxu0 0
        %844 = vmatprep.subr.bf16.mxu0 0
        %845 = vmatpush1.bf16.msra.mxu0 0
        %846 = vmatprep.subr.bf16.mxu0 0
        %847 = vmatpush1.bf16.msra.mxu0 0
        %848 = vmatprep.subr.bf16.mxu0 0
        %849 = vmatpush1.bf16.msra.mxu0 0
        %850 = vmatprep.subr.bf16.mxu0 0
        %851 = vmatpush1.bf16.msra.mxu0 0
        %852 = vmatprep.subr.bf16.mxu0 0
        %853 = vmatpush1.bf16.msra.mxu0 0
        %854 = vmatprep.subr.bf16.mxu0 0
        %855 = vmatpush1.bf16.msra.mxu0 0
        %856 = vmatprep.subr.bf16.mxu0 0
        %857 = vmatpush1.bf16.msra.mxu0 0
        %858 = vmatprep.subr.bf16.mxu0 0
        %859 = vmatpush1.bf16.msra.mxu0 0
        %860 = vmatprep.subr.bf16.mxu0 0
        %861 = vmatpush1.bf16.msra.mxu0 0
        %862 = vmatprep.subr.bf16.mxu0 0
        %863 = vmatpush1.bf16.msra.mxu0 0
        %864 = vmatprep.subr.bf16.mxu0 0
        %865 = vmatpush1.bf16.msra.mxu0 0
        %866 = vmatprep.mubr.bf16.mxu0 0
        %867 = vmatmul.mubr.bf16.gmra.mrb[0].mxu0 %v789
        %v868 = vpop.f32.mrb[0].mxu0
        %v869 = vadd.f32 0.0, %v868
        %v870 = vpop.f32.mrb[0].mxu0
        %v871 = vadd.f32 0.0, %v870
        %v872 = vpop.f32.mrb[0].mxu0
        %v873 = vadd.f32 0.0, %v872
        %v874 = vpop.f32.mrb[0].mxu0
        %v875 = vadd.f32 0.0, %v874
        %876 = vdwg.mxu0
        %v877 = vadd.f32 %v753, %v826
        %v878 = vadd.f32 %v754, %v828
        %v879 = vadd.f32 %v755, %v869
        %v880 = vadd.f32 %v756, %v871
        %v881 = vadd.f32 %v757, %v830
        %v882 = vadd.f32 %v758, %v832
        %v883 = vadd.f32 %v759, %v873
        %v884 = vadd.f32 %v760, %v875
        %s885 = scalar_lea.vmem %s0, 32
        %v886 = vld [vmem:[%s885] sm:$0xf]
        %v887 = vld [vmem:[%s885 + $0x4] sm:$0xf]
        %v890 = vunpack.c.l.b16 %v886
        %v891 = vunpack.c.l.b16 %v887
        %v892 = vpack.c.b16 %v891, %v890
        %893 = vrot.lane.b32.xlu0 %v416, 117
        %v894 = vpop.permute.xlu0 %893
        %895 = vrot.lane.b32.xlu0 %v417, 117
        %v896 = vpop.permute.xlu0 %895
        %897 = vrot.lane.b32.xlu0 %v418, 117
        %v898 = vpop.permute.xlu0 %897
        %899 = vrot.lane.b32.xlu0 %v419, 117
        %v900 = vpop.permute.xlu0 %899
        %901 = vrot.lane.b32.xlu0 %v423, 117
        %v902 = vpop.permute.xlu0 %901
        %vm903 = vcmask 957440
        %v904 = vsel %vm903, %v894, %v896
        %v905 = vsel %vm903, %v896, %v898
        %v906 = vsel %vm903, %v898, %v900
        %v907 = vsel %vm903, %v900, %v902
        %v913 = vsel %vm453, %v892, 0
        %915 = vmatprep.subr.bf16.mxu0 %v905
        %916 = vmatpush1.bf16.msra.mxu0 %v904
        %917 = vmatprep.subr.bf16.mxu0 0
        %918 = vmatpush1.bf16.msra.mxu0 0
        %919 = vmatprep.subr.bf16.mxu0 0
        %920 = vmatpush1.bf16.msra.mxu0 0
        %921 = vmatprep.subr.bf16.mxu0 0
        %922 = vmatpush1.bf16.msra.mxu0 0
        %923 = vmatprep.subr.bf16.mxu0 0
        %924 = vmatpush1.bf16.msra.mxu0 0
        %925 = vmatprep.subr.bf16.mxu0 0
        %926 = vmatpush1.bf16.msra.mxu0 0
        %927 = vmatprep.subr.bf16.mxu0 0
        %928 = vmatpush1.bf16.msra.mxu0 0
        %929 = vmatprep.subr.bf16.mxu0 0
        %930 = vmatpush1.bf16.msra.mxu0 0
        %931 = vmatprep.subr.bf16.mxu0 0
        %932 = vmatpush1.bf16.msra.mxu0 0
        %933 = vmatprep.subr.bf16.mxu0 0
        %934 = vmatpush1.bf16.msra.mxu0 0
        %935 = vmatprep.subr.bf16.mxu0 0
        %936 = vmatpush1.bf16.msra.mxu0 0
        %937 = vmatprep.subr.bf16.mxu0 0
        %938 = vmatpush1.bf16.msra.mxu0 0
        %939 = vmatprep.subr.bf16.mxu0 0
        %940 = vmatpush1.bf16.msra.mxu0 0
        %941 = vmatprep.subr.bf16.mxu0 0
        %942 = vmatpush1.bf16.msra.mxu0 0
        %943 = vmatprep.subr.bf16.mxu0 0
        %944 = vmatpush1.bf16.msra.mxu0 0
        %945 = vmatprep.subr.bf16.mxu0 0
        %946 = vmatpush1.bf16.msra.mxu0 0
        %947 = vmatprep.mubr.bf16.mxu0 0
        %948 = vmatmul.mubr.bf16.gmra.mrb[0].mxu0 %v913
        %v949 = vpop.f32.mrb[0].mxu0
        %v950 = vadd.f32 0.0, %v949
        %v951 = vpop.f32.mrb[0].mxu0
        %v952 = vadd.f32 0.0, %v951
        %v953 = vpop.f32.mrb[0].mxu0
        %v954 = vadd.f32 0.0, %v953
        %v955 = vpop.f32.mrb[0].mxu0
        %v956 = vadd.f32 0.0, %v955
        %957 = vdwg.mxu0
        %958 = vmatprep.subr.bf16.mxu0 %v907
        %959 = vmatpush1.bf16.msra.mxu0 %v906
        %960 = vmatprep.subr.bf16.mxu0 0
        %961 = vmatpush1.bf16.msra.mxu0 0
        %962 = vmatprep.subr.bf16.mxu0 0
        %963 = vmatpush1.bf16.msra.mxu0 0
        %964 = vmatprep.subr.bf16.mxu0 0
        %965 = vmatpush1.bf16.msra.mxu0 0
        %966 = vmatprep.subr.bf16.mxu0 0
        %967 = vmatpush1.bf16.msra.mxu0 0
        %968 = vmatprep.subr.bf16.mxu0 0
        %969 = vmatpush1.bf16.msra.mxu0 0
        %970 = vmatprep.subr.bf16.mxu0 0
        %971 = vmatpush1.bf16.msra.mxu0 0
        %972 = vmatprep.subr.bf16.mxu0 0
        %973 = vmatpush1.bf16.msra.mxu0 0
        %974 = vmatprep.subr.bf16.mxu0 0
        %975 = vmatpush1.bf16.msra.mxu0 0
        %976 = vmatprep.subr.bf16.mxu0 0
        %977 = vmatpush1.bf16.msra.mxu0 0
        %978 = vmatprep.subr.bf16.mxu0 0
        %979 = vmatpush1.bf16.msra.mxu0 0
        %980 = vmatprep.subr.bf16.mxu0 0
        %981 = vmatpush1.bf16.msra.mxu0 0
        %982 = vmatprep.subr.bf16.mxu0 0
        %983 = vmatpush1.bf16.msra.mxu0 0
        %984 = vmatprep.subr.bf16.mxu0 0
        %985 = vmatpush1.bf16.msra.mxu0 0
        %986 = vmatprep.subr.bf16.mxu0 0
        %987 = vmatpush1.bf16.msra.mxu0 0
        %988 = vmatprep.subr.bf16.mxu0 0
        %989 = vmatpush1.bf16.msra.mxu0 0
        %990 = vmatprep.mubr.bf16.mxu0 0
        %991 = vmatmul.mubr.bf16.gmra.mrb[0].mxu0 %v913
        %v992 = vpop.f32.mrb[0].mxu0
        %v993 = vadd.f32 0.0, %v992
        %v994 = vpop.f32.mrb[0].mxu0
        %v995 = vadd.f32 0.0, %v994
        %v996 = vpop.f32.mrb[0].mxu0
        %v997 = vadd.f32 0.0, %v996
        %v998 = vpop.f32.mrb[0].mxu0
        %v999 = vadd.f32 0.0, %v998
        %1000 = vdwg.mxu0
        %v1001 = vadd.f32 %v877, %v950
        %v1002 = vadd.f32 %v878, %v952
        %v1003 = vadd.f32 %v879, %v993
        %v1004 = vadd.f32 %v880, %v995
        %v1005 = vadd.f32 %v881, %v954
        %v1006 = vadd.f32 %v882, %v956
        %v1007 = vadd.f32 %v883, %v997
        %v1008 = vadd.f32 %v884, %v999
        %s1009 = scalar_lea.vmem %s0, 40
        %v1010 = vld [vmem:[%s1009] sm:$0xf]
        %v1011 = vld [vmem:[%s1009 + $0x4] sm:$0xf]
        %v1014 = vunpack.c.l.b16 %v1010
        %v1015 = vunpack.c.l.b16 %v1011
        %v1016 = vpack.c.b16 %v1015, %v1014
        %1017 = vrot.lane.b32.xlu0 %v416, 116
        %v1018 = vpop.permute.xlu0 %1017
        %1019 = vrot.lane.b32.xlu0 %v417, 116
        %v1020 = vpop.permute.xlu0 %1019
        %1021 = vrot.lane.b32.xlu0 %v418, 116
        %v1022 = vpop.permute.xlu0 %1021
        %1023 = vrot.lane.b32.xlu0 %v419, 116
        %v1024 = vpop.permute.xlu0 %1023
        %1025 = vrot.lane.b32.xlu0 %v423, 116
        %v1026 = vpop.permute.xlu0 %1025
        %vm1027 = vcmask 949248
        %v1028 = vsel %vm1027, %v1018, %v1020
        %v1029 = vsel %vm1027, %v1020, %v1022
        %v1030 = vsel %vm1027, %v1022, %v1024
        %v1031 = vsel %vm1027, %v1024, %v1026
        %v1037 = vsel %vm453, %v1016, 0
        %1039 = vmatprep.subr.bf16.mxu0 %v1029
        %1040 = vmatpush1.bf16.msra.mxu0 %v1028
        %1041 = vmatprep.subr.bf16.mxu0 0
        %1042 = vmatpush1.bf16.msra.mxu0 0
        %1043 = vmatprep.subr.bf16.mxu0 0
        %1044 = vmatpush1.bf16.msra.mxu0 0
        %1045 = vmatprep.subr.bf16.mxu0 0
        %1046 = vmatpush1.bf16.msra.mxu0 0
        %1047 = vmatprep.subr.bf16.mxu0 0
        %1048 = vmatpush1.bf16.msra.mxu0 0
        %1049 = vmatprep.subr.bf16.mxu0 0
        %1050 = vmatpush1.bf16.msra.mxu0 0
        %1051 = vmatprep.subr.bf16.mxu0 0
        %1052 = vmatpush1.bf16.msra.mxu0 0
        %1053 = vmatprep.subr.bf16.mxu0 0
        %1054 = vmatpush1.bf16.msra.mxu0 0
        %1055 = vmatprep.subr.bf16.mxu0 0
        %1056 = vmatpush1.bf16.msra.mxu0 0
        %1057 = vmatprep.subr.bf16.mxu0 0
        %1058 = vmatpush1.bf16.msra.mxu0 0
        %1059 = vmatprep.subr.bf16.mxu0 0
        %1060 = vmatpush1.bf16.msra.mxu0 0
        %1061 = vmatprep.subr.bf16.mxu0 0
        %1062 = vmatpush1.bf16.msra.mxu0 0
        %1063 = vmatprep.subr.bf16.mxu0 0
        %1064 = vmatpush1.bf16.msra.mxu0 0
        %1065 = vmatprep.subr.bf16.mxu0 0
        %1066 = vmatpush1.bf16.msra.mxu0 0
        %1067 = vmatprep.subr.bf16.mxu0 0
        %1068 = vmatpush1.bf16.msra.mxu0 0
        %1069 = vmatprep.subr.bf16.mxu0 0
        %1070 = vmatpush1.bf16.msra.mxu0 0
        %1071 = vmatprep.mubr.bf16.mxu0 0
        %1072 = vmatmul.mubr.bf16.gmra.mrb[0].mxu0 %v1037
        %v1073 = vpop.f32.mrb[0].mxu0
        %v1074 = vadd.f32 0.0, %v1073
        %v1075 = vpop.f32.mrb[0].mxu0
        %v1076 = vadd.f32 0.0, %v1075
        %v1077 = vpop.f32.mrb[0].mxu0
        %v1078 = vadd.f32 0.0, %v1077
        %v1079 = vpop.f32.mrb[0].mxu0
        %v1080 = vadd.f32 0.0, %v1079
        %1081 = vdwg.mxu0
        %1082 = vmatprep.subr.bf16.mxu0 %v1031
        %1083 = vmatpush1.bf16.msra.mxu0 %v1030
        %1084 = vmatprep.subr.bf16.mxu0 0
        %1085 = vmatpush1.bf16.msra.mxu0 0
        %1086 = vmatprep.subr.bf16.mxu0 0
        %1087 = vmatpush1.bf16.msra.mxu0 0
        %1088 = vmatprep.subr.bf16.mxu0 0
        %1089 = vmatpush1.bf16.msra.mxu0 0
        %1090 = vmatprep.subr.bf16.mxu0 0
        %1091 = vmatpush1.bf16.msra.mxu0 0
        %1092 = vmatprep.subr.bf16.mxu0 0
        %1093 = vmatpush1.bf16.msra.mxu0 0
        %1094 = vmatprep.subr.bf16.mxu0 0
        %1095 = vmatpush1.bf16.msra.mxu0 0
        %1096 = vmatprep.subr.bf16.mxu0 0
        %1097 = vmatpush1.bf16.msra.mxu0 0
        %1098 = vmatprep.subr.bf16.mxu0 0
        %1099 = vmatpush1.bf16.msra.mxu0 0
        %1100 = vmatprep.subr.bf16.mxu0 0
        %1101 = vmatpush1.bf16.msra.mxu0 0
        %1102 = vmatprep.subr.bf16.mxu0 0
        %1103 = vmatpush1.bf16.msra.mxu0 0
        %1104 = vmatprep.subr.bf16.mxu0 0
        %1105 = vmatpush1.bf16.msra.mxu0 0
        %1106 = vmatprep.subr.bf16.mxu0 0
        %1107 = vmatpush1.bf16.msra.mxu0 0
        %1108 = vmatprep.subr.bf16.mxu0 0
        %1109 = vmatpush1.bf16.msra.mxu0 0
        %1110 = vmatprep.subr.bf16.mxu0 0
        %1111 = vmatpush1.bf16.msra.mxu0 0
        %1112 = vmatprep.subr.bf16.mxu0 0
        %1113 = vmatpush1.bf16.msra.mxu0 0
        %1114 = vmatprep.mubr.bf16.mxu0 0
        %1115 = vmatmul.mubr.bf16.gmra.mrb[0].mxu0 %v1037
        %v1116 = vpop.f32.mrb[0].mxu0
        %v1117 = vadd.f32 0.0, %v1116
        %v1118 = vpop.f32.mrb[0].mxu0
        %v1119 = vadd.f32 0.0, %v1118
        %v1120 = vpop.f32.mrb[0].mxu0
        %v1121 = vadd.f32 0.0, %v1120
        %v1122 = vpop.f32.mrb[0].mxu0
        %v1123 = vadd.f32 0.0, %v1122
        %1124 = vdwg.mxu0
        %v1125 = vadd.f32 %v1001, %v1074
        %v1126 = vadd.f32 %v1002, %v1076
        %v1127 = vadd.f32 %v1003, %v1117
        %v1128 = vadd.f32 %v1004, %v1119
        %v1129 = vadd.f32 %v1005, %v1078
        %v1130 = vadd.f32 %v1006, %v1080
        %v1131 = vadd.f32 %v1007, %v1121
        %v1132 = vadd.f32 %v1008, %v1123
        %s1133 = scalar_lea.vmem %s0, 48
        %v1134 = vld [vmem:[%s1133] sm:$0xf]
        %v1135 = vld [vmem:[%s1133 + $0x4] sm:$0xf]
        %v1138 = vunpack.c.l.b16 %v1134
        %v1139 = vunpack.c.l.b16 %v1135
        %v1140 = vpack.c.b16 %v1139, %v1138
        %1141 = vrot.lane.b32.xlu0 %v416, 108
        %v1142 = vpop.permute.xlu0 %1141
        %1143 = vrot.lane.b32.xlu0 %v417, 108
        %v1144 = vpop.permute.xlu0 %1143
        %1145 = vrot.lane.b32.xlu0 %v418, 108
        %v1146 = vpop.permute.xlu0 %1145
        %1147 = vrot.lane.b32.xlu0 %v419, 108
        %v1148 = vpop.permute.xlu0 %1147
        %1149 = vrot.lane.b32.xlu0 %v423, 108
        %v1150 = vpop.permute.xlu0 %1149
        %vm1151 = vcmask 883712
        %v1152 = vsel %vm1151, %v1142, %v1144
        %v1153 = vsel %vm1151, %v1144, %v1146
        %v1154 = vsel %vm1151, %v1146, %v1148
        %v1155 = vsel %vm1151, %v1148, %v1150
        %v1161 = vsel %vm453, %v1140, 0
        %1163 = vmatprep.subr.bf16.mxu0 %v1153
        %1164 = vmatpush1.bf16.msra.mxu0 %v1152
        %1165 = vmatprep.subr.bf16.mxu0 0
        %1166 = vmatpush1.bf16.msra.mxu0 0
        %1167 = vmatprep.subr.bf16.mxu0 0
        %1168 = vmatpush1.bf16.msra.mxu0 0
        %1169 = vmatprep.subr.bf16.mxu0 0
        %1170 = vmatpush1.bf16.msra.mxu0 0
        %1171 = vmatprep.subr.bf16.mxu0 0
        %1172 = vmatpush1.bf16.msra.mxu0 0
        %1173 = vmatprep.subr.bf16.mxu0 0
        %1174 = vmatpush1.bf16.msra.mxu0 0
        %1175 = vmatprep.subr.bf16.mxu0 0
        %1176 = vmatpush1.bf16.msra.mxu0 0
        %1177 = vmatprep.subr.bf16.mxu0 0
        %1178 = vmatpush1.bf16.msra.mxu0 0
        %1179 = vmatprep.subr.bf16.mxu0 0
        %1180 = vmatpush1.bf16.msra.mxu0 0
        %1181 = vmatprep.subr.bf16.mxu0 0
        %1182 = vmatpush1.bf16.msra.mxu0 0
        %1183 = vmatprep.subr.bf16.mxu0 0
        %1184 = vmatpush1.bf16.msra.mxu0 0
        %1185 = vmatprep.subr.bf16.mxu0 0
        %1186 = vmatpush1.bf16.msra.mxu0 0
        %1187 = vmatprep.subr.bf16.mxu0 0
        %1188 = vmatpush1.bf16.msra.mxu0 0
        %1189 = vmatprep.subr.bf16.mxu0 0
        %1190 = vmatpush1.bf16.msra.mxu0 0
        %1191 = vmatprep.subr.bf16.mxu0 0
        %1192 = vmatpush1.bf16.msra.mxu0 0
        %1193 = vmatprep.subr.bf16.mxu0 0
        %1194 = vmatpush1.bf16.msra.mxu0 0
        %1195 = vmatprep.mubr.bf16.mxu0 0
        %1196 = vmatmul.mubr.bf16.gmra.mrb[0].mxu0 %v1161
        %v1197 = vpop.f32.mrb[0].mxu0
        %v1198 = vadd.f32 0.0, %v1197
        %v1199 = vpop.f32.mrb[0].mxu0
        %v1200 = vadd.f32 0.0, %v1199
        %v1201 = vpop.f32.mrb[0].mxu0
        %v1202 = vadd.f32 0.0, %v1201
        %v1203 = vpop.f32.mrb[0].mxu0
        %v1204 = vadd.f32 0.0, %v1203
        %1205 = vdwg.mxu0
        %1206 = vmatprep.subr.bf16.mxu0 %v1155
        %1207 = vmatpush1.bf16.msra.mxu0 %v1154
        %1208 = vmatprep.subr.bf16.mxu0 0
        %1209 = vmatpush1.bf16.msra.mxu0 0
        %1210 = vmatprep.subr.bf16.mxu0 0
        %1211 = vmatpush1.bf16.msra.mxu0 0
        %1212 = vmatprep.subr.bf16.mxu0 0
        %1213 = vmatpush1.bf16.msra.mxu0 0
        %1214 = vmatprep.subr.bf16.mxu0 0
        %1215 = vmatpush1.bf16.msra.mxu0 0
        %1216 = vmatprep.subr.bf16.mxu0 0
        %1217 = vmatpush1.bf16.msra.mxu0 0
        %1218 = vmatprep.subr.bf16.mxu0 0
        %1219 = vmatpush1.bf16.msra.mxu0 0
        %1220 = vmatprep.subr.bf16.mxu0 0
        %1221 = vmatpush1.bf16.msra.mxu0 0
        %1222 = vmatprep.subr.bf16.mxu0 0
        %1223 = vmatpush1.bf16.msra.mxu0 0
        %1224 = vmatprep.subr.bf16.mxu0 0
        %1225 = vmatpush1.bf16.msra.mxu0 0
        %1226 = vmatprep.subr.bf16.mxu0 0
        %1227 = vmatpush1.bf16.msra.mxu0 0
        %1228 = vmatprep.subr.bf16.mxu0 0
        %1229 = vmatpush1.bf16.msra.mxu0 0
        %1230 = vmatprep.subr.bf16.mxu0 0
        %1231 = vmatpush1.bf16.msra.mxu0 0
        %1232 = vmatprep.subr.bf16.mxu0 0
        %1233 = vmatpush1.bf16.msra.mxu0 0
        %1234 = vmatprep.subr.bf16.mxu0 0
        %1235 = vmatpush1.bf16.msra.mxu0 0
        %1236 = vmatprep.subr.bf16.mxu0 0
        %1237 = vmatpush1.bf16.msra.mxu0 0
        %1238 = vmatprep.mubr.bf16.mxu0 0
        %1239 = vmatmul.mubr.bf16.gmra.mrb[0].mxu0 %v1161
        %v1240 = vpop.f32.mrb[0].mxu0
        %v1241 = vadd.f32 0.0, %v1240
        %v1242 = vpop.f32.mrb[0].mxu0
        %v1243 = vadd.f32 0.0, %v1242
        %v1244 = vpop.f32.mrb[0].mxu0
        %v1245 = vadd.f32 0.0, %v1244
        %v1246 = vpop.f32.mrb[0].mxu0
        %v1247 = vadd.f32 0.0, %v1246
        %1248 = vdwg.mxu0
        %v1249 = vadd.f32 %v1125, %v1198
        %v1250 = vadd.f32 %v1126, %v1200
        %v1251 = vadd.f32 %v1127, %v1241
        %v1252 = vadd.f32 %v1128, %v1243
        %v1253 = vadd.f32 %v1129, %v1202
        %v1254 = vadd.f32 %v1130, %v1204
        %v1255 = vadd.f32 %v1131, %v1245
        %v1256 = vadd.f32 %v1132, %v1247
        %s1257 = scalar_lea.vmem %s0, 56
        %v1258 = vld [vmem:[%s1257] sm:$0xf]
        %v1259 = vld [vmem:[%s1257 + $0x4] sm:$0xf]
        %v1262 = vunpack.c.l.b16 %v1258
        %v1263 = vunpack.c.l.b16 %v1259
        %v1264 = vpack.c.b16 %v1263, %v1262
        %1265 = vrot.lane.b32.xlu0 %v416, 107
        %v1266 = vpop.permute.xlu0 %1265
        %1267 = vrot.lane.b32.xlu0 %v417, 107
        %v1268 = vpop.permute.xlu0 %1267
        %1269 = vrot.lane.b32.xlu0 %v418, 107
        %v1270 = vpop.permute.xlu0 %1269
        %1271 = vrot.lane.b32.xlu0 %v419, 107
        %v1272 = vpop.permute.xlu0 %1271
        %1273 = vrot.lane.b32.xlu0 %v423, 107
        %v1274 = vpop.permute.xlu0 %1273
        %vm1275 = vcmask 875520
        %v1276 = vsel %vm1275, %v1266, %v1268
        %v1277 = vsel %vm1275, %v1268, %v1270
        %v1278 = vsel %vm1275, %v1270, %v1272
        %v1279 = vsel %vm1275, %v1272, %v1274
        %v1285 = vsel %vm453, %v1264, 0
        %1287 = vmatprep.subr.bf16.mxu0 %v1277
        %1288 = vmatpush1.bf16.msra.mxu0 %v1276
        %1289 = vmatprep.subr.bf16.mxu0 0
        %1290 = vmatpush1.bf16.msra.mxu0 0
        %1291 = vmatprep.subr.bf16.mxu0 0
        %1292 = vmatpush1.bf16.msra.mxu0 0
        %1293 = vmatprep.subr.bf16.mxu0 0
        %1294 = vmatpush1.bf16.msra.mxu0 0
        %1295 = vmatprep.subr.bf16.mxu0 0
        %1296 = vmatpush1.bf16.msra.mxu0 0
        %1297 = vmatprep.subr.bf16.mxu0 0
        %1298 = vmatpush1.bf16.msra.mxu0 0
        %1299 = vmatprep.subr.bf16.mxu0 0
        %1300 = vmatpush1.bf16.msra.mxu0 0
        %1301 = vmatprep.subr.bf16.mxu0 0
        %1302 = vmatpush1.bf16.msra.mxu0 0
        %1303 = vmatprep.subr.bf16.mxu0 0
        %1304 = vmatpush1.bf16.msra.mxu0 0
        %1305 = vmatprep.subr.bf16.mxu0 0
        %1306 = vmatpush1.bf16.msra.mxu0 0
        %1307 = vmatprep.subr.bf16.mxu0 0
        %1308 = vmatpush1.bf16.msra.mxu0 0
        %1309 = vmatprep.subr.bf16.mxu0 0
        %1310 = vmatpush1.bf16.msra.mxu0 0
        %1311 = vmatprep.subr.bf16.mxu0 0
        %1312 = vmatpush1.bf16.msra.mxu0 0
        %1313 = vmatprep.subr.bf16.mxu0 0
        %1314 = vmatpush1.bf16.msra.mxu0 0
        %1315 = vmatprep.subr.bf16.mxu0 0
        %1316 = vmatpush1.bf16.msra.mxu0 0
        %1317 = vmatprep.subr.bf16.mxu0 0
        %1318 = vmatpush1.bf16.msra.mxu0 0
        %1319 = vmatprep.mubr.bf16.mxu0 0
        %1320 = vmatmul.mubr.bf16.gmra.mrb[0].mxu0 %v1285
        %v1321 = vpop.f32.mrb[0].mxu0
        %v1322 = vadd.f32 0.0, %v1321
        %v1323 = vpop.f32.mrb[0].mxu0
        %v1324 = vadd.f32 0.0, %v1323
        %v1325 = vpop.f32.mrb[0].mxu0
        %v1326 = vadd.f32 0.0, %v1325
        %v1327 = vpop.f32.mrb[0].mxu0
        %v1328 = vadd.f32 0.0, %v1327
        %1329 = vdwg.mxu0
        %1330 = vmatprep.subr.bf16.mxu0 %v1279
        %1331 = vmatpush1.bf16.msra.mxu0 %v1278
        %1332 = vmatprep.subr.bf16.mxu0 0
        %1333 = vmatpush1.bf16.msra.mxu0 0
        %1334 = vmatprep.subr.bf16.mxu0 0
        %1335 = vmatpush1.bf16.msra.mxu0 0
        %1336 = vmatprep.subr.bf16.mxu0 0
        %1337 = vmatpush1.bf16.msra.mxu0 0
        %1338 = vmatprep.subr.bf16.mxu0 0
        %1339 = vmatpush1.bf16.msra.mxu0 0
        %1340 = vmatprep.subr.bf16.mxu0 0
        %1341 = vmatpush1.bf16.msra.mxu0 0
        %1342 = vmatprep.subr.bf16.mxu0 0
        %1343 = vmatpush1.bf16.msra.mxu0 0
        %1344 = vmatprep.subr.bf16.mxu0 0
        %1345 = vmatpush1.bf16.msra.mxu0 0
        %1346 = vmatprep.subr.bf16.mxu0 0
        %1347 = vmatpush1.bf16.msra.mxu0 0
        %1348 = vmatprep.subr.bf16.mxu0 0
        %1349 = vmatpush1.bf16.msra.mxu0 0
        %1350 = vmatprep.subr.bf16.mxu0 0
        %1351 = vmatpush1.bf16.msra.mxu0 0
        %1352 = vmatprep.subr.bf16.mxu0 0
        %1353 = vmatpush1.bf16.msra.mxu0 0
        %1354 = vmatprep.subr.bf16.mxu0 0
        %1355 = vmatpush1.bf16.msra.mxu0 0
        %1356 = vmatprep.subr.bf16.mxu0 0
        %1357 = vmatpush1.bf16.msra.mxu0 0
        %1358 = vmatprep.subr.bf16.mxu0 0
        %1359 = vmatpush1.bf16.msra.mxu0 0
        %1360 = vmatprep.subr.bf16.mxu0 0
        %1361 = vmatpush1.bf16.msra.mxu0 0
        %1362 = vmatprep.mubr.bf16.mxu0 0
        %1363 = vmatmul.mubr.bf16.gmra.mrb[0].mxu0 %v1285
        %v1364 = vpop.f32.mrb[0].mxu0
        %v1365 = vadd.f32 0.0, %v1364
        %v1366 = vpop.f32.mrb[0].mxu0
        %v1367 = vadd.f32 0.0, %v1366
        %v1368 = vpop.f32.mrb[0].mxu0
        %v1369 = vadd.f32 0.0, %v1368
        %v1370 = vpop.f32.mrb[0].mxu0
        %v1371 = vadd.f32 0.0, %v1370
        %1372 = vdwg.mxu0
        %v1373 = vadd.f32 %v1249, %v1322
        %v1374 = vadd.f32 %v1250, %v1324
        %v1375 = vadd.f32 %v1251, %v1365
        %v1376 = vadd.f32 %v1252, %v1367
        %v1377 = vadd.f32 %v1253, %v1326
        %v1378 = vadd.f32 %v1254, %v1328
        %v1379 = vadd.f32 %v1255, %v1369
        %v1380 = vadd.f32 %v1256, %v1371
        %s1381 = scalar_lea.vmem %s0, 64
        %v1382 = vld [vmem:[%s1381] sm:$0xf]
        %v1383 = vld [vmem:[%s1381 + $0x4] sm:$0xf]
        %v1386 = vunpack.c.l.b16 %v1382
        %v1387 = vunpack.c.l.b16 %v1383
        %v1388 = vpack.c.b16 %v1387, %v1386
        %1389 = vrot.lane.b32.xlu0 %v416, 106
        %v1390 = vpop.permute.xlu0 %1389
        %1391 = vrot.lane.b32.xlu0 %v417, 106
        %v1392 = vpop.permute.xlu0 %1391
        %1393 = vrot.lane.b32.xlu0 %v418, 106
        %v1394 = vpop.permute.xlu0 %1393
        %1395 = vrot.lane.b32.xlu0 %v419, 106
        %v1396 = vpop.permute.xlu0 %1395
        %1397 = vrot.lane.b32.xlu0 %v423, 106
        %v1398 = vpop.permute.xlu0 %1397
        %vm1399 = vcmask 867328
        %v1400 = vsel %vm1399, %v1390, %v1392
        %v1401 = vsel %vm1399, %v1392, %v1394
        %v1402 = vsel %vm1399, %v1394, %v1396
        %v1403 = vsel %vm1399, %v1396, %v1398
        %v1409 = vsel %vm453, %v1388, 0
        %1411 = vmatprep.subr.bf16.mxu0 %v1401
        %1412 = vmatpush1.bf16.msra.mxu0 %v1400
        %1413 = vmatprep.subr.bf16.mxu0 0
        %1414 = vmatpush1.bf16.msra.mxu0 0
        %1415 = vmatprep.subr.bf16.mxu0 0
        %1416 = vmatpush1.bf16.msra.mxu0 0
        %1417 = vmatprep.subr.bf16.mxu0 0
        %1418 = vmatpush1.bf16.msra.mxu0 0
        %1419 = vmatprep.subr.bf16.mxu0 0
        %1420 = vmatpush1.bf16.msra.mxu0 0
        %1421 = vmatprep.subr.bf16.mxu0 0
        %1422 = vmatpush1.bf16.msra.mxu0 0
        %1423 = vmatprep.subr.bf16.mxu0 0
        %1424 = vmatpush1.bf16.msra.mxu0 0
        %1425 = vmatprep.subr.bf16.mxu0 0
        %1426 = vmatpush1.bf16.msra.mxu0 0
        %1427 = vmatprep.subr.bf16.mxu0 0
        %1428 = vmatpush1.bf16.msra.mxu0 0
        %1429 = vmatprep.subr.bf16.mxu0 0
        %1430 = vmatpush1.bf16.msra.mxu0 0
        %1431 = vmatprep.subr.bf16.mxu0 0
        %1432 = vmatpush1.bf16.msra.mxu0 0
        %1433 = vmatprep.subr.bf16.mxu0 0
        %1434 = vmatpush1.bf16.msra.mxu0 0
        %1435 = vmatprep.subr.bf16.mxu0 0
        %1436 = vmatpush1.bf16.msra.mxu0 0
        %1437 = vmatprep.subr.bf16.mxu0 0
        %1438 = vmatpush1.bf16.msra.mxu0 0
        %1439 = vmatprep.subr.bf16.mxu0 0
        %1440 = vmatpush1.bf16.msra.mxu0 0
        %1441 = vmatprep.subr.bf16.mxu0 0
        %1442 = vmatpush1.bf16.msra.mxu0 0
        %1443 = vmatprep.mubr.bf16.mxu0 0
        %1444 = vmatmul.mubr.bf16.gmra.mrb[0].mxu0 %v1409
        %v1445 = vpop.f32.mrb[0].mxu0
        %v1446 = vadd.f32 0.0, %v1445
        %v1447 = vpop.f32.mrb[0].mxu0
        %v1448 = vadd.f32 0.0, %v1447
        %v1449 = vpop.f32.mrb[0].mxu0
        %v1450 = vadd.f32 0.0, %v1449
        %v1451 = vpop.f32.mrb[0].mxu0
        %v1452 = vadd.f32 0.0, %v1451
        %1453 = vdwg.mxu0
        %1454 = vmatprep.subr.bf16.mxu0 %v1403
        %1455 = vmatpush1.bf16.msra.mxu0 %v1402
        %1456 = vmatprep.subr.bf16.mxu0 0
        %1457 = vmatpush1.bf16.msra.mxu0 0
        %1458 = vmatprep.subr.bf16.mxu0 0
        %1459 = vmatpush1.bf16.msra.mxu0 0
        %1460 = vmatprep.subr.bf16.mxu0 0
        %1461 = vmatpush1.bf16.msra.mxu0 0
        %1462 = vmatprep.subr.bf16.mxu0 0
        %1463 = vmatpush1.bf16.msra.mxu0 0
        %1464 = vmatprep.subr.bf16.mxu0 0
        %1465 = vmatpush1.bf16.msra.mxu0 0
        %1466 = vmatprep.subr.bf16.mxu0 0
        %1467 = vmatpush1.bf16.msra.mxu0 0
        %1468 = vmatprep.subr.bf16.mxu0 0
        %1469 = vmatpush1.bf16.msra.mxu0 0
        %1470 = vmatprep.subr.bf16.mxu0 0
        %1471 = vmatpush1.bf16.msra.mxu0 0
        %1472 = vmatprep.subr.bf16.mxu0 0
        %1473 = vmatpush1.bf16.msra.mxu0 0
        %1474 = vmatprep.subr.bf16.mxu0 0
        %1475 = vmatpush1.bf16.msra.mxu0 0
        %1476 = vmatprep.subr.bf16.mxu0 0
        %1477 = vmatpush1.bf16.msra.mxu0 0
        %1478 = vmatprep.subr.bf16.mxu0 0
        %1479 = vmatpush1.bf16.msra.mxu0 0
        %1480 = vmatprep.subr.bf16.mxu0 0
        %1481 = vmatpush1.bf16.msra.mxu0 0
        %1482 = vmatprep.subr.bf16.mxu0 0
        %1483 = vmatpush1.bf16.msra.mxu0 0
        %1484 = vmatprep.subr.bf16.mxu0 0
        %1485 = vmatpush1.bf16.msra.mxu0 0
        %1486 = vmatprep.mubr.bf16.mxu0 0
        %1487 = vmatmul.mubr.bf16.gmra.mrb[0].mxu0 %v1409
        %v1488 = vpop.f32.mrb[0].mxu0
        %v1489 = vadd.f32 0.0, %v1488
        %v1490 = vpop.f32.mrb[0].mxu0
        %v1491 = vadd.f32 0.0, %v1490
        %v1492 = vpop.f32.mrb[0].mxu0
        %v1493 = vadd.f32 0.0, %v1492
        %v1494 = vpop.f32.mrb[0].mxu0
        %v1495 = vadd.f32 0.0, %v1494
        %1496 = vdwg.mxu0
        %v1497 = vadd.f32 %v1373, %v1446
        %v1498 = vadd.f32 %v1374, %v1448
        %v1499 = vadd.f32 %v1375, %v1489
        %v1500 = vadd.f32 %v1376, %v1491
        %v1501 = vadd.f32 %v1377, %v1450
        %v1502 = vadd.f32 %v1378, %v1452
        %v1503 = vadd.f32 %v1379, %v1493
        %v1504 = vadd.f32 %v1380, %v1495
        %s1505 = scalar_lea.vmem %s0, 72
        %v1506 = vld [vmem:[%s1505] sm:$0xf]
        %v1507 = vld [vmem:[%s1505 + $0x4] sm:$0xf]
        %v1510 = vunpack.c.l.b16 %v1506
        %v1511 = vunpack.c.l.b16 %v1507
        %v1512 = vpack.c.b16 %v1511, %v1510
        %1513 = vrot.lane.b32.xlu0 %v416, 28
        %v1514 = vpop.permute.xlu0 %1513
        %1515 = vrot.lane.b32.xlu0 %v417, 28
        %v1516 = vpop.permute.xlu0 %1515
        %1517 = vrot.lane.b32.xlu0 %v418, 28
        %v1518 = vpop.permute.xlu0 %1517
        %1519 = vrot.lane.b32.xlu0 %v419, 28
        %v1520 = vpop.permute.xlu0 %1519
        %1521 = vrot.lane.b32.xlu0 %v423, 28
        %v1522 = vpop.permute.xlu0 %1521
        %vm1523 = vcmask 228352
        %v1524 = vsel %vm1523, %v1514, %v1516
        %v1525 = vsel %vm1523, %v1516, %v1518
        %v1526 = vsel %vm1523, %v1518, %v1520
        %v1527 = vsel %vm1523, %v1520, %v1522
        %v1533 = vsel %vm453, %v1512, 0
        %1535 = vmatprep.subr.bf16.mxu0 %v1525
        %1536 = vmatpush1.bf16.msra.mxu0 %v1524
        %1537 = vmatprep.subr.bf16.mxu0 0
        %1538 = vmatpush1.bf16.msra.mxu0 0
        %1539 = vmatprep.subr.bf16.mxu0 0
        %1540 = vmatpush1.bf16.msra.mxu0 0
        %1541 = vmatprep.subr.bf16.mxu0 0
        %1542 = vmatpush1.bf16.msra.mxu0 0
        %1543 = vmatprep.subr.bf16.mxu0 0
        %1544 = vmatpush1.bf16.msra.mxu0 0
        %1545 = vmatprep.subr.bf16.mxu0 0
        %1546 = vmatpush1.bf16.msra.mxu0 0
        %1547 = vmatprep.subr.bf16.mxu0 0
        %1548 = vmatpush1.bf16.msra.mxu0 0
        %1549 = vmatprep.subr.bf16.mxu0 0
        %1550 = vmatpush1.bf16.msra.mxu0 0
        %1551 = vmatprep.subr.bf16.mxu0 0
        %1552 = vmatpush1.bf16.msra.mxu0 0
        %1553 = vmatprep.subr.bf16.mxu0 0
        %1554 = vmatpush1.bf16.msra.mxu0 0
        %1555 = vmatprep.subr.bf16.mxu0 0
        %1556 = vmatpush1.bf16.msra.mxu0 0
        %1557 = vmatprep.subr.bf16.mxu0 0
        %1558 = vmatpush1.bf16.msra.mxu0 0
        %1559 = vmatprep.subr.bf16.mxu0 0
        %1560 = vmatpush1.bf16.msra.mxu0 0
        %1561 = vmatprep.subr.bf16.mxu0 0
        %1562 = vmatpush1.bf16.msra.mxu0 0
        %1563 = vmatprep.subr.bf16.mxu0 0
        %1564 = vmatpush1.bf16.msra.mxu0 0
        %1565 = vmatprep.subr.bf16.mxu0 0
        %1566 = vmatpush1.bf16.msra.mxu0 0
        %1567 = vmatprep.mubr.bf16.mxu0 0
        %1568 = vmatmul.mubr.bf16.gmra.mrb[0].mxu0 %v1533
        %v1569 = vpop.f32.mrb[0].mxu0
        %v1570 = vadd.f32 0.0, %v1569
        %v1571 = vpop.f32.mrb[0].mxu0
        %v1572 = vadd.f32 0.0, %v1571
        %v1573 = vpop.f32.mrb[0].mxu0
        %v1574 = vadd.f32 0.0, %v1573
        %v1575 = vpop.f32.mrb[0].mxu0
        %v1576 = vadd.f32 0.0, %v1575
        %1577 = vdwg.mxu0
        %1578 = vmatprep.subr.bf16.mxu0 %v1527
        %1579 = vmatpush1.bf16.msra.mxu0 %v1526
        %1580 = vmatprep.subr.bf16.mxu0 0
        %1581 = vmatpush1.bf16.msra.mxu0 0
        %1582 = vmatprep.subr.bf16.mxu0 0
        %1583 = vmatpush1.bf16.msra.mxu0 0
        %1584 = vmatprep.subr.bf16.mxu0 0
        %1585 = vmatpush1.bf16.msra.mxu0 0
        %1586 = vmatprep.subr.bf16.mxu0 0
        %1587 = vmatpush1.bf16.msra.mxu0 0
        %1588 = vmatprep.subr.bf16.mxu0 0
        %1589 = vmatpush1.bf16.msra.mxu0 0
        %1590 = vmatprep.subr.bf16.mxu0 0
        %1591 = vmatpush1.bf16.msra.mxu0 0
        %1592 = vmatprep.subr.bf16.mxu0 0
        %1593 = vmatpush1.bf16.msra.mxu0 0
        %1594 = vmatprep.subr.bf16.mxu0 0
        %1595 = vmatpush1.bf16.msra.mxu0 0
        %1596 = vmatprep.subr.bf16.mxu0 0
        %1597 = vmatpush1.bf16.msra.mxu0 0
        %1598 = vmatprep.subr.bf16.mxu0 0
        %1599 = vmatpush1.bf16.msra.mxu0 0
        %1600 = vmatprep.subr.bf16.mxu0 0
        %1601 = vmatpush1.bf16.msra.mxu0 0
        %1602 = vmatprep.subr.bf16.mxu0 0
        %1603 = vmatpush1.bf16.msra.mxu0 0
        %1604 = vmatprep.subr.bf16.mxu0 0
        %1605 = vmatpush1.bf16.msra.mxu0 0
        %1606 = vmatprep.subr.bf16.mxu0 0
        %1607 = vmatpush1.bf16.msra.mxu0 0
        %1608 = vmatprep.subr.bf16.mxu0 0
        %1609 = vmatpush1.bf16.msra.mxu0 0
        %1610 = vmatprep.mubr.bf16.mxu0 0
        %1611 = vmatmul.mubr.bf16.gmra.mrb[0].mxu0 %v1533
        %v1612 = vpop.f32.mrb[0].mxu0
        %v1613 = vadd.f32 0.0, %v1612
        %v1614 = vpop.f32.mrb[0].mxu0
        %v1615 = vadd.f32 0.0, %v1614
        %v1616 = vpop.f32.mrb[0].mxu0
        %v1617 = vadd.f32 0.0, %v1616
        %v1618 = vpop.f32.mrb[0].mxu0
        %v1619 = vadd.f32 0.0, %v1618
        %1620 = vdwg.mxu0
        %v1621 = vadd.f32 %v1497, %v1570
        %v1622 = vadd.f32 %v1498, %v1572
        %v1623 = vadd.f32 %v1499, %v1613
        %v1624 = vadd.f32 %v1500, %v1615
        %v1625 = vadd.f32 %v1501, %v1574
        %v1626 = vadd.f32 %v1502, %v1576
        %v1627 = vadd.f32 %v1503, %v1617
        %v1628 = vadd.f32 %v1504, %v1619
        %s1629 = scalar_lea.vmem %s0, 80
        %v1630 = vld [vmem:[%s1629] sm:$0xf]
        %v1631 = vld [vmem:[%s1629 + $0x4] sm:$0xf]
        %v1634 = vunpack.c.l.b16 %v1630
        %v1635 = vunpack.c.l.b16 %v1631
        %v1636 = vpack.c.b16 %v1635, %v1634
        %1637 = vrot.lane.b32.xlu0 %v416, 27
        %v1638 = vpop.permute.xlu0 %1637
        %1639 = vrot.lane.b32.xlu0 %v417, 27
        %v1640 = vpop.permute.xlu0 %1639
        %1641 = vrot.lane.b32.xlu0 %v418, 27
        %v1642 = vpop.permute.xlu0 %1641
        %1643 = vrot.lane.b32.xlu0 %v419, 27
        %v1644 = vpop.permute.xlu0 %1643
        %1645 = vrot.lane.b32.xlu0 %v423, 27
        %v1646 = vpop.permute.xlu0 %1645
        %vm1647 = vcmask 220160
        %v1648 = vsel %vm1647, %v1638, %v1640
        %v1649 = vsel %vm1647, %v1640, %v1642
        %v1650 = vsel %vm1647, %v1642, %v1644
        %v1651 = vsel %vm1647, %v1644, %v1646
        %v1657 = vsel %vm453, %v1636, 0
        %1659 = vmatprep.subr.bf16.mxu0 %v1649
        %1660 = vmatpush1.bf16.msra.mxu0 %v1648
        %1661 = vmatprep.subr.bf16.mxu0 0
        %1662 = vmatpush1.bf16.msra.mxu0 0
        %1663 = vmatprep.subr.bf16.mxu0 0
        %1664 = vmatpush1.bf16.msra.mxu0 0
        %1665 = vmatprep.subr.bf16.mxu0 0
        %1666 = vmatpush1.bf16.msra.mxu0 0
        %1667 = vmatprep.subr.bf16.mxu0 0
        %1668 = vmatpush1.bf16.msra.mxu0 0
        %1669 = vmatprep.subr.bf16.mxu0 0
        %1670 = vmatpush1.bf16.msra.mxu0 0
        %1671 = vmatprep.subr.bf16.mxu0 0
        %1672 = vmatpush1.bf16.msra.mxu0 0
        %1673 = vmatprep.subr.bf16.mxu0 0
        %1674 = vmatpush1.bf16.msra.mxu0 0
        %1675 = vmatprep.subr.bf16.mxu0 0
        %1676 = vmatpush1.bf16.msra.mxu0 0
        %1677 = vmatprep.subr.bf16.mxu0 0
        %1678 = vmatpush1.bf16.msra.mxu0 0
        %1679 = vmatprep.subr.bf16.mxu0 0
        %1680 = vmatpush1.bf16.msra.mxu0 0
        %1681 = vmatprep.subr.bf16.mxu0 0
        %1682 = vmatpush1.bf16.msra.mxu0 0
        %1683 = vmatprep.subr.bf16.mxu0 0
        %1684 = vmatpush1.bf16.msra.mxu0 0
        %1685 = vmatprep.subr.bf16.mxu0 0
        %1686 = vmatpush1.bf16.msra.mxu0 0
        %1687 = vmatprep.subr.bf16.mxu0 0
        %1688 = vmatpush1.bf16.msra.mxu0 0
        %1689 = vmatprep.subr.bf16.mxu0 0
        %1690 = vmatpush1.bf16.msra.mxu0 0
        %1691 = vmatprep.mubr.bf16.mxu0 0
        %1692 = vmatmul.mubr.bf16.gmra.mrb[0].mxu0 %v1657
        %v1693 = vpop.f32.mrb[0].mxu0
        %v1694 = vadd.f32 0.0, %v1693
        %v1695 = vpop.f32.mrb[0].mxu0
        %v1696 = vadd.f32 0.0, %v1695
        %v1697 = vpop.f32.mrb[0].mxu0
        %v1698 = vadd.f32 0.0, %v1697
        %v1699 = vpop.f32.mrb[0].mxu0
        %v1700 = vadd.f32 0.0, %v1699
        %1701 = vdwg.mxu0
        %1702 = vmatprep.subr.bf16.mxu0 %v1651
        %1703 = vmatpush1.bf16.msra.mxu0 %v1650
        %1704 = vmatprep.subr.bf16.mxu0 0
        %1705 = vmatpush1.bf16.msra.mxu0 0
        %1706 = vmatprep.subr.bf16.mxu0 0
        %1707 = vmatpush1.bf16.msra.mxu0 0
        %1708 = vmatprep.subr.bf16.mxu0 0
        %1709 = vmatpush1.bf16.msra.mxu0 0
        %1710 = vmatprep.subr.bf16.mxu0 0
        %1711 = vmatpush1.bf16.msra.mxu0 0
        %1712 = vmatprep.subr.bf16.mxu0 0
        %1713 = vmatpush1.bf16.msra.mxu0 0
        %1714 = vmatprep.subr.bf16.mxu0 0
        %1715 = vmatpush1.bf16.msra.mxu0 0
        %1716 = vmatprep.subr.bf16.mxu0 0
        %1717 = vmatpush1.bf16.msra.mxu0 0
        %1718 = vmatprep.subr.bf16.mxu0 0
        %1719 = vmatpush1.bf16.msra.mxu0 0
        %1720 = vmatprep.subr.bf16.mxu0 0
        %1721 = vmatpush1.bf16.msra.mxu0 0
        %1722 = vmatprep.subr.bf16.mxu0 0
        %1723 = vmatpush1.bf16.msra.mxu0 0
        %1724 = vmatprep.subr.bf16.mxu0 0
        %1725 = vmatpush1.bf16.msra.mxu0 0
        %1726 = vmatprep.subr.bf16.mxu0 0
        %1727 = vmatpush1.bf16.msra.mxu0 0
        %1728 = vmatprep.subr.bf16.mxu0 0
        %1729 = vmatpush1.bf16.msra.mxu0 0
        %1730 = vmatprep.subr.bf16.mxu0 0
        %1731 = vmatpush1.bf16.msra.mxu0 0
        %1732 = vmatprep.subr.bf16.mxu0 0
        %1733 = vmatpush1.bf16.msra.mxu0 0
        %1734 = vmatprep.mubr.bf16.mxu0 0
        %1735 = vmatmul.mubr.bf16.gmra.mrb[0].mxu0 %v1657
        %v1736 = vpop.f32.mrb[0].mxu0
        %v1737 = vadd.f32 0.0, %v1736
        %v1738 = vpop.f32.mrb[0].mxu0
        %v1739 = vadd.f32 0.0, %v1738
        %v1740 = vpop.f32.mrb[0].mxu0
        %v1741 = vadd.f32 0.0, %v1740
        %v1742 = vpop.f32.mrb[0].mxu0
        %v1743 = vadd.f32 0.0, %v1742
        %1744 = vdwg.mxu0
        %v1745 = vadd.f32 %v1621, %v1694
        %v1746 = vadd.f32 %v1622, %v1696
        %v1747 = vadd.f32 %v1623, %v1737
        %v1748 = vadd.f32 %v1624, %v1739
        %v1749 = vadd.f32 %v1625, %v1698
        %v1750 = vadd.f32 %v1626, %v1700
        %v1751 = vadd.f32 %v1627, %v1741
        %v1752 = vadd.f32 %v1628, %v1743
        %s1753 = scalar_lea.vmem %s0, 88
        %v1754 = vld [vmem:[%s1753] sm:$0xf]
        %v1755 = vld [vmem:[%s1753 + $0x4] sm:$0xf]
        %v1758 = vunpack.c.l.b16 %v1754
        %v1759 = vunpack.c.l.b16 %v1755
        %v1760 = vpack.c.b16 %v1759, %v1758
        %1761 = vrot.lane.b32.xlu0 %v416, 26
        %v1762 = vpop.permute.xlu0 %1761
        %1763 = vrot.lane.b32.xlu0 %v417, 26
        %v1764 = vpop.permute.xlu0 %1763
        %1765 = vrot.lane.b32.xlu0 %v418, 26
        %v1766 = vpop.permute.xlu0 %1765
        %1767 = vrot.lane.b32.xlu0 %v419, 26
        %v1768 = vpop.permute.xlu0 %1767
        %1769 = vrot.lane.b32.xlu0 %v423, 26
        %v1770 = vpop.permute.xlu0 %1769
        %vm1771 = vcmask 211968
        %v1772 = vsel %vm1771, %v1762, %v1764
        %v1773 = vsel %vm1771, %v1764, %v1766
        %v1774 = vsel %vm1771, %v1766, %v1768
        %v1775 = vsel %vm1771, %v1768, %v1770
        %v1781 = vsel %vm453, %v1760, 0
        %1783 = vmatprep.subr.bf16.mxu0 %v1773
        %1784 = vmatpush1.bf16.msra.mxu0 %v1772
        %1785 = vmatprep.subr.bf16.mxu0 0
        %1786 = vmatpush1.bf16.msra.mxu0 0
        %1787 = vmatprep.subr.bf16.mxu0 0
        %1788 = vmatpush1.bf16.msra.mxu0 0
        %1789 = vmatprep.subr.bf16.mxu0 0
        %1790 = vmatpush1.bf16.msra.mxu0 0
        %1791 = vmatprep.subr.bf16.mxu0 0
        %1792 = vmatpush1.bf16.msra.mxu0 0
        %1793 = vmatprep.subr.bf16.mxu0 0
        %1794 = vmatpush1.bf16.msra.mxu0 0
        %1795 = vmatprep.subr.bf16.mxu0 0
        %1796 = vmatpush1.bf16.msra.mxu0 0
        %1797 = vmatprep.subr.bf16.mxu0 0
        %1798 = vmatpush1.bf16.msra.mxu0 0
        %1799 = vmatprep.subr.bf16.mxu0 0
        %1800 = vmatpush1.bf16.msra.mxu0 0
        %1801 = vmatprep.subr.bf16.mxu0 0
        %1802 = vmatpush1.bf16.msra.mxu0 0
        %1803 = vmatprep.subr.bf16.mxu0 0
        %1804 = vmatpush1.bf16.msra.mxu0 0
        %1805 = vmatprep.subr.bf16.mxu0 0
        %1806 = vmatpush1.bf16.msra.mxu0 0
        %1807 = vmatprep.subr.bf16.mxu0 0
        %1808 = vmatpush1.bf16.msra.mxu0 0
        %1809 = vmatprep.subr.bf16.mxu0 0
        %1810 = vmatpush1.bf16.msra.mxu0 0
        %1811 = vmatprep.subr.bf16.mxu0 0
        %1812 = vmatpush1.bf16.msra.mxu0 0
        %1813 = vmatprep.subr.bf16.mxu0 0
        %1814 = vmatpush1.bf16.msra.mxu0 0
        %1815 = vmatprep.mubr.bf16.mxu0 0
        %1816 = vmatmul.mubr.bf16.gmra.mrb[0].mxu0 %v1781
        %v1817 = vpop.f32.mrb[0].mxu0
        %v1818 = vadd.f32 0.0, %v1817
        %v1819 = vpop.f32.mrb[0].mxu0
        %v1820 = vadd.f32 0.0, %v1819
        %v1821 = vpop.f32.mrb[0].mxu0
        %v1822 = vadd.f32 0.0, %v1821
        %v1823 = vpop.f32.mrb[0].mxu0
        %v1824 = vadd.f32 0.0, %v1823
        %1825 = vdwg.mxu0
        %1826 = vmatprep.subr.bf16.mxu0 %v1775
        %1827 = vmatpush1.bf16.msra.mxu0 %v1774
        %1828 = vmatprep.subr.bf16.mxu0 0
        %1829 = vmatpush1.bf16.msra.mxu0 0
        %1830 = vmatprep.subr.bf16.mxu0 0
        %1831 = vmatpush1.bf16.msra.mxu0 0
        %1832 = vmatprep.subr.bf16.mxu0 0
        %1833 = vmatpush1.bf16.msra.mxu0 0
        %1834 = vmatprep.subr.bf16.mxu0 0
        %1835 = vmatpush1.bf16.msra.mxu0 0
        %1836 = vmatprep.subr.bf16.mxu0 0
        %1837 = vmatpush1.bf16.msra.mxu0 0
        %1838 = vmatprep.subr.bf16.mxu0 0
        %1839 = vmatpush1.bf16.msra.mxu0 0
        %1840 = vmatprep.subr.bf16.mxu0 0
        %1841 = vmatpush1.bf16.msra.mxu0 0
        %1842 = vmatprep.subr.bf16.mxu0 0
        %1843 = vmatpush1.bf16.msra.mxu0 0
        %1844 = vmatprep.subr.bf16.mxu0 0
        %1845 = vmatpush1.bf16.msra.mxu0 0
        %1846 = vmatprep.subr.bf16.mxu0 0
        %1847 = vmatpush1.bf16.msra.mxu0 0
        %1848 = vmatprep.subr.bf16.mxu0 0
        %1849 = vmatpush1.bf16.msra.mxu0 0
        %1850 = vmatprep.subr.bf16.mxu0 0
        %1851 = vmatpush1.bf16.msra.mxu0 0
        %1852 = vmatprep.subr.bf16.mxu0 0
        %1853 = vmatpush1.bf16.msra.mxu0 0
        %1854 = vmatprep.subr.bf16.mxu0 0
        %1855 = vmatpush1.bf16.msra.mxu0 0
        %1856 = vmatprep.subr.bf16.mxu0 0
        %1857 = vmatpush1.bf16.msra.mxu0 0
        %1858 = vmatprep.mubr.bf16.mxu0 0
        %1859 = vmatmul.mubr.bf16.gmra.mrb[0].mxu0 %v1781
        %v1860 = vpop.f32.mrb[0].mxu0
        %v1861 = vadd.f32 0.0, %v1860
        %v1862 = vpop.f32.mrb[0].mxu0
        %v1863 = vadd.f32 0.0, %v1862
        %v1864 = vpop.f32.mrb[0].mxu0
        %v1865 = vadd.f32 0.0, %v1864
        %v1866 = vpop.f32.mrb[0].mxu0
        %v1867 = vadd.f32 0.0, %v1866
        %1868 = vdwg.mxu0
        %v1869 = vadd.f32 %v1745, %v1818
        %v1870 = vadd.f32 %v1746, %v1820
        %v1871 = vadd.f32 %v1747, %v1861
        %v1872 = vadd.f32 %v1748, %v1863
        %v1873 = vadd.f32 %v1749, %v1822
        %v1874 = vadd.f32 %v1750, %v1824
        %v1875 = vadd.f32 %v1751, %v1865
        %v1876 = vadd.f32 %v1752, %v1867
        %s1877 = scalar_lea.vmem %s0, 96
        %v1878 = vld [vmem:[%s1877] sm:$0xf]
        %v1879 = vld [vmem:[%s1877 + $0x4] sm:$0xf]
        %v1882 = vunpack.c.l.b16 %v1878
        %v1883 = vunpack.c.l.b16 %v1879
        %v1884 = vpack.c.b16 %v1883, %v1882
        %1885 = vrot.lane.b32.xlu0 %v416, 18
        %v1886 = vpop.permute.xlu0 %1885
        %1887 = vrot.lane.b32.xlu0 %v417, 18
        %v1888 = vpop.permute.xlu0 %1887
        %1889 = vrot.lane.b32.xlu0 %v418, 18
        %v1890 = vpop.permute.xlu0 %1889
        %1891 = vrot.lane.b32.xlu0 %v419, 18
        %v1892 = vpop.permute.xlu0 %1891
        %1893 = vrot.lane.b32.xlu0 %v423, 18
        %v1894 = vpop.permute.xlu0 %1893
        %vm1895 = vcmask 146432
        %v1896 = vsel %vm1895, %v1886, %v1888
        %v1897 = vsel %vm1895, %v1888, %v1890
        %v1898 = vsel %vm1895, %v1890, %v1892
        %v1899 = vsel %vm1895, %v1892, %v1894
        %v1905 = vsel %vm453, %v1884, 0
        %1907 = vmatprep.subr.bf16.mxu0 %v1897
        %1908 = vmatpush1.bf16.msra.mxu0 %v1896
        %1909 = vmatprep.subr.bf16.mxu0 0
        %1910 = vmatpush1.bf16.msra.mxu0 0
        %1911 = vmatprep.subr.bf16.mxu0 0
        %1912 = vmatpush1.bf16.msra.mxu0 0
        %1913 = vmatprep.subr.bf16.mxu0 0
        %1914 = vmatpush1.bf16.msra.mxu0 0
        %1915 = vmatprep.subr.bf16.mxu0 0
        %1916 = vmatpush1.bf16.msra.mxu0 0
        %1917 = vmatprep.subr.bf16.mxu0 0
        %1918 = vmatpush1.bf16.msra.mxu0 0
        %1919 = vmatprep.subr.bf16.mxu0 0
        %1920 = vmatpush1.bf16.msra.mxu0 0
        %1921 = vmatprep.subr.bf16.mxu0 0
        %1922 = vmatpush1.bf16.msra.mxu0 0
        %1923 = vmatprep.subr.bf16.mxu0 0
        %1924 = vmatpush1.bf16.msra.mxu0 0
        %1925 = vmatprep.subr.bf16.mxu0 0
        %1926 = vmatpush1.bf16.msra.mxu0 0
        %1927 = vmatprep.subr.bf16.mxu0 0
        %1928 = vmatpush1.bf16.msra.mxu0 0
        %1929 = vmatprep.subr.bf16.mxu0 0
        %1930 = vmatpush1.bf16.msra.mxu0 0
        %1931 = vmatprep.subr.bf16.mxu0 0
        %1932 = vmatpush1.bf16.msra.mxu0 0
        %1933 = vmatprep.subr.bf16.mxu0 0
        %1934 = vmatpush1.bf16.msra.mxu0 0
        %1935 = vmatprep.subr.bf16.mxu0 0
        %1936 = vmatpush1.bf16.msra.mxu0 0
        %1937 = vmatprep.subr.bf16.mxu0 0
        %1938 = vmatpush1.bf16.msra.mxu0 0
        %1939 = vmatprep.mubr.bf16.mxu0 0
        %1940 = vmatmul.mubr.bf16.gmra.mrb[0].mxu0 %v1905
        %v1941 = vpop.f32.mrb[0].mxu0
        %v1942 = vadd.f32 0.0, %v1941
        %v1943 = vpop.f32.mrb[0].mxu0
        %v1944 = vadd.f32 0.0, %v1943
        %v1945 = vpop.f32.mrb[0].mxu0
        %v1946 = vadd.f32 0.0, %v1945
        %v1947 = vpop.f32.mrb[0].mxu0
        %v1948 = vadd.f32 0.0, %v1947
        %1949 = vdwg.mxu0
        %1950 = vmatprep.subr.bf16.mxu0 %v1899
        %1951 = vmatpush1.bf16.msra.mxu0 %v1898
        %1952 = vmatprep.subr.bf16.mxu0 0
        %1953 = vmatpush1.bf16.msra.mxu0 0
        %1954 = vmatprep.subr.bf16.mxu0 0
        %1955 = vmatpush1.bf16.msra.mxu0 0
        %1956 = vmatprep.subr.bf16.mxu0 0
        %1957 = vmatpush1.bf16.msra.mxu0 0
        %1958 = vmatprep.subr.bf16.mxu0 0
        %1959 = vmatpush1.bf16.msra.mxu0 0
        %1960 = vmatprep.subr.bf16.mxu0 0
        %1961 = vmatpush1.bf16.msra.mxu0 0
        %1962 = vmatprep.subr.bf16.mxu0 0
        %1963 = vmatpush1.bf16.msra.mxu0 0
        %1964 = vmatprep.subr.bf16.mxu0 0
        %1965 = vmatpush1.bf16.msra.mxu0 0
        %1966 = vmatprep.subr.bf16.mxu0 0
        %1967 = vmatpush1.bf16.msra.mxu0 0
        %1968 = vmatprep.subr.bf16.mxu0 0
        %1969 = vmatpush1.bf16.msra.mxu0 0
        %1970 = vmatprep.subr.bf16.mxu0 0
        %1971 = vmatpush1.bf16.msra.mxu0 0
        %1972 = vmatprep.subr.bf16.mxu0 0
        %1973 = vmatpush1.bf16.msra.mxu0 0
        %1974 = vmatprep.subr.bf16.mxu0 0
        %1975 = vmatpush1.bf16.msra.mxu0 0
        %1976 = vmatprep.subr.bf16.mxu0 0
        %1977 = vmatpush1.bf16.msra.mxu0 0
        %1978 = vmatprep.subr.bf16.mxu0 0
        %1979 = vmatpush1.bf16.msra.mxu0 0
        %1980 = vmatprep.subr.bf16.mxu0 0
        %1981 = vmatpush1.bf16.msra.mxu0 0
        %1982 = vmatprep.mubr.bf16.mxu0 0
        %1983 = vmatmul.mubr.bf16.gmra.mrb[0].mxu0 %v1905
        %v1984 = vpop.f32.mrb[0].mxu0
        %v1985 = vadd.f32 0.0, %v1984
        %v1986 = vpop.f32.mrb[0].mxu0
        %v1987 = vadd.f32 0.0, %v1986
        %v1988 = vpop.f32.mrb[0].mxu0
        %v1989 = vadd.f32 0.0, %v1988
        %v1990 = vpop.f32.mrb[0].mxu0
        %v1991 = vadd.f32 0.0, %v1990
        %1992 = vdwg.mxu0
        %v1993 = vadd.f32 %v1869, %v1942
        %v1994 = vadd.f32 %v1870, %v1944
        %v1995 = vadd.f32 %v1871, %v1985
        %v1996 = vadd.f32 %v1872, %v1987
        %v1997 = vadd.f32 %v1873, %v1946
        %v1998 = vadd.f32 %v1874, %v1948
        %v1999 = vadd.f32 %v1875, %v1989
        %v2000 = vadd.f32 %v1876, %v1991
        %s2001 = scalar_lea.vmem %s0, 104
        %v2002 = vld [vmem:[%s2001] sm:$0xf]
        %v2003 = vld [vmem:[%s2001 + $0x4] sm:$0xf]
        %v2006 = vunpack.c.l.b16 %v2002
        %v2007 = vunpack.c.l.b16 %v2003
        %v2008 = vpack.c.b16 %v2007, %v2006
        %2009 = vrot.lane.b32.xlu0 %v416, 17
        %v2010 = vpop.permute.xlu0 %2009
        %2011 = vrot.lane.b32.xlu0 %v417, 17
        %v2012 = vpop.permute.xlu0 %2011
        %2013 = vrot.lane.b32.xlu0 %v418, 17
        %v2014 = vpop.permute.xlu0 %2013
        %2015 = vrot.lane.b32.xlu0 %v419, 17
        %v2016 = vpop.permute.xlu0 %2015
        %2017 = vrot.lane.b32.xlu0 %v423, 17
        %v2018 = vpop.permute.xlu0 %2017
        %vm2019 = vcmask 138240
        %v2020 = vsel %vm2019, %v2010, %v2012
        %v2021 = vsel %vm2019, %v2012, %v2014
        %v2022 = vsel %vm2019, %v2014, %v2016
        %v2023 = vsel %vm2019, %v2016, %v2018
        %v2029 = vsel %vm453, %v2008, 0
        %2031 = vmatprep.subr.bf16.mxu0 %v2021
        %2032 = vmatpush1.bf16.msra.mxu0 %v2020
        %2033 = vmatprep.subr.bf16.mxu0 0
        %2034 = vmatpush1.bf16.msra.mxu0 0
        %2035 = vmatprep.subr.bf16.mxu0 0
        %2036 = vmatpush1.bf16.msra.mxu0 0
        %2037 = vmatprep.subr.bf16.mxu0 0
        %2038 = vmatpush1.bf16.msra.mxu0 0
        %2039 = vmatprep.subr.bf16.mxu0 0
        %2040 = vmatpush1.bf16.msra.mxu0 0
        %2041 = vmatprep.subr.bf16.mxu0 0
        %2042 = vmatpush1.bf16.msra.mxu0 0
        %2043 = vmatprep.subr.bf16.mxu0 0
        %2044 = vmatpush1.bf16.msra.mxu0 0
        %2045 = vmatprep.subr.bf16.mxu0 0
        %2046 = vmatpush1.bf16.msra.mxu0 0
        %2047 = vmatprep.subr.bf16.mxu0 0
        %2048 = vmatpush1.bf16.msra.mxu0 0
        %2049 = vmatprep.subr.bf16.mxu0 0
        %2050 = vmatpush1.bf16.msra.mxu0 0
        %2051 = vmatprep.subr.bf16.mxu0 0
        %2052 = vmatpush1.bf16.msra.mxu0 0
        %2053 = vmatprep.subr.bf16.mxu0 0
        %2054 = vmatpush1.bf16.msra.mxu0 0
        %2055 = vmatprep.subr.bf16.mxu0 0
        %2056 = vmatpush1.bf16.msra.mxu0 0
        %2057 = vmatprep.subr.bf16.mxu0 0
        %2058 = vmatpush1.bf16.msra.mxu0 0
        %2059 = vmatprep.subr.bf16.mxu0 0
        %2060 = vmatpush1.bf16.msra.mxu0 0
        %2061 = vmatprep.subr.bf16.mxu0 0
        %2062 = vmatpush1.bf16.msra.mxu0 0
        %2063 = vmatprep.mubr.bf16.mxu0 0
        %2064 = vmatmul.mubr.bf16.gmra.mrb[0].mxu0 %v2029
        %v2065 = vpop.f32.mrb[0].mxu0
        %v2066 = vadd.f32 0.0, %v2065
        %v2067 = vpop.f32.mrb[0].mxu0
        %v2068 = vadd.f32 0.0, %v2067
        %v2069 = vpop.f32.mrb[0].mxu0
        %v2070 = vadd.f32 0.0, %v2069
        %v2071 = vpop.f32.mrb[0].mxu0
        %v2072 = vadd.f32 0.0, %v2071
        %2073 = vdwg.mxu0
        %2074 = vmatprep.subr.bf16.mxu0 %v2023
        %2075 = vmatpush1.bf16.msra.mxu0 %v2022
        %2076 = vmatprep.subr.bf16.mxu0 0
        %2077 = vmatpush1.bf16.msra.mxu0 0
        %2078 = vmatprep.subr.bf16.mxu0 0
        %2079 = vmatpush1.bf16.msra.mxu0 0
        %2080 = vmatprep.subr.bf16.mxu0 0
        %2081 = vmatpush1.bf16.msra.mxu0 0
        %2082 = vmatprep.subr.bf16.mxu0 0
        %2083 = vmatpush1.bf16.msra.mxu0 0
        %2084 = vmatprep.subr.bf16.mxu0 0
        %2085 = vmatpush1.bf16.msra.mxu0 0
        %2086 = vmatprep.subr.bf16.mxu0 0
        %2087 = vmatpush1.bf16.msra.mxu0 0
        %2088 = vmatprep.subr.bf16.mxu0 0
        %2089 = vmatpush1.bf16.msra.mxu0 0
        %2090 = vmatprep.subr.bf16.mxu0 0
        %2091 = vmatpush1.bf16.msra.mxu0 0
        %2092 = vmatprep.subr.bf16.mxu0 0
        %2093 = vmatpush1.bf16.msra.mxu0 0
        %2094 = vmatprep.subr.bf16.mxu0 0
        %2095 = vmatpush1.bf16.msra.mxu0 0
        %2096 = vmatprep.subr.bf16.mxu0 0
        %2097 = vmatpush1.bf16.msra.mxu0 0
        %2098 = vmatprep.subr.bf16.mxu0 0
        %2099 = vmatpush1.bf16.msra.mxu0 0
        %2100 = vmatprep.subr.bf16.mxu0 0
        %2101 = vmatpush1.bf16.msra.mxu0 0
        %2102 = vmatprep.subr.bf16.mxu0 0
        %2103 = vmatpush1.bf16.msra.mxu0 0
        %2104 = vmatprep.subr.bf16.mxu0 0
        %2105 = vmatpush1.bf16.msra.mxu0 0
        %2106 = vmatprep.mubr.bf16.mxu0 0
        %2107 = vmatmul.mubr.bf16.gmra.mrb[0].mxu0 %v2029
        %v2108 = vpop.f32.mrb[0].mxu0
        %v2109 = vadd.f32 0.0, %v2108
        %v2110 = vpop.f32.mrb[0].mxu0
        %v2111 = vadd.f32 0.0, %v2110
        %v2112 = vpop.f32.mrb[0].mxu0
        %v2113 = vadd.f32 0.0, %v2112
        %v2114 = vpop.f32.mrb[0].mxu0
        %v2115 = vadd.f32 0.0, %v2114
        %2116 = vdwg.mxu0
        %v2117 = vadd.f32 %v1993, %v2066
        %v2118 = vadd.f32 %v1994, %v2068
        %v2119 = vadd.f32 %v1995, %v2109
        %v2120 = vadd.f32 %v1996, %v2111
        %v2121 = vadd.f32 %v1997, %v2070
        %v2122 = vadd.f32 %v1998, %v2072
        %v2123 = vadd.f32 %v1999, %v2113
        %v2124 = vadd.f32 %v2000, %v2115
        %s2125 = scalar_lea.vmem %s0, 112
        %v2126 = vld [vmem:[%s2125] sm:$0xf]
        %v2127 = vld [vmem:[%s2125 + $0x4] sm:$0xf]
        %v2130 = vunpack.c.l.b16 %v2126
        %v2131 = vunpack.c.l.b16 %v2127
        %v2132 = vpack.c.b16 %v2131, %v2130
        %2133 = vrot.lane.b32.xlu0 %v416, 16
        %v2134 = vpop.permute.xlu0 %2133
        %2135 = vrot.lane.b32.xlu0 %v417, 16
        %v2136 = vpop.permute.xlu0 %2135
        %2137 = vrot.lane.b32.xlu0 %v418, 16
        %v2138 = vpop.permute.xlu0 %2137
        %2139 = vrot.lane.b32.xlu0 %v419, 16
        %v2140 = vpop.permute.xlu0 %2139
        %2141 = vrot.lane.b32.xlu0 %v423, 16
        %v2142 = vpop.permute.xlu0 %2141
        %vm2143 = vcmask 130048
        %v2144 = vsel %vm2143, %v2134, %v2136
        %v2145 = vsel %vm2143, %v2136, %v2138
        %v2146 = vsel %vm2143, %v2138, %v2140
        %v2147 = vsel %vm2143, %v2140, %v2142
        %v2153 = vsel %vm453, %v2132, 0
        %2155 = vmatprep.subr.bf16.mxu0 %v2145
        %2156 = vmatpush1.bf16.msra.mxu0 %v2144
        %2157 = vmatprep.subr.bf16.mxu0 0
        %2158 = vmatpush1.bf16.msra.mxu0 0
        %2159 = vmatprep.subr.bf16.mxu0 0
        %2160 = vmatpush1.bf16.msra.mxu0 0
        %2161 = vmatprep.subr.bf16.mxu0 0
        %2162 = vmatpush1.bf16.msra.mxu0 0
        %2163 = vmatprep.subr.bf16.mxu0 0
        %2164 = vmatpush1.bf16.msra.mxu0 0
        %2165 = vmatprep.subr.bf16.mxu0 0
        %2166 = vmatpush1.bf16.msra.mxu0 0
        %2167 = vmatprep.subr.bf16.mxu0 0
        %2168 = vmatpush1.bf16.msra.mxu0 0
        %2169 = vmatprep.subr.bf16.mxu0 0
        %2170 = vmatpush1.bf16.msra.mxu0 0
        %2171 = vmatprep.subr.bf16.mxu0 0
        %2172 = vmatpush1.bf16.msra.mxu0 0
        %2173 = vmatprep.subr.bf16.mxu0 0
        %2174 = vmatpush1.bf16.msra.mxu0 0
        %2175 = vmatprep.subr.bf16.mxu0 0
        %2176 = vmatpush1.bf16.msra.mxu0 0
        %2177 = vmatprep.subr.bf16.mxu0 0
        %2178 = vmatpush1.bf16.msra.mxu0 0
        %2179 = vmatprep.subr.bf16.mxu0 0
        %2180 = vmatpush1.bf16.msra.mxu0 0
        %2181 = vmatprep.subr.bf16.mxu0 0
        %2182 = vmatpush1.bf16.msra.mxu0 0
        %2183 = vmatprep.subr.bf16.mxu0 0
        %2184 = vmatpush1.bf16.msra.mxu0 0
        %2185 = vmatprep.subr.bf16.mxu0 0
        %2186 = vmatpush1.bf16.msra.mxu0 0
        %2187 = vmatprep.mubr.bf16.mxu0 0
        %2188 = vmatmul.mubr.bf16.gmra.mrb[0].mxu0 %v2153
        %v2189 = vpop.f32.mrb[0].mxu0
        %v2190 = vadd.f32 0.0, %v2189
        %v2191 = vpop.f32.mrb[0].mxu0
        %v2192 = vadd.f32 0.0, %v2191
        %v2193 = vpop.f32.mrb[0].mxu0
        %v2194 = vadd.f32 0.0, %v2193
        %v2195 = vpop.f32.mrb[0].mxu0
        %v2196 = vadd.f32 0.0, %v2195
        %2197 = vdwg.mxu0
        %2198 = vmatprep.subr.bf16.mxu0 %v2147
        %2199 = vmatpush1.bf16.msra.mxu0 %v2146
        %2200 = vmatprep.subr.bf16.mxu0 0
        %2201 = vmatpush1.bf16.msra.mxu0 0
        %2202 = vmatprep.subr.bf16.mxu0 0
        %2203 = vmatpush1.bf16.msra.mxu0 0
        %2204 = vmatprep.subr.bf16.mxu0 0
        %2205 = vmatpush1.bf16.msra.mxu0 0
        %2206 = vmatprep.subr.bf16.mxu0 0
        %2207 = vmatpush1.bf16.msra.mxu0 0
        %2208 = vmatprep.subr.bf16.mxu0 0
        %2209 = vmatpush1.bf16.msra.mxu0 0
        %2210 = vmatprep.subr.bf16.mxu0 0
        %2211 = vmatpush1.bf16.msra.mxu0 0
        %2212 = vmatprep.subr.bf16.mxu0 0
        %2213 = vmatpush1.bf16.msra.mxu0 0
        %2214 = vmatprep.subr.bf16.mxu0 0
        %2215 = vmatpush1.bf16.msra.mxu0 0
        %2216 = vmatprep.subr.bf16.mxu0 0
        %2217 = vmatpush1.bf16.msra.mxu0 0
        %2218 = vmatprep.subr.bf16.mxu0 0
        %2219 = vmatpush1.bf16.msra.mxu0 0
        %2220 = vmatprep.subr.bf16.mxu0 0
        %2221 = vmatpush1.bf16.msra.mxu0 0
        %2222 = vmatprep.subr.bf16.mxu0 0
        %2223 = vmatpush1.bf16.msra.mxu0 0
        %2224 = vmatprep.subr.bf16.mxu0 0
        %2225 = vmatpush1.bf16.msra.mxu0 0
        %2226 = vmatprep.subr.bf16.mxu0 0
        %2227 = vmatpush1.bf16.msra.mxu0 0
        %2228 = vmatprep.subr.bf16.mxu0 0
        %2229 = vmatpush1.bf16.msra.mxu0 0
        %2230 = vmatprep.mubr.bf16.mxu0 0
        %2231 = vmatmul.mubr.bf16.gmra.mrb[0].mxu0 %v2153
        %v2232 = vpop.f32.mrb[0].mxu0
        %v2233 = vadd.f32 0.0, %v2232
        %v2234 = vpop.f32.mrb[0].mxu0
        %v2235 = vadd.f32 0.0, %v2234
        %v2236 = vpop.f32.mrb[0].mxu0
        %v2237 = vadd.f32 0.0, %v2236
        %v2238 = vpop.f32.mrb[0].mxu0
        %v2239 = vadd.f32 0.0, %v2238
        %2240 = vdwg.mxu0
        %v2241 = vadd.f32 %v2117, %v2190
        %v2242 = vadd.f32 %v2118, %v2192
        %v2243 = vadd.f32 %v2119, %v2233
        %v2244 = vadd.f32 %v2120, %v2235
        %v2245 = vadd.f32 %v2121, %v2194
        %v2246 = vadd.f32 %v2122, %v2196
        %v2247 = vadd.f32 %v2123, %v2237
        %v2248 = vadd.f32 %v2124, %v2239
        %s2249 = scalar_lea.vmem %s0, 120
        %v2250 = vld [vmem:[%s2249] sm:$0xf]
        %v2251 = vld [vmem:[%s2249 + $0x4] sm:$0xf]
        %v2254 = vunpack.c.l.b16 %v2250
        %v2255 = vunpack.c.l.b16 %v2251
        %v2256 = vpack.c.b16 %v2255, %v2254
        %2257 = vrot.lane.b32.xlu0 %v416, 8
        %v2258 = vpop.permute.xlu0 %2257
        %2259 = vrot.lane.b32.xlu0 %v417, 8
        %v2260 = vpop.permute.xlu0 %2259
        %2261 = vrot.lane.b32.xlu0 %v418, 8
        %v2262 = vpop.permute.xlu0 %2261
        %2263 = vrot.lane.b32.xlu0 %v419, 8
        %v2264 = vpop.permute.xlu0 %2263
        %2265 = vrot.lane.b32.xlu0 %v423, 8
        %v2266 = vpop.permute.xlu0 %2265
        %vm2267 = vcmask 64512
        %v2268 = vsel %vm2267, %v2258, %v2260
        %v2269 = vsel %vm2267, %v2260, %v2262
        %v2270 = vsel %vm2267, %v2262, %v2264
        %v2271 = vsel %vm2267, %v2264, %v2266
        %v2277 = vsel %vm453, %v2256, 0
        %2279 = vmatprep.subr.bf16.mxu0 %v2269
        %2280 = vmatpush1.bf16.msra.mxu0 %v2268
        %2281 = vmatprep.subr.bf16.mxu0 0
        %2282 = vmatpush1.bf16.msra.mxu0 0
        %2283 = vmatprep.subr.bf16.mxu0 0
        %2284 = vmatpush1.bf16.msra.mxu0 0
        %2285 = vmatprep.subr.bf16.mxu0 0
        %2286 = vmatpush1.bf16.msra.mxu0 0
        %2287 = vmatprep.subr.bf16.mxu0 0
        %2288 = vmatpush1.bf16.msra.mxu0 0
        %2289 = vmatprep.subr.bf16.mxu0 0
        %2290 = vmatpush1.bf16.msra.mxu0 0
        %2291 = vmatprep.subr.bf16.mxu0 0
        %2292 = vmatpush1.bf16.msra.mxu0 0
        %2293 = vmatprep.subr.bf16.mxu0 0
        %2294 = vmatpush1.bf16.msra.mxu0 0
        %2295 = vmatprep.subr.bf16.mxu0 0
        %2296 = vmatpush1.bf16.msra.mxu0 0
        %2297 = vmatprep.subr.bf16.mxu0 0
        %2298 = vmatpush1.bf16.msra.mxu0 0
        %2299 = vmatprep.subr.bf16.mxu0 0
        %2300 = vmatpush1.bf16.msra.mxu0 0
        %2301 = vmatprep.subr.bf16.mxu0 0
        %2302 = vmatpush1.bf16.msra.mxu0 0
        %2303 = vmatprep.subr.bf16.mxu0 0
        %2304 = vmatpush1.bf16.msra.mxu0 0
        %2305 = vmatprep.subr.bf16.mxu0 0
        %2306 = vmatpush1.bf16.msra.mxu0 0
        %2307 = vmatprep.subr.bf16.mxu0 0
        %2308 = vmatpush1.bf16.msra.mxu0 0
        %2309 = vmatprep.subr.bf16.mxu0 0
        %2310 = vmatpush1.bf16.msra.mxu0 0
        %2311 = vmatprep.mubr.bf16.mxu0 0
        %2312 = vmatmul.mubr.bf16.gmra.mrb[0].mxu0 %v2277
        %v2313 = vpop.f32.mrb[0].mxu0
        %v2314 = vadd.f32 0.0, %v2313
        %v2315 = vpop.f32.mrb[0].mxu0
        %v2316 = vadd.f32 0.0, %v2315
        %v2317 = vpop.f32.mrb[0].mxu0
        %v2318 = vadd.f32 0.0, %v2317
        %v2319 = vpop.f32.mrb[0].mxu0
        %v2320 = vadd.f32 0.0, %v2319
        %2321 = vdwg.mxu0
        %2322 = vmatprep.subr.bf16.mxu0 %v2271
        %2323 = vmatpush1.bf16.msra.mxu0 %v2270
        %2324 = vmatprep.subr.bf16.mxu0 0
        %2325 = vmatpush1.bf16.msra.mxu0 0
        %2326 = vmatprep.subr.bf16.mxu0 0
        %2327 = vmatpush1.bf16.msra.mxu0 0
        %2328 = vmatprep.subr.bf16.mxu0 0
        %2329 = vmatpush1.bf16.msra.mxu0 0
        %2330 = vmatprep.subr.bf16.mxu0 0
        %2331 = vmatpush1.bf16.msra.mxu0 0
        %2332 = vmatprep.subr.bf16.mxu0 0
        %2333 = vmatpush1.bf16.msra.mxu0 0
        %2334 = vmatprep.subr.bf16.mxu0 0
        %2335 = vmatpush1.bf16.msra.mxu0 0
        %2336 = vmatprep.subr.bf16.mxu0 0
        %2337 = vmatpush1.bf16.msra.mxu0 0
        %2338 = vmatprep.subr.bf16.mxu0 0
        %2339 = vmatpush1.bf16.msra.mxu0 0
        %2340 = vmatprep.subr.bf16.mxu0 0
        %2341 = vmatpush1.bf16.msra.mxu0 0
        %2342 = vmatprep.subr.bf16.mxu0 0
        %2343 = vmatpush1.bf16.msra.mxu0 0
        %2344 = vmatprep.subr.bf16.mxu0 0
        %2345 = vmatpush1.bf16.msra.mxu0 0
        %2346 = vmatprep.subr.bf16.mxu0 0
        %2347 = vmatpush1.bf16.msra.mxu0 0
        %2348 = vmatprep.subr.bf16.mxu0 0
        %2349 = vmatpush1.bf16.msra.mxu0 0
        %2350 = vmatprep.subr.bf16.mxu0 0
        %2351 = vmatpush1.bf16.msra.mxu0 0
        %2352 = vmatprep.subr.bf16.mxu0 0
        %2353 = vmatpush1.bf16.msra.mxu0 0
        %2354 = vmatprep.mubr.bf16.mxu0 0
        %2355 = vmatmul.mubr.bf16.gmra.mrb[0].mxu0 %v2277
        %v2356 = vpop.f32.mrb[0].mxu0
        %v2357 = vadd.f32 0.0, %v2356
        %v2358 = vpop.f32.mrb[0].mxu0
        %v2359 = vadd.f32 0.0, %v2358
        %v2360 = vpop.f32.mrb[0].mxu0
        %v2361 = vadd.f32 0.0, %v2360
        %v2362 = vpop.f32.mrb[0].mxu0
        %v2363 = vadd.f32 0.0, %v2362
        %2364 = vdwg.mxu0
        %v2365 = vadd.f32 %v2241, %v2314
        %v2366 = vadd.f32 %v2242, %v2316
        %v2367 = vadd.f32 %v2243, %v2357
        %v2368 = vadd.f32 %v2244, %v2359
        %v2369 = vadd.f32 %v2245, %v2318
        %v2370 = vadd.f32 %v2246, %v2320
        %v2371 = vadd.f32 %v2247, %v2361
        %v2372 = vadd.f32 %v2248, %v2363
        %s2373 = scalar_lea.vmem %s0, 128
        %v2374 = vld [vmem:[%s2373] sm:$0xf]
        %v2375 = vld [vmem:[%s2373 + $0x4] sm:$0xf]
        %v2378 = vunpack.c.l.b16 %v2374
        %v2379 = vunpack.c.l.b16 %v2375
        %v2380 = vpack.c.b16 %v2379, %v2378
        %2381 = vrot.lane.b32.xlu0 %v416, 7
        %v2382 = vpop.permute.xlu0 %2381
        %2383 = vrot.lane.b32.xlu0 %v417, 7
        %v2384 = vpop.permute.xlu0 %2383
        %2385 = vrot.lane.b32.xlu0 %v418, 7
        %v2386 = vpop.permute.xlu0 %2385
        %2387 = vrot.lane.b32.xlu0 %v419, 7
        %v2388 = vpop.permute.xlu0 %2387
        %2389 = vrot.lane.b32.xlu0 %v423, 7
        %v2390 = vpop.permute.xlu0 %2389
        %vm2391 = vcmask 56320
        %v2392 = vsel %vm2391, %v2382, %v2384
        %v2393 = vsel %vm2391, %v2384, %v2386
        %v2394 = vsel %vm2391, %v2386, %v2388
        %v2395 = vsel %vm2391, %v2388, %v2390
        %v2401 = vsel %vm453, %v2380, 0
        %2403 = vmatprep.subr.bf16.mxu0 %v2393
        %2404 = vmatpush1.bf16.msra.mxu0 %v2392
        %2405 = vmatprep.subr.bf16.mxu0 0
        %2406 = vmatpush1.bf16.msra.mxu0 0
        %2407 = vmatprep.subr.bf16.mxu0 0
        %2408 = vmatpush1.bf16.msra.mxu0 0
        %2409 = vmatprep.subr.bf16.mxu0 0
        %2410 = vmatpush1.bf16.msra.mxu0 0
        %2411 = vmatprep.subr.bf16.mxu0 0
        %2412 = vmatpush1.bf16.msra.mxu0 0
        %2413 = vmatprep.subr.bf16.mxu0 0
        %2414 = vmatpush1.bf16.msra.mxu0 0
        %2415 = vmatprep.subr.bf16.mxu0 0
        %2416 = vmatpush1.bf16.msra.mxu0 0
        %2417 = vmatprep.subr.bf16.mxu0 0
        %2418 = vmatpush1.bf16.msra.mxu0 0
        %2419 = vmatprep.subr.bf16.mxu0 0
        %2420 = vmatpush1.bf16.msra.mxu0 0
        %2421 = vmatprep.subr.bf16.mxu0 0
        %2422 = vmatpush1.bf16.msra.mxu0 0
        %2423 = vmatprep.subr.bf16.mxu0 0
        %2424 = vmatpush1.bf16.msra.mxu0 0
        %2425 = vmatprep.subr.bf16.mxu0 0
        %2426 = vmatpush1.bf16.msra.mxu0 0
        %2427 = vmatprep.subr.bf16.mxu0 0
        %2428 = vmatpush1.bf16.msra.mxu0 0
        %2429 = vmatprep.subr.bf16.mxu0 0
        %2430 = vmatpush1.bf16.msra.mxu0 0
        %2431 = vmatprep.subr.bf16.mxu0 0
        %2432 = vmatpush1.bf16.msra.mxu0 0
        %2433 = vmatprep.subr.bf16.mxu0 0
        %2434 = vmatpush1.bf16.msra.mxu0 0
        %2435 = vmatprep.mubr.bf16.mxu0 0
        %2436 = vmatmul.mubr.bf16.gmra.mrb[0].mxu0 %v2401
        %v2437 = vpop.f32.mrb[0].mxu0
        %v2438 = vadd.f32 0.0, %v2437
        %v2439 = vpop.f32.mrb[0].mxu0
        %v2440 = vadd.f32 0.0, %v2439
        %v2441 = vpop.f32.mrb[0].mxu0
        %v2442 = vadd.f32 0.0, %v2441
        %v2443 = vpop.f32.mrb[0].mxu0
        %v2444 = vadd.f32 0.0, %v2443
        %2445 = vdwg.mxu0
        %2446 = vmatprep.subr.bf16.mxu0 %v2395
        %2447 = vmatpush1.bf16.msra.mxu0 %v2394
        %2448 = vmatprep.subr.bf16.mxu0 0
        %2449 = vmatpush1.bf16.msra.mxu0 0
        %2450 = vmatprep.subr.bf16.mxu0 0
        %2451 = vmatpush1.bf16.msra.mxu0 0
        %2452 = vmatprep.subr.bf16.mxu0 0
        %2453 = vmatpush1.bf16.msra.mxu0 0
        %2454 = vmatprep.subr.bf16.mxu0 0
        %2455 = vmatpush1.bf16.msra.mxu0 0
        %2456 = vmatprep.subr.bf16.mxu0 0
        %2457 = vmatpush1.bf16.msra.mxu0 0
        %2458 = vmatprep.subr.bf16.mxu0 0
        %2459 = vmatpush1.bf16.msra.mxu0 0
        %2460 = vmatprep.subr.bf16.mxu0 0
        %2461 = vmatpush1.bf16.msra.mxu0 0
        %2462 = vmatprep.subr.bf16.mxu0 0
        %2463 = vmatpush1.bf16.msra.mxu0 0
        %2464 = vmatprep.subr.bf16.mxu0 0
        %2465 = vmatpush1.bf16.msra.mxu0 0
        %2466 = vmatprep.subr.bf16.mxu0 0
        %2467 = vmatpush1.bf16.msra.mxu0 0
        %2468 = vmatprep.subr.bf16.mxu0 0
        %2469 = vmatpush1.bf16.msra.mxu0 0
        %2470 = vmatprep.subr.bf16.mxu0 0
        %2471 = vmatpush1.bf16.msra.mxu0 0
        %2472 = vmatprep.subr.bf16.mxu0 0
        %2473 = vmatpush1.bf16.msra.mxu0 0
        %2474 = vmatprep.subr.bf16.mxu0 0
        %2475 = vmatpush1.bf16.msra.mxu0 0
        %2476 = vmatprep.subr.bf16.mxu0 0
        %2477 = vmatpush1.bf16.msra.mxu0 0
        %2478 = vmatprep.mubr.bf16.mxu0 0
        %2479 = vmatmul.mubr.bf16.gmra.mrb[0].mxu0 %v2401
        %v2480 = vpop.f32.mrb[0].mxu0
        %v2481 = vadd.f32 0.0, %v2480
        %v2482 = vpop.f32.mrb[0].mxu0
        %v2483 = vadd.f32 0.0, %v2482
        %v2484 = vpop.f32.mrb[0].mxu0
        %v2485 = vadd.f32 0.0, %v2484
        %v2486 = vpop.f32.mrb[0].mxu0
        %v2487 = vadd.f32 0.0, %v2486
        %2488 = vdwg.mxu0
        %v2489 = vadd.f32 %v2365, %v2438
        %v2490 = vadd.f32 %v2366, %v2440
        %v2491 = vadd.f32 %v2367, %v2481
        %v2492 = vadd.f32 %v2368, %v2483
        %v2493 = vadd.f32 %v2369, %v2442
        %v2494 = vadd.f32 %v2370, %v2444
        %v2495 = vadd.f32 %v2371, %v2485
        %v2496 = vadd.f32 %v2372, %v2487
        %s2497 = scalar_lea.vmem %s0, 136
        %v2498 = vld [vmem:[%s2497] sm:$0xf]
        %v2499 = vld [vmem:[%s2497 + $0x4] sm:$0xf]
        %v2502 = vunpack.c.l.b16 %v2498
        %v2503 = vunpack.c.l.b16 %v2499
        %v2504 = vpack.c.b16 %v2503, %v2502
        %2505 = vrot.lane.b32.xlu0 %v416, 6
        %v2506 = vpop.permute.xlu0 %2505
        %2507 = vrot.lane.b32.xlu0 %v417, 6
        %v2508 = vpop.permute.xlu0 %2507
        %2509 = vrot.lane.b32.xlu0 %v418, 6
        %v2510 = vpop.permute.xlu0 %2509
        %2511 = vrot.lane.b32.xlu0 %v419, 6
        %v2512 = vpop.permute.xlu0 %2511
        %2513 = vrot.lane.b32.xlu0 %v423, 6
        %v2514 = vpop.permute.xlu0 %2513
        %vm2515 = vcmask 48128
        %v2516 = vsel %vm2515, %v2506, %v2508
        %v2517 = vsel %vm2515, %v2508, %v2510
        %v2518 = vsel %vm2515, %v2510, %v2512
        %v2519 = vsel %vm2515, %v2512, %v2514
        %v2525 = vsel %vm453, %v2504, 0
        %2527 = vmatprep.subr.bf16.mxu0 %v2517
        %2528 = vmatpush1.bf16.msra.mxu0 %v2516
        %2529 = vmatprep.subr.bf16.mxu0 0
        %2530 = vmatpush1.bf16.msra.mxu0 0
        %2531 = vmatprep.subr.bf16.mxu0 0
        %2532 = vmatpush1.bf16.msra.mxu0 0
        %2533 = vmatprep.subr.bf16.mxu0 0
        %2534 = vmatpush1.bf16.msra.mxu0 0
        %2535 = vmatprep.subr.bf16.mxu0 0
        %2536 = vmatpush1.bf16.msra.mxu0 0
        %2537 = vmatprep.subr.bf16.mxu0 0
        %2538 = vmatpush1.bf16.msra.mxu0 0
        %2539 = vmatprep.subr.bf16.mxu0 0
        %2540 = vmatpush1.bf16.msra.mxu0 0
        %2541 = vmatprep.subr.bf16.mxu0 0
        %2542 = vmatpush1.bf16.msra.mxu0 0
        %2543 = vmatprep.subr.bf16.mxu0 0
        %2544 = vmatpush1.bf16.msra.mxu0 0
        %2545 = vmatprep.subr.bf16.mxu0 0
        %2546 = vmatpush1.bf16.msra.mxu0 0
        %2547 = vmatprep.subr.bf16.mxu0 0
        %2548 = vmatpush1.bf16.msra.mxu0 0
        %2549 = vmatprep.subr.bf16.mxu0 0
        %2550 = vmatpush1.bf16.msra.mxu0 0
        %2551 = vmatprep.subr.bf16.mxu0 0
        %2552 = vmatpush1.bf16.msra.mxu0 0
        %2553 = vmatprep.subr.bf16.mxu0 0
        %2554 = vmatpush1.bf16.msra.mxu0 0
        %2555 = vmatprep.subr.bf16.mxu0 0
        %2556 = vmatpush1.bf16.msra.mxu0 0
        %2557 = vmatprep.subr.bf16.mxu0 0
        %2558 = vmatpush1.bf16.msra.mxu0 0
        %2559 = vmatprep.mubr.bf16.mxu0 0
        %2560 = vmatmul.mubr.bf16.gmra.mrb[0].mxu0 %v2525
        %v2561 = vpop.f32.mrb[0].mxu0
        %v2562 = vadd.f32 0.0, %v2561
        %v2563 = vpop.f32.mrb[0].mxu0
        %v2564 = vadd.f32 0.0, %v2563
        %v2565 = vpop.f32.mrb[0].mxu0
        %v2566 = vadd.f32 0.0, %v2565
        %v2567 = vpop.f32.mrb[0].mxu0
        %v2568 = vadd.f32 0.0, %v2567
        %2569 = vdwg.mxu0
        %2570 = vmatprep.subr.bf16.mxu0 %v2519
        %2571 = vmatpush1.bf16.msra.mxu0 %v2518
        %2572 = vmatprep.subr.bf16.mxu0 0
        %2573 = vmatpush1.bf16.msra.mxu0 0
        %2574 = vmatprep.subr.bf16.mxu0 0
        %2575 = vmatpush1.bf16.msra.mxu0 0
        %2576 = vmatprep.subr.bf16.mxu0 0
        %2577 = vmatpush1.bf16.msra.mxu0 0
        %2578 = vmatprep.subr.bf16.mxu0 0
        %2579 = vmatpush1.bf16.msra.mxu0 0
        %2580 = vmatprep.subr.bf16.mxu0 0
        %2581 = vmatpush1.bf16.msra.mxu0 0
        %2582 = vmatprep.subr.bf16.mxu0 0
        %2583 = vmatpush1.bf16.msra.mxu0 0
        %2584 = vmatprep.subr.bf16.mxu0 0
        %2585 = vmatpush1.bf16.msra.mxu0 0
        %2586 = vmatprep.subr.bf16.mxu0 0
        %2587 = vmatpush1.bf16.msra.mxu0 0
        %2588 = vmatprep.subr.bf16.mxu0 0
        %2589 = vmatpush1.bf16.msra.mxu0 0
        %2590 = vmatprep.subr.bf16.mxu0 0
        %2591 = vmatpush1.bf16.msra.mxu0 0
        %2592 = vmatprep.subr.bf16.mxu0 0
        %2593 = vmatpush1.bf16.msra.mxu0 0
        %2594 = vmatprep.subr.bf16.mxu0 0
        %2595 = vmatpush1.bf16.msra.mxu0 0
        %2596 = vmatprep.subr.bf16.mxu0 0
        %2597 = vmatpush1.bf16.msra.mxu0 0
        %2598 = vmatprep.subr.bf16.mxu0 0
        %2599 = vmatpush1.bf16.msra.mxu0 0
        %2600 = vmatprep.subr.bf16.mxu0 0
        %2601 = vmatpush1.bf16.msra.mxu0 0
        %2602 = vmatprep.mubr.bf16.mxu0 0
        %2603 = vmatmul.mubr.bf16.gmra.mrb[0].mxu0 %v2525
        %v2604 = vpop.f32.mrb[0].mxu0
        %v2605 = vadd.f32 0.0, %v2604
        %v2606 = vpop.f32.mrb[0].mxu0
        %v2607 = vadd.f32 0.0, %v2606
        %v2608 = vpop.f32.mrb[0].mxu0
        %v2609 = vadd.f32 0.0, %v2608
        %v2610 = vpop.f32.mrb[0].mxu0
        %v2611 = vadd.f32 0.0, %v2610
        %2612 = vdwg.mxu0
        %v2613 = vadd.f32 %v2489, %v2562
        %v2614 = vadd.f32 %v2490, %v2564
        %v2615 = vadd.f32 %v2491, %v2605
        %v2616 = vadd.f32 %v2492, %v2607
        %v2617 = vadd.f32 %v2493, %v2566
        %v2618 = vadd.f32 %v2494, %v2568
        %v2619 = vadd.f32 %v2495, %v2609
        %v2620 = vadd.f32 %v2496, %v2611
        %s2621 = scalar_lea.vmem %s0, 144
        %v2622 = vld [vmem:[%s2621] sm:$0xf]
        %v2623 = vld [vmem:[%s2621 + $0x4] sm:$0xf]
        %v2624 = vld [vmem:[#allocation2 + $0x8] sm:$0xff]
        %v2625 = vld [vmem:[#allocation2 + $0x10] sm:$0xff]
        %v2626 = vld [vmem:[#allocation2 + $0x18] sm:$0xff]
        %v2627 = vld [vmem:[#allocation2 + $0x20] sm:$0xff]
        %v2628 = vld [vmem:[#allocation2 + $0x28] sm:$0xff]
        %v2631 = vunpack.c.l.b16 %v2622
        %v2632 = vunpack.c.l.b16 %v2623
        %v2633 = vpack.c.b16 %v2632, %v2631
        %2639 = vrot.lane.b32.xlu0 %v2624, 56
        %v2640 = vpop.permute.xlu0 %2639
        %2641 = vrot.lane.b32.xlu0 %v2625, 56
        %v2642 = vpop.permute.xlu0 %2641
        %2643 = vrot.lane.b32.xlu0 %v2626, 56
        %v2644 = vpop.permute.xlu0 %2643
        %2645 = vrot.lane.b32.xlu0 %v2627, 56
        %v2646 = vpop.permute.xlu0 %2645
        %2647 = vrot.lane.b32.xlu0 %v2628, 56
        %v2648 = vpop.permute.xlu0 %2647
        %vm2649 = vcmask 457728
        %v2650 = vsel %vm2649, %v2640, %v2642
        %v2651 = vsel %vm2649, %v2642, %v2644
        %v2652 = vsel %vm2649, %v2644, %v2646
        %v2653 = vsel %vm2649, %v2646, %v2648
        %v2659 = vsel %vm453, %v2633, 0
        %2661 = vmatprep.subr.bf16.mxu0 %v2651
        %2662 = vmatpush1.bf16.msra.mxu0 %v2650
        %2663 = vmatprep.subr.bf16.mxu0 0
        %2664 = vmatpush1.bf16.msra.mxu0 0
        %2665 = vmatprep.subr.bf16.mxu0 0
        %2666 = vmatpush1.bf16.msra.mxu0 0
        %2667 = vmatprep.subr.bf16.mxu0 0
        %2668 = vmatpush1.bf16.msra.mxu0 0
        %2669 = vmatprep.subr.bf16.mxu0 0
        %2670 = vmatpush1.bf16.msra.mxu0 0
        %2671 = vmatprep.subr.bf16.mxu0 0
        %2672 = vmatpush1.bf16.msra.mxu0 0
        %2673 = vmatprep.subr.bf16.mxu0 0
        %2674 = vmatpush1.bf16.msra.mxu0 0
        %2675 = vmatprep.subr.bf16.mxu0 0
        %2676 = vmatpush1.bf16.msra.mxu0 0
        %2677 = vmatprep.subr.bf16.mxu0 0
        %2678 = vmatpush1.bf16.msra.mxu0 0
        %2679 = vmatprep.subr.bf16.mxu0 0
        %2680 = vmatpush1.bf16.msra.mxu0 0
        %2681 = vmatprep.subr.bf16.mxu0 0
        %2682 = vmatpush1.bf16.msra.mxu0 0
        %2683 = vmatprep.subr.bf16.mxu0 0
        %2684 = vmatpush1.bf16.msra.mxu0 0
        %2685 = vmatprep.subr.bf16.mxu0 0
        %2686 = vmatpush1.bf16.msra.mxu0 0
        %2687 = vmatprep.subr.bf16.mxu0 0
        %2688 = vmatpush1.bf16.msra.mxu0 0
        %2689 = vmatprep.subr.bf16.mxu0 0
        %2690 = vmatpush1.bf16.msra.mxu0 0
        %2691 = vmatprep.subr.bf16.mxu0 0
        %2692 = vmatpush1.bf16.msra.mxu0 0
        %2693 = vmatprep.mubr.bf16.mxu0 0
        %2694 = vmatmul.mubr.bf16.gmra.mrb[0].mxu0 %v2659
        %v2695 = vpop.f32.mrb[0].mxu0
        %v2696 = vadd.f32 0.0, %v2695
        %v2697 = vpop.f32.mrb[0].mxu0
        %v2698 = vadd.f32 0.0, %v2697
        %v2699 = vpop.f32.mrb[0].mxu0
        %v2700 = vadd.f32 0.0, %v2699
        %v2701 = vpop.f32.mrb[0].mxu0
        %v2702 = vadd.f32 0.0, %v2701
        %2703 = vdwg.mxu0
        %2704 = vmatprep.subr.bf16.mxu0 %v2653
        %2705 = vmatpush1.bf16.msra.mxu0 %v2652
        %2706 = vmatprep.subr.bf16.mxu0 0
        %2707 = vmatpush1.bf16.msra.mxu0 0
        %2708 = vmatprep.subr.bf16.mxu0 0
        %2709 = vmatpush1.bf16.msra.mxu0 0
        %2710 = vmatprep.subr.bf16.mxu0 0
        %2711 = vmatpush1.bf16.msra.mxu0 0
        %2712 = vmatprep.subr.bf16.mxu0 0
        %2713 = vmatpush1.bf16.msra.mxu0 0
        %2714 = vmatprep.subr.bf16.mxu0 0
        %2715 = vmatpush1.bf16.msra.mxu0 0
        %2716 = vmatprep.subr.bf16.mxu0 0
        %2717 = vmatpush1.bf16.msra.mxu0 0
        %2718 = vmatprep.subr.bf16.mxu0 0
        %2719 = vmatpush1.bf16.msra.mxu0 0
        %2720 = vmatprep.subr.bf16.mxu0 0
        %2721 = vmatpush1.bf16.msra.mxu0 0
        %2722 = vmatprep.subr.bf16.mxu0 0
        %2723 = vmatpush1.bf16.msra.mxu0 0
        %2724 = vmatprep.subr.bf16.mxu0 0
        %2725 = vmatpush1.bf16.msra.mxu0 0
        %2726 = vmatprep.subr.bf16.mxu0 0
        %2727 = vmatpush1.bf16.msra.mxu0 0
        %2728 = vmatprep.subr.bf16.mxu0 0
        %2729 = vmatpush1.bf16.msra.mxu0 0
        %2730 = vmatprep.subr.bf16.mxu0 0
        %2731 = vmatpush1.bf16.msra.mxu0 0
        %2732 = vmatprep.subr.bf16.mxu0 0
        %2733 = vmatpush1.bf16.msra.mxu0 0
        %2734 = vmatprep.subr.bf16.mxu0 0
        %2735 = vmatpush1.bf16.msra.mxu0 0
        %2736 = vmatprep.mubr.bf16.mxu0 0
        %2737 = vmatmul.mubr.bf16.gmra.mrb[0].mxu0 %v2659
        %v2738 = vpop.f32.mrb[0].mxu0
        %v2739 = vadd.f32 0.0, %v2738
        %v2740 = vpop.f32.mrb[0].mxu0
        %v2741 = vadd.f32 0.0, %v2740
        %v2742 = vpop.f32.mrb[0].mxu0
        %v2743 = vadd.f32 0.0, %v2742
        %v2744 = vpop.f32.mrb[0].mxu0
        %v2745 = vadd.f32 0.0, %v2744
        %2746 = vdwg.mxu0
        %v2747 = vadd.f32 %v2613, %v2696
        %v2748 = vadd.f32 %v2614, %v2698
        %v2749 = vadd.f32 %v2615, %v2739
        %v2750 = vadd.f32 %v2616, %v2741
        %v2751 = vadd.f32 %v2617, %v2700
        %v2752 = vadd.f32 %v2618, %v2702
        %v2753 = vadd.f32 %v2619, %v2743
        %v2754 = vadd.f32 %v2620, %v2745
        %s2755 = scalar_lea.vmem %s0, 152
        %v2756 = vld [vmem:[%s2755] sm:$0xf]
        %v2757 = vld [vmem:[%s2755 + $0x4] sm:$0xf]
        %v2760 = vunpack.c.l.b16 %v2756
        %v2761 = vunpack.c.l.b16 %v2757
        %v2762 = vpack.c.b16 %v2761, %v2760
        %2763 = vrot.lane.b32.xlu0 %v2624, 55
        %v2764 = vpop.permute.xlu0 %2763
        %2765 = vrot.lane.b32.xlu0 %v2625, 55
        %v2766 = vpop.permute.xlu0 %2765
        %2767 = vrot.lane.b32.xlu0 %v2626, 55
        %v2768 = vpop.permute.xlu0 %2767
        %2769 = vrot.lane.b32.xlu0 %v2627, 55
        %v2770 = vpop.permute.xlu0 %2769
        %2771 = vrot.lane.b32.xlu0 %v2628, 55
        %v2772 = vpop.permute.xlu0 %2771
        %vm2773 = vcmask 449536
        %v2774 = vsel %vm2773, %v2764, %v2766
        %v2775 = vsel %vm2773, %v2766, %v2768
        %v2776 = vsel %vm2773, %v2768, %v2770
        %v2777 = vsel %vm2773, %v2770, %v2772
        %v2783 = vsel %vm453, %v2762, 0
        %2785 = vmatprep.subr.bf16.mxu0 %v2775
        %2786 = vmatpush1.bf16.msra.mxu0 %v2774
        %2787 = vmatprep.subr.bf16.mxu0 0
        %2788 = vmatpush1.bf16.msra.mxu0 0
        %2789 = vmatprep.subr.bf16.mxu0 0
        %2790 = vmatpush1.bf16.msra.mxu0 0
        %2791 = vmatprep.subr.bf16.mxu0 0
        %2792 = vmatpush1.bf16.msra.mxu0 0
        %2793 = vmatprep.subr.bf16.mxu0 0
        %2794 = vmatpush1.bf16.msra.mxu0 0
        %2795 = vmatprep.subr.bf16.mxu0 0
        %2796 = vmatpush1.bf16.msra.mxu0 0
        %2797 = vmatprep.subr.bf16.mxu0 0
        %2798 = vmatpush1.bf16.msra.mxu0 0
        %2799 = vmatprep.subr.bf16.mxu0 0
        %2800 = vmatpush1.bf16.msra.mxu0 0
        %2801 = vmatprep.subr.bf16.mxu0 0
        %2802 = vmatpush1.bf16.msra.mxu0 0
        %2803 = vmatprep.subr.bf16.mxu0 0
        %2804 = vmatpush1.bf16.msra.mxu0 0
        %2805 = vmatprep.subr.bf16.mxu0 0
        %2806 = vmatpush1.bf16.msra.mxu0 0
        %2807 = vmatprep.subr.bf16.mxu0 0
        %2808 = vmatpush1.bf16.msra.mxu0 0
        %2809 = vmatprep.subr.bf16.mxu0 0
        %2810 = vmatpush1.bf16.msra.mxu0 0
        %2811 = vmatprep.subr.bf16.mxu0 0
        %2812 = vmatpush1.bf16.msra.mxu0 0
        %2813 = vmatprep.subr.bf16.mxu0 0
        %2814 = vmatpush1.bf16.msra.mxu0 0
        %2815 = vmatprep.subr.bf16.mxu0 0
        %2816 = vmatpush1.bf16.msra.mxu0 0
        %2817 = vmatprep.mubr.bf16.mxu0 0
        %2818 = vmatmul.mubr.bf16.gmra.mrb[0].mxu0 %v2783
        %v2819 = vpop.f32.mrb[0].mxu0
        %v2820 = vadd.f32 0.0, %v2819
        %v2821 = vpop.f32.mrb[0].mxu0
        %v2822 = vadd.f32 0.0, %v2821
        %v2823 = vpop.f32.mrb[0].mxu0
        %v2824 = vadd.f32 0.0, %v2823
        %v2825 = vpop.f32.mrb[0].mxu0
        %v2826 = vadd.f32 0.0, %v2825
        %2827 = vdwg.mxu0
        %2828 = vmatprep.subr.bf16.mxu0 %v2777
        %2829 = vmatpush1.bf16.msra.mxu0 %v2776
        %2830 = vmatprep.subr.bf16.mxu0 0
        %2831 = vmatpush1.bf16.msra.mxu0 0
        %2832 = vmatprep.subr.bf16.mxu0 0
        %2833 = vmatpush1.bf16.msra.mxu0 0
        %2834 = vmatprep.subr.bf16.mxu0 0
        %2835 = vmatpush1.bf16.msra.mxu0 0
        %2836 = vmatprep.subr.bf16.mxu0 0
        %2837 = vmatpush1.bf16.msra.mxu0 0
        %2838 = vmatprep.subr.bf16.mxu0 0
        %2839 = vmatpush1.bf16.msra.mxu0 0
        %2840 = vmatprep.subr.bf16.mxu0 0
        %2841 = vmatpush1.bf16.msra.mxu0 0
        %2842 = vmatprep.subr.bf16.mxu0 0
        %2843 = vmatpush1.bf16.msra.mxu0 0
        %2844 = vmatprep.subr.bf16.mxu0 0
        %2845 = vmatpush1.bf16.msra.mxu0 0
        %2846 = vmatprep.subr.bf16.mxu0 0
        %2847 = vmatpush1.bf16.msra.mxu0 0
        %2848 = vmatprep.subr.bf16.mxu0 0
        %2849 = vmatpush1.bf16.msra.mxu0 0
        %2850 = vmatprep.subr.bf16.mxu0 0
        %2851 = vmatpush1.bf16.msra.mxu0 0
        %2852 = vmatprep.subr.bf16.mxu0 0
        %2853 = vmatpush1.bf16.msra.mxu0 0
        %2854 = vmatprep.subr.bf16.mxu0 0
        %2855 = vmatpush1.bf16.msra.mxu0 0
        %2856 = vmatprep.subr.bf16.mxu0 0
        %2857 = vmatpush1.bf16.msra.mxu0 0
        %2858 = vmatprep.subr.bf16.mxu0 0
        %2859 = vmatpush1.bf16.msra.mxu0 0
        %2860 = vmatprep.mubr.bf16.mxu0 0
        %2861 = vmatmul.mubr.bf16.gmra.mrb[0].mxu0 %v2783
        %v2862 = vpop.f32.mrb[0].mxu0
        %v2863 = vadd.f32 0.0, %v2862
        %v2864 = vpop.f32.mrb[0].mxu0
        %v2865 = vadd.f32 0.0, %v2864
        %v2866 = vpop.f32.mrb[0].mxu0
        %v2867 = vadd.f32 0.0, %v2866
        %v2868 = vpop.f32.mrb[0].mxu0
        %v2869 = vadd.f32 0.0, %v2868
        %2870 = vdwg.mxu0
        %v2871 = vadd.f32 %v2747, %v2820
        %v2872 = vadd.f32 %v2748, %v2822
        %v2873 = vadd.f32 %v2749, %v2863
        %v2874 = vadd.f32 %v2750, %v2865
        %v2875 = vadd.f32 %v2751, %v2824
        %v2876 = vadd.f32 %v2752, %v2826
        %v2877 = vadd.f32 %v2753, %v2867
        %v2878 = vadd.f32 %v2754, %v2869
        %s2879 = scalar_lea.vmem %s0, 160
        %v2880 = vld [vmem:[%s2879] sm:$0xf]
        %v2881 = vld [vmem:[%s2879 + $0x4] sm:$0xf]
        %v2884 = vunpack.c.l.b16 %v2880
        %v2885 = vunpack.c.l.b16 %v2881
        %v2886 = vpack.c.b16 %v2885, %v2884
        %2887 = vrot.lane.b32.xlu0 %v2624, 54
        %v2888 = vpop.permute.xlu0 %2887
        %2889 = vrot.lane.b32.xlu0 %v2625, 54
        %v2890 = vpop.permute.xlu0 %2889
        %2891 = vrot.lane.b32.xlu0 %v2626, 54
        %v2892 = vpop.permute.xlu0 %2891
        %2893 = vrot.lane.b32.xlu0 %v2627, 54
        %v2894 = vpop.permute.xlu0 %2893
        %2895 = vrot.lane.b32.xlu0 %v2628, 54
        %v2896 = vpop.permute.xlu0 %2895
        %vm2897 = vcmask 441344
        %v2898 = vsel %vm2897, %v2888, %v2890
        %v2899 = vsel %vm2897, %v2890, %v2892
        %v2900 = vsel %vm2897, %v2892, %v2894
        %v2901 = vsel %vm2897, %v2894, %v2896
        %v2907 = vsel %vm453, %v2886, 0
        %2909 = vmatprep.subr.bf16.mxu0 %v2899
        %2910 = vmatpush1.bf16.msra.mxu0 %v2898
        %2911 = vmatprep.subr.bf16.mxu0 0
        %2912 = vmatpush1.bf16.msra.mxu0 0
        %2913 = vmatprep.subr.bf16.mxu0 0
        %2914 = vmatpush1.bf16.msra.mxu0 0
        %2915 = vmatprep.subr.bf16.mxu0 0
        %2916 = vmatpush1.bf16.msra.mxu0 0
        %2917 = vmatprep.subr.bf16.mxu0 0
        %2918 = vmatpush1.bf16.msra.mxu0 0
        %2919 = vmatprep.subr.bf16.mxu0 0
        %2920 = vmatpush1.bf16.msra.mxu0 0
        %2921 = vmatprep.subr.bf16.mxu0 0
        %2922 = vmatpush1.bf16.msra.mxu0 0
        %2923 = vmatprep.subr.bf16.mxu0 0
        %2924 = vmatpush1.bf16.msra.mxu0 0
        %2925 = vmatprep.subr.bf16.mxu0 0
        %2926 = vmatpush1.bf16.msra.mxu0 0
        %2927 = vmatprep.subr.bf16.mxu0 0
        %2928 = vmatpush1.bf16.msra.mxu0 0
        %2929 = vmatprep.subr.bf16.mxu0 0
        %2930 = vmatpush1.bf16.msra.mxu0 0
        %2931 = vmatprep.subr.bf16.mxu0 0
        %2932 = vmatpush1.bf16.msra.mxu0 0
        %2933 = vmatprep.subr.bf16.mxu0 0
        %2934 = vmatpush1.bf16.msra.mxu0 0
        %2935 = vmatprep.subr.bf16.mxu0 0
        %2936 = vmatpush1.bf16.msra.mxu0 0
        %2937 = vmatprep.subr.bf16.mxu0 0
        %2938 = vmatpush1.bf16.msra.mxu0 0
        %2939 = vmatprep.subr.bf16.mxu0 0
        %2940 = vmatpush1.bf16.msra.mxu0 0
        %2941 = vmatprep.mubr.bf16.mxu0 0
        %2942 = vmatmul.mubr.bf16.gmra.mrb[0].mxu0 %v2907
        %v2943 = vpop.f32.mrb[0].mxu0
        %v2944 = vadd.f32 0.0, %v2943
        %v2945 = vpop.f32.mrb[0].mxu0
        %v2946 = vadd.f32 0.0, %v2945
        %v2947 = vpop.f32.mrb[0].mxu0
        %v2948 = vadd.f32 0.0, %v2947
        %v2949 = vpop.f32.mrb[0].mxu0
        %v2950 = vadd.f32 0.0, %v2949
        %2951 = vdwg.mxu0
        %2952 = vmatprep.subr.bf16.mxu0 %v2901
        %2953 = vmatpush1.bf16.msra.mxu0 %v2900
        %2954 = vmatprep.subr.bf16.mxu0 0
        %2955 = vmatpush1.bf16.msra.mxu0 0
        %2956 = vmatprep.subr.bf16.mxu0 0
        %2957 = vmatpush1.bf16.msra.mxu0 0
        %2958 = vmatprep.subr.bf16.mxu0 0
        %2959 = vmatpush1.bf16.msra.mxu0 0
        %2960 = vmatprep.subr.bf16.mxu0 0
        %2961 = vmatpush1.bf16.msra.mxu0 0
        %2962 = vmatprep.subr.bf16.mxu0 0
        %2963 = vmatpush1.bf16.msra.mxu0 0
        %2964 = vmatprep.subr.bf16.mxu0 0
        %2965 = vmatpush1.bf16.msra.mxu0 0
        %2966 = vmatprep.subr.bf16.mxu0 0
        %2967 = vmatpush1.bf16.msra.mxu0 0
        %2968 = vmatprep.subr.bf16.mxu0 0
        %2969 = vmatpush1.bf16.msra.mxu0 0
        %2970 = vmatprep.subr.bf16.mxu0 0
        %2971 = vmatpush1.bf16.msra.mxu0 0
        %2972 = vmatprep.subr.bf16.mxu0 0
        %2973 = vmatpush1.bf16.msra.mxu0 0
        %2974 = vmatprep.subr.bf16.mxu0 0
        %2975 = vmatpush1.bf16.msra.mxu0 0
        %2976 = vmatprep.subr.bf16.mxu0 0
        %2977 = vmatpush1.bf16.msra.mxu0 0
        %2978 = vmatprep.subr.bf16.mxu0 0
        %2979 = vmatpush1.bf16.msra.mxu0 0
        %2980 = vmatprep.subr.bf16.mxu0 0
        %2981 = vmatpush1.bf16.msra.mxu0 0
        %2982 = vmatprep.subr.bf16.mxu0 0
        %2983 = vmatpush1.bf16.msra.mxu0 0
        %2984 = vmatprep.mubr.bf16.mxu0 0
        %2985 = vmatmul.mubr.bf16.gmra.mrb[0].mxu0 %v2907
        %v2986 = vpop.f32.mrb[0].mxu0
        %v2987 = vadd.f32 0.0, %v2986
        %v2988 = vpop.f32.mrb[0].mxu0
        %v2989 = vadd.f32 0.0, %v2988
        %v2990 = vpop.f32.mrb[0].mxu0
        %v2991 = vadd.f32 0.0, %v2990
        %v2992 = vpop.f32.mrb[0].mxu0
        %v2993 = vadd.f32 0.0, %v2992
        %2994 = vdwg.mxu0
        %v2995 = vadd.f32 %v2871, %v2944
        %v2996 = vadd.f32 %v2872, %v2946
        %v2997 = vadd.f32 %v2873, %v2987
        %v2998 = vadd.f32 %v2874, %v2989
        %v2999 = vadd.f32 %v2875, %v2948
        %v3000 = vadd.f32 %v2876, %v2950
        %v3001 = vadd.f32 %v2877, %v2991
        %v3002 = vadd.f32 %v2878, %v2993
        %s3003 = scalar_lea.vmem %s0, 168
        %v3004 = vld [vmem:[%s3003] sm:$0xf]
        %v3005 = vld [vmem:[%s3003 + $0x4] sm:$0xf]
        %v3008 = vunpack.c.l.b16 %v3004
        %v3009 = vunpack.c.l.b16 %v3005
        %v3010 = vpack.c.b16 %v3009, %v3008
        %3011 = vrot.lane.b32.xlu0 %v2624, 46
        %v3012 = vpop.permute.xlu0 %3011
        %3013 = vrot.lane.b32.xlu0 %v2625, 46
        %v3014 = vpop.permute.xlu0 %3013
        %3015 = vrot.lane.b32.xlu0 %v2626, 46
        %v3016 = vpop.permute.xlu0 %3015
        %3017 = vrot.lane.b32.xlu0 %v2627, 46
        %v3018 = vpop.permute.xlu0 %3017
        %3019 = vrot.lane.b32.xlu0 %v2628, 46
        %v3020 = vpop.permute.xlu0 %3019
        %vm3021 = vcmask 375808
        %v3022 = vsel %vm3021, %v3012, %v3014
        %v3023 = vsel %vm3021, %v3014, %v3016
        %v3024 = vsel %vm3021, %v3016, %v3018
        %v3025 = vsel %vm3021, %v3018, %v3020
        %v3031 = vsel %vm453, %v3010, 0
        %3033 = vmatprep.subr.bf16.mxu0 %v3023
        %3034 = vmatpush1.bf16.msra.mxu0 %v3022
        %3035 = vmatprep.subr.bf16.mxu0 0
        %3036 = vmatpush1.bf16.msra.mxu0 0
        %3037 = vmatprep.subr.bf16.mxu0 0
        %3038 = vmatpush1.bf16.msra.mxu0 0
        %3039 = vmatprep.subr.bf16.mxu0 0
        %3040 = vmatpush1.bf16.msra.mxu0 0
        %3041 = vmatprep.subr.bf16.mxu0 0
        %3042 = vmatpush1.bf16.msra.mxu0 0
        %3043 = vmatprep.subr.bf16.mxu0 0
        %3044 = vmatpush1.bf16.msra.mxu0 0
        %3045 = vmatprep.subr.bf16.mxu0 0
        %3046 = vmatpush1.bf16.msra.mxu0 0
        %3047 = vmatprep.subr.bf16.mxu0 0
        %3048 = vmatpush1.bf16.msra.mxu0 0
        %3049 = vmatprep.subr.bf16.mxu0 0
        %3050 = vmatpush1.bf16.msra.mxu0 0
        %3051 = vmatprep.subr.bf16.mxu0 0
        %3052 = vmatpush1.bf16.msra.mxu0 0
        %3053 = vmatprep.subr.bf16.mxu0 0
        %3054 = vmatpush1.bf16.msra.mxu0 0
        %3055 = vmatprep.subr.bf16.mxu0 0
        %3056 = vmatpush1.bf16.msra.mxu0 0
        %3057 = vmatprep.subr.bf16.mxu0 0
        %3058 = vmatpush1.bf16.msra.mxu0 0
        %3059 = vmatprep.subr.bf16.mxu0 0
        %3060 = vmatpush1.bf16.msra.mxu0 0
        %3061 = vmatprep.subr.bf16.mxu0 0
        %3062 = vmatpush1.bf16.msra.mxu0 0
        %3063 = vmatprep.subr.bf16.mxu0 0
        %3064 = vmatpush1.bf16.msra.mxu0 0
        %3065 = vmatprep.mubr.bf16.mxu0 0
        %3066 = vmatmul.mubr.bf16.gmra.mrb[0].mxu0 %v3031
        %v3067 = vpop.f32.mrb[0].mxu0
        %v3068 = vadd.f32 0.0, %v3067
        %v3069 = vpop.f32.mrb[0].mxu0
        %v3070 = vadd.f32 0.0, %v3069
        %v3071 = vpop.f32.mrb[0].mxu0
        %v3072 = vadd.f32 0.0, %v3071
        %v3073 = vpop.f32.mrb[0].mxu0
        %v3074 = vadd.f32 0.0, %v3073
        %3075 = vdwg.mxu0
        %3076 = vmatprep.subr.bf16.mxu0 %v3025
        %3077 = vmatpush1.bf16.msra.mxu0 %v3024
        %3078 = vmatprep.subr.bf16.mxu0 0
        %3079 = vmatpush1.bf16.msra.mxu0 0
        %3080 = vmatprep.subr.bf16.mxu0 0
        %3081 = vmatpush1.bf16.msra.mxu0 0
        %3082 = vmatprep.subr.bf16.mxu0 0
        %3083 = vmatpush1.bf16.msra.mxu0 0
        %3084 = vmatprep.subr.bf16.mxu0 0
        %3085 = vmatpush1.bf16.msra.mxu0 0
        %3086 = vmatprep.subr.bf16.mxu0 0
        %3087 = vmatpush1.bf16.msra.mxu0 0
        %3088 = vmatprep.subr.bf16.mxu0 0
        %3089 = vmatpush1.bf16.msra.mxu0 0
        %3090 = vmatprep.subr.bf16.mxu0 0
        %3091 = vmatpush1.bf16.msra.mxu0 0
        %3092 = vmatprep.subr.bf16.mxu0 0
        %3093 = vmatpush1.bf16.msra.mxu0 0
        %3094 = vmatprep.subr.bf16.mxu0 0
        %3095 = vmatpush1.bf16.msra.mxu0 0
        %3096 = vmatprep.subr.bf16.mxu0 0
        %3097 = vmatpush1.bf16.msra.mxu0 0
        %3098 = vmatprep.subr.bf16.mxu0 0
        %3099 = vmatpush1.bf16.msra.mxu0 0
        %3100 = vmatprep.subr.bf16.mxu0 0
        %3101 = vmatpush1.bf16.msra.mxu0 0
        %3102 = vmatprep.subr.bf16.mxu0 0
        %3103 = vmatpush1.bf16.msra.mxu0 0
        %3104 = vmatprep.subr.bf16.mxu0 0
        %3105 = vmatpush1.bf16.msra.mxu0 0
        %3106 = vmatprep.subr.bf16.mxu0 0
        %3107 = vmatpush1.bf16.msra.mxu0 0
        %3108 = vmatprep.mubr.bf16.mxu0 0
        %3109 = vmatmul.mubr.bf16.gmra.mrb[0].mxu0 %v3031
        %v3110 = vpop.f32.mrb[0].mxu0
        %v3111 = vadd.f32 0.0, %v3110
        %v3112 = vpop.f32.mrb[0].mxu0
        %v3113 = vadd.f32 0.0, %v3112
        %v3114 = vpop.f32.mrb[0].mxu0
        %v3115 = vadd.f32 0.0, %v3114
        %v3116 = vpop.f32.mrb[0].mxu0
        %v3117 = vadd.f32 0.0, %v3116
        %3118 = vdwg.mxu0
        %v3119 = vadd.f32 %v2995, %v3068
        %v3120 = vadd.f32 %v2996, %v3070
        %v3121 = vadd.f32 %v2997, %v3111
        %v3122 = vadd.f32 %v2998, %v3113
        %v3123 = vadd.f32 %v2999, %v3072
        %v3124 = vadd.f32 %v3000, %v3074
        %v3125 = vadd.f32 %v3001, %v3115
        %v3126 = vadd.f32 %v3002, %v3117
        %s3127 = scalar_lea.vmem %s0, 176
        %v3128 = vld [vmem:[%s3127] sm:$0xf]
        %v3129 = vld [vmem:[%s3127 + $0x4] sm:$0xf]
        %v3132 = vunpack.c.l.b16 %v3128
        %v3133 = vunpack.c.l.b16 %v3129
        %v3134 = vpack.c.b16 %v3133, %v3132
        %3135 = vrot.lane.b32.xlu0 %v2624, 45
        %v3136 = vpop.permute.xlu0 %3135
        %3137 = vrot.lane.b32.xlu0 %v2625, 45
        %v3138 = vpop.permute.xlu0 %3137
        %3139 = vrot.lane.b32.xlu0 %v2626, 45
        %v3140 = vpop.permute.xlu0 %3139
        %3141 = vrot.lane.b32.xlu0 %v2627, 45
        %v3142 = vpop.permute.xlu0 %3141
        %3143 = vrot.lane.b32.xlu0 %v2628, 45
        %v3144 = vpop.permute.xlu0 %3143
        %vm3145 = vcmask 367616
        %v3146 = vsel %vm3145, %v3136, %v3138
        %v3147 = vsel %vm3145, %v3138, %v3140
        %v3148 = vsel %vm3145, %v3140, %v3142
        %v3149 = vsel %vm3145, %v3142, %v3144
        %v3155 = vsel %vm453, %v3134, 0
        %3157 = vmatprep.subr.bf16.mxu0 %v3147
        %3158 = vmatpush1.bf16.msra.mxu0 %v3146
        %3159 = vmatprep.subr.bf16.mxu0 0
        %3160 = vmatpush1.bf16.msra.mxu0 0
        %3161 = vmatprep.subr.bf16.mxu0 0
        %3162 = vmatpush1.bf16.msra.mxu0 0
        %3163 = vmatprep.subr.bf16.mxu0 0
        %3164 = vmatpush1.bf16.msra.mxu0 0
        %3165 = vmatprep.subr.bf16.mxu0 0
        %3166 = vmatpush1.bf16.msra.mxu0 0
        %3167 = vmatprep.subr.bf16.mxu0 0
        %3168 = vmatpush1.bf16.msra.mxu0 0
        %3169 = vmatprep.subr.bf16.mxu0 0
        %3170 = vmatpush1.bf16.msra.mxu0 0
        %3171 = vmatprep.subr.bf16.mxu0 0
        %3172 = vmatpush1.bf16.msra.mxu0 0
        %3173 = vmatprep.subr.bf16.mxu0 0
        %3174 = vmatpush1.bf16.msra.mxu0 0
        %3175 = vmatprep.subr.bf16.mxu0 0
        %3176 = vmatpush1.bf16.msra.mxu0 0
        %3177 = vmatprep.subr.bf16.mxu0 0
        %3178 = vmatpush1.bf16.msra.mxu0 0
        %3179 = vmatprep.subr.bf16.mxu0 0
        %3180 = vmatpush1.bf16.msra.mxu0 0
        %3181 = vmatprep.subr.bf16.mxu0 0
        %3182 = vmatpush1.bf16.msra.mxu0 0
        %3183 = vmatprep.subr.bf16.mxu0 0
        %3184 = vmatpush1.bf16.msra.mxu0 0
        %3185 = vmatprep.subr.bf16.mxu0 0
        %3186 = vmatpush1.bf16.msra.mxu0 0
        %3187 = vmatprep.subr.bf16.mxu0 0
        %3188 = vmatpush1.bf16.msra.mxu0 0
        %3189 = vmatprep.mubr.bf16.mxu0 0
        %3190 = vmatmul.mubr.bf16.gmra.mrb[0].mxu0 %v3155
        %v3191 = vpop.f32.mrb[0].mxu0
        %v3192 = vadd.f32 0.0, %v3191
        %v3193 = vpop.f32.mrb[0].mxu0
        %v3194 = vadd.f32 0.0, %v3193
        %v3195 = vpop.f32.mrb[0].mxu0
        %v3196 = vadd.f32 0.0, %v3195
        %v3197 = vpop.f32.mrb[0].mxu0
        %v3198 = vadd.f32 0.0, %v3197
        %3199 = vdwg.mxu0
        %3200 = vmatprep.subr.bf16.mxu0 %v3149
        %3201 = vmatpush1.bf16.msra.mxu0 %v3148
        %3202 = vmatprep.subr.bf16.mxu0 0
        %3203 = vmatpush1.bf16.msra.mxu0 0
        %3204 = vmatprep.subr.bf16.mxu0 0
        %3205 = vmatpush1.bf16.msra.mxu0 0
        %3206 = vmatprep.subr.bf16.mxu0 0
        %3207 = vmatpush1.bf16.msra.mxu0 0
        %3208 = vmatprep.subr.bf16.mxu0 0
        %3209 = vmatpush1.bf16.msra.mxu0 0
        %3210 = vmatprep.subr.bf16.mxu0 0
        %3211 = vmatpush1.bf16.msra.mxu0 0
        %3212 = vmatprep.subr.bf16.mxu0 0
        %3213 = vmatpush1.bf16.msra.mxu0 0
        %3214 = vmatprep.subr.bf16.mxu0 0
        %3215 = vmatpush1.bf16.msra.mxu0 0
        %3216 = vmatprep.subr.bf16.mxu0 0
        %3217 = vmatpush1.bf16.msra.mxu0 0
        %3218 = vmatprep.subr.bf16.mxu0 0
        %3219 = vmatpush1.bf16.msra.mxu0 0
        %3220 = vmatprep.subr.bf16.mxu0 0
        %3221 = vmatpush1.bf16.msra.mxu0 0
        %3222 = vmatprep.subr.bf16.mxu0 0
        %3223 = vmatpush1.bf16.msra.mxu0 0
        %3224 = vmatprep.subr.bf16.mxu0 0
        %3225 = vmatpush1.bf16.msra.mxu0 0
        %3226 = vmatprep.subr.bf16.mxu0 0
        %3227 = vmatpush1.bf16.msra.mxu0 0
        %3228 = vmatprep.subr.bf16.mxu0 0
        %3229 = vmatpush1.bf16.msra.mxu0 0
        %3230 = vmatprep.subr.bf16.mxu0 0
        %3231 = vmatpush1.bf16.msra.mxu0 0
        %3232 = vmatprep.mubr.bf16.mxu0 0
        %3233 = vmatmul.mubr.bf16.gmra.mrb[0].mxu0 %v3155
        %v3234 = vpop.f32.mrb[0].mxu0
        %v3235 = vadd.f32 0.0, %v3234
        %v3236 = vpop.f32.mrb[0].mxu0
        %v3237 = vadd.f32 0.0, %v3236
        %v3238 = vpop.f32.mrb[0].mxu0
        %v3239 = vadd.f32 0.0, %v3238
        %v3240 = vpop.f32.mrb[0].mxu0
        %v3241 = vadd.f32 0.0, %v3240
        %3242 = vdwg.mxu0
        %v3243 = vadd.f32 %v3119, %v3192
        %v3244 = vadd.f32 %v3120, %v3194
        %v3245 = vadd.f32 %v3121, %v3235
        %v3246 = vadd.f32 %v3122, %v3237
        %v3247 = vadd.f32 %v3123, %v3196
        %v3248 = vadd.f32 %v3124, %v3198
        %v3249 = vadd.f32 %v3125, %v3239
        %v3250 = vadd.f32 %v3126, %v3241
        %s3251 = scalar_lea.vmem %s0, 184
        %v3252 = vld [vmem:[%s3251] sm:$0xf]
        %v3253 = vld [vmem:[%s3251 + $0x4] sm:$0xf]
        %v3256 = vunpack.c.l.b16 %v3252
        %v3257 = vunpack.c.l.b16 %v3253
        %v3258 = vpack.c.b16 %v3257, %v3256
        %3259 = vrot.lane.b32.xlu0 %v2624, 44
        %v3260 = vpop.permute.xlu0 %3259
        %3261 = vrot.lane.b32.xlu0 %v2625, 44
        %v3262 = vpop.permute.xlu0 %3261
        %3263 = vrot.lane.b32.xlu0 %v2626, 44
        %v3264 = vpop.permute.xlu0 %3263
        %3265 = vrot.lane.b32.xlu0 %v2627, 44
        %v3266 = vpop.permute.xlu0 %3265
        %3267 = vrot.lane.b32.xlu0 %v2628, 44
        %v3268 = vpop.permute.xlu0 %3267
        %vm3269 = vcmask 359424
        %v3270 = vsel %vm3269, %v3260, %v3262
        %v3271 = vsel %vm3269, %v3262, %v3264
        %v3272 = vsel %vm3269, %v3264, %v3266
        %v3273 = vsel %vm3269, %v3266, %v3268
        %v3279 = vsel %vm453, %v3258, 0
        %3281 = vmatprep.subr.bf16.mxu0 %v3271
        %3282 = vmatpush1.bf16.msra.mxu0 %v3270
        %3283 = vmatprep.subr.bf16.mxu0 0
        %3284 = vmatpush1.bf16.msra.mxu0 0
        %3285 = vmatprep.subr.bf16.mxu0 0
        %3286 = vmatpush1.bf16.msra.mxu0 0
        %3287 = vmatprep.subr.bf16.mxu0 0
        %3288 = vmatpush1.bf16.msra.mxu0 0
        %3289 = vmatprep.subr.bf16.mxu0 0
        %3290 = vmatpush1.bf16.msra.mxu0 0
        %3291 = vmatprep.subr.bf16.mxu0 0
        %3292 = vmatpush1.bf16.msra.mxu0 0
        %3293 = vmatprep.subr.bf16.mxu0 0
        %3294 = vmatpush1.bf16.msra.mxu0 0
        %3295 = vmatprep.subr.bf16.mxu0 0
        %3296 = vmatpush1.bf16.msra.mxu0 0
        %3297 = vmatprep.subr.bf16.mxu0 0
        %3298 = vmatpush1.bf16.msra.mxu0 0
        %3299 = vmatprep.subr.bf16.mxu0 0
        %3300 = vmatpush1.bf16.msra.mxu0 0
        %3301 = vmatprep.subr.bf16.mxu0 0
        %3302 = vmatpush1.bf16.msra.mxu0 0
        %3303 = vmatprep.subr.bf16.mxu0 0
        %3304 = vmatpush1.bf16.msra.mxu0 0
        %3305 = vmatprep.subr.bf16.mxu0 0
        %3306 = vmatpush1.bf16.msra.mxu0 0
        %3307 = vmatprep.subr.bf16.mxu0 0
        %3308 = vmatpush1.bf16.msra.mxu0 0
        %3309 = vmatprep.subr.bf16.mxu0 0
        %3310 = vmatpush1.bf16.msra.mxu0 0
        %3311 = vmatprep.subr.bf16.mxu0 0
        %3312 = vmatpush1.bf16.msra.mxu0 0
        %3313 = vmatprep.mubr.bf16.mxu0 0
        %3314 = vmatmul.mubr.bf16.gmra.mrb[0].mxu0 %v3279
        %v3315 = vpop.f32.mrb[0].mxu0
        %v3316 = vadd.f32 0.0, %v3315
        %v3317 = vpop.f32.mrb[0].mxu0
        %v3318 = vadd.f32 0.0, %v3317
        %v3319 = vpop.f32.mrb[0].mxu0
        %v3320 = vadd.f32 0.0, %v3319
        %v3321 = vpop.f32.mrb[0].mxu0
        %v3322 = vadd.f32 0.0, %v3321
        %3323 = vdwg.mxu0
        %3324 = vmatprep.subr.bf16.mxu0 %v3273
        %3325 = vmatpush1.bf16.msra.mxu0 %v3272
        %3326 = vmatprep.subr.bf16.mxu0 0
        %3327 = vmatpush1.bf16.msra.mxu0 0
        %3328 = vmatprep.subr.bf16.mxu0 0
        %3329 = vmatpush1.bf16.msra.mxu0 0
        %3330 = vmatprep.subr.bf16.mxu0 0
        %3331 = vmatpush1.bf16.msra.mxu0 0
        %3332 = vmatprep.subr.bf16.mxu0 0
        %3333 = vmatpush1.bf16.msra.mxu0 0
        %3334 = vmatprep.subr.bf16.mxu0 0
        %3335 = vmatpush1.bf16.msra.mxu0 0
        %3336 = vmatprep.subr.bf16.mxu0 0
        %3337 = vmatpush1.bf16.msra.mxu0 0
        %3338 = vmatprep.subr.bf16.mxu0 0
        %3339 = vmatpush1.bf16.msra.mxu0 0
        %3340 = vmatprep.subr.bf16.mxu0 0
        %3341 = vmatpush1.bf16.msra.mxu0 0
        %3342 = vmatprep.subr.bf16.mxu0 0
        %3343 = vmatpush1.bf16.msra.mxu0 0
        %3344 = vmatprep.subr.bf16.mxu0 0
        %3345 = vmatpush1.bf16.msra.mxu0 0
        %3346 = vmatprep.subr.bf16.mxu0 0
        %3347 = vmatpush1.bf16.msra.mxu0 0
        %3348 = vmatprep.subr.bf16.mxu0 0
        %3349 = vmatpush1.bf16.msra.mxu0 0
        %3350 = vmatprep.subr.bf16.mxu0 0
        %3351 = vmatpush1.bf16.msra.mxu0 0
        %3352 = vmatprep.subr.bf16.mxu0 0
        %3353 = vmatpush1.bf16.msra.mxu0 0
        %3354 = vmatprep.subr.bf16.mxu0 0
        %3355 = vmatpush1.bf16.msra.mxu0 0
        %3356 = vmatprep.mubr.bf16.mxu0 0
        %3357 = vmatmul.mubr.bf16.gmra.mrb[0].mxu0 %v3279
        %v3358 = vpop.f32.mrb[0].mxu0
        %v3359 = vadd.f32 0.0, %v3358
        %v3360 = vpop.f32.mrb[0].mxu0
        %v3361 = vadd.f32 0.0, %v3360
        %v3362 = vpop.f32.mrb[0].mxu0
        %v3363 = vadd.f32 0.0, %v3362
        %v3364 = vpop.f32.mrb[0].mxu0
        %v3365 = vadd.f32 0.0, %v3364
        %3366 = vdwg.mxu0
        %v3367 = vadd.f32 %v3243, %v3316
        %v3368 = vadd.f32 %v3244, %v3318
        %v3369 = vadd.f32 %v3245, %v3359
        %v3370 = vadd.f32 %v3246, %v3361
        %v3371 = vadd.f32 %v3247, %v3320
        %v3372 = vadd.f32 %v3248, %v3322
        %v3373 = vadd.f32 %v3249, %v3363
        %v3374 = vadd.f32 %v3250, %v3365
        %s3375 = scalar_lea.vmem %s0, 192
        %v3376 = vld [vmem:[%s3375] sm:$0xf]
        %v3377 = vld [vmem:[%s3375 + $0x4] sm:$0xf]
        %v3380 = vunpack.c.l.b16 %v3376
        %v3381 = vunpack.c.l.b16 %v3377
        %v3382 = vpack.c.b16 %v3381, %v3380
        %3383 = vrot.lane.b32.xlu0 %v2624, 36
        %v3384 = vpop.permute.xlu0 %3383
        %3385 = vrot.lane.b32.xlu0 %v2625, 36
        %v3386 = vpop.permute.xlu0 %3385
        %3387 = vrot.lane.b32.xlu0 %v2626, 36
        %v3388 = vpop.permute.xlu0 %3387
        %3389 = vrot.lane.b32.xlu0 %v2627, 36
        %v3390 = vpop.permute.xlu0 %3389
        %3391 = vrot.lane.b32.xlu0 %v2628, 36
        %v3392 = vpop.permute.xlu0 %3391
        %vm3393 = vcmask 293888
        %v3394 = vsel %vm3393, %v3384, %v3386
        %v3395 = vsel %vm3393, %v3386, %v3388
        %v3396 = vsel %vm3393, %v3388, %v3390
        %v3397 = vsel %vm3393, %v3390, %v3392
        %v3403 = vsel %vm453, %v3382, 0
        %3405 = vmatprep.subr.bf16.mxu0 %v3395
        %3406 = vmatpush1.bf16.msra.mxu0 %v3394
        %3407 = vmatprep.subr.bf16.mxu0 0
        %3408 = vmatpush1.bf16.msra.mxu0 0
        %3409 = vmatprep.subr.bf16.mxu0 0
        %3410 = vmatpush1.bf16.msra.mxu0 0
        %3411 = vmatprep.subr.bf16.mxu0 0
        %3412 = vmatpush1.bf16.msra.mxu0 0
        %3413 = vmatprep.subr.bf16.mxu0 0
        %3414 = vmatpush1.bf16.msra.mxu0 0
        %3415 = vmatprep.subr.bf16.mxu0 0
        %3416 = vmatpush1.bf16.msra.mxu0 0
        %3417 = vmatprep.subr.bf16.mxu0 0
        %3418 = vmatpush1.bf16.msra.mxu0 0
        %3419 = vmatprep.subr.bf16.mxu0 0
        %3420 = vmatpush1.bf16.msra.mxu0 0
        %3421 = vmatprep.subr.bf16.mxu0 0
        %3422 = vmatpush1.bf16.msra.mxu0 0
        %3423 = vmatprep.subr.bf16.mxu0 0
        %3424 = vmatpush1.bf16.msra.mxu0 0
        %3425 = vmatprep.subr.bf16.mxu0 0
        %3426 = vmatpush1.bf16.msra.mxu0 0
        %3427 = vmatprep.subr.bf16.mxu0 0
        %3428 = vmatpush1.bf16.msra.mxu0 0
        %3429 = vmatprep.subr.bf16.mxu0 0
        %3430 = vmatpush1.bf16.msra.mxu0 0
        %3431 = vmatprep.subr.bf16.mxu0 0
        %3432 = vmatpush1.bf16.msra.mxu0 0
        %3433 = vmatprep.subr.bf16.mxu0 0
        %3434 = vmatpush1.bf16.msra.mxu0 0
        %3435 = vmatprep.subr.bf16.mxu0 0
        %3436 = vmatpush1.bf16.msra.mxu0 0
        %3437 = vmatprep.mubr.bf16.mxu0 0
        %3438 = vmatmul.mubr.bf16.gmra.mrb[0].mxu0 %v3403
        %v3439 = vpop.f32.mrb[0].mxu0
        %v3440 = vadd.f32 0.0, %v3439
        %v3441 = vpop.f32.mrb[0].mxu0
        %v3442 = vadd.f32 0.0, %v3441
        %v3443 = vpop.f32.mrb[0].mxu0
        %v3444 = vadd.f32 0.0, %v3443
        %v3445 = vpop.f32.mrb[0].mxu0
        %v3446 = vadd.f32 0.0, %v3445
        %3447 = vdwg.mxu0
        %3448 = vmatprep.subr.bf16.mxu0 %v3397
        %3449 = vmatpush1.bf16.msra.mxu0 %v3396
        %3450 = vmatprep.subr.bf16.mxu0 0
        %3451 = vmatpush1.bf16.msra.mxu0 0
        %3452 = vmatprep.subr.bf16.mxu0 0
        %3453 = vmatpush1.bf16.msra.mxu0 0
        %3454 = vmatprep.subr.bf16.mxu0 0
        %3455 = vmatpush1.bf16.msra.mxu0 0
        %3456 = vmatprep.subr.bf16.mxu0 0
        %3457 = vmatpush1.bf16.msra.mxu0 0
        %3458 = vmatprep.subr.bf16.mxu0 0
        %3459 = vmatpush1.bf16.msra.mxu0 0
        %3460 = vmatprep.subr.bf16.mxu0 0
        %3461 = vmatpush1.bf16.msra.mxu0 0
        %3462 = vmatprep.subr.bf16.mxu0 0
        %3463 = vmatpush1.bf16.msra.mxu0 0
        %3464 = vmatprep.subr.bf16.mxu0 0
        %3465 = vmatpush1.bf16.msra.mxu0 0
        %3466 = vmatprep.subr.bf16.mxu0 0
        %3467 = vmatpush1.bf16.msra.mxu0 0
        %3468 = vmatprep.subr.bf16.mxu0 0
        %3469 = vmatpush1.bf16.msra.mxu0 0
        %3470 = vmatprep.subr.bf16.mxu0 0
        %3471 = vmatpush1.bf16.msra.mxu0 0
        %3472 = vmatprep.subr.bf16.mxu0 0
        %3473 = vmatpush1.bf16.msra.mxu0 0
        %3474 = vmatprep.subr.bf16.mxu0 0
        %3475 = vmatpush1.bf16.msra.mxu0 0
        %3476 = vmatprep.subr.bf16.mxu0 0
        %3477 = vmatpush1.bf16.msra.mxu0 0
        %3478 = vmatprep.subr.bf16.mxu0 0
        %3479 = vmatpush1.bf16.msra.mxu0 0
        %3480 = vmatprep.mubr.bf16.mxu0 0
        %3481 = vmatmul.mubr.bf16.gmra.mrb[0].mxu0 %v3403
        %v3482 = vpop.f32.mrb[0].mxu0
        %v3483 = vadd.f32 0.0, %v3482
        %v3484 = vpop.f32.mrb[0].mxu0
        %v3485 = vadd.f32 0.0, %v3484
        %v3486 = vpop.f32.mrb[0].mxu0
        %v3487 = vadd.f32 0.0, %v3486
        %v3488 = vpop.f32.mrb[0].mxu0
        %v3489 = vadd.f32 0.0, %v3488
        %3490 = vdwg.mxu0
        %v3491 = vadd.f32 %v3367, %v3440
        %v3492 = vadd.f32 %v3368, %v3442
        %v3493 = vadd.f32 %v3369, %v3483
        %v3494 = vadd.f32 %v3370, %v3485
        %v3495 = vadd.f32 %v3371, %v3444
        %v3496 = vadd.f32 %v3372, %v3446
        %v3497 = vadd.f32 %v3373, %v3487
        %v3498 = vadd.f32 %v3374, %v3489
        %s3499 = scalar_lea.vmem %s0, 200
        %v3500 = vld [vmem:[%s3499] sm:$0xf]
        %v3501 = vld [vmem:[%s3499 + $0x4] sm:$0xf]
        %v3504 = vunpack.c.l.b16 %v3500
        %v3505 = vunpack.c.l.b16 %v3501
        %v3506 = vpack.c.b16 %v3505, %v3504
        %3507 = vrot.lane.b32.xlu0 %v2624, 35
        %v3508 = vpop.permute.xlu0 %3507
        %3509 = vrot.lane.b32.xlu0 %v2625, 35
        %v3510 = vpop.permute.xlu0 %3509
        %3511 = vrot.lane.b32.xlu0 %v2626, 35
        %v3512 = vpop.permute.xlu0 %3511
        %3513 = vrot.lane.b32.xlu0 %v2627, 35
        %v3514 = vpop.permute.xlu0 %3513
        %3515 = vrot.lane.b32.xlu0 %v2628, 35
        %v3516 = vpop.permute.xlu0 %3515
        %vm3517 = vcmask 285696
        %v3518 = vsel %vm3517, %v3508, %v3510
        %v3519 = vsel %vm3517, %v3510, %v3512
        %v3520 = vsel %vm3517, %v3512, %v3514
        %v3521 = vsel %vm3517, %v3514, %v3516
        %v3527 = vsel %vm453, %v3506, 0
        %3529 = vmatprep.subr.bf16.mxu0 %v3519
        %3530 = vmatpush1.bf16.msra.mxu0 %v3518
        %3531 = vmatprep.subr.bf16.mxu0 0
        %3532 = vmatpush1.bf16.msra.mxu0 0
        %3533 = vmatprep.subr.bf16.mxu0 0
        %3534 = vmatpush1.bf16.msra.mxu0 0
        %3535 = vmatprep.subr.bf16.mxu0 0
        %3536 = vmatpush1.bf16.msra.mxu0 0
        %3537 = vmatprep.subr.bf16.mxu0 0
        %3538 = vmatpush1.bf16.msra.mxu0 0
        %3539 = vmatprep.subr.bf16.mxu0 0
        %3540 = vmatpush1.bf16.msra.mxu0 0
        %3541 = vmatprep.subr.bf16.mxu0 0
        %3542 = vmatpush1.bf16.msra.mxu0 0
        %3543 = vmatprep.subr.bf16.mxu0 0
        %3544 = vmatpush1.bf16.msra.mxu0 0
        %3545 = vmatprep.subr.bf16.mxu0 0
        %3546 = vmatpush1.bf16.msra.mxu0 0
        %3547 = vmatprep.subr.bf16.mxu0 0
        %3548 = vmatpush1.bf16.msra.mxu0 0
        %3549 = vmatprep.subr.bf16.mxu0 0
        %3550 = vmatpush1.bf16.msra.mxu0 0
        %3551 = vmatprep.subr.bf16.mxu0 0
        %3552 = vmatpush1.bf16.msra.mxu0 0
        %3553 = vmatprep.subr.bf16.mxu0 0
        %3554 = vmatpush1.bf16.msra.mxu0 0
        %3555 = vmatprep.subr.bf16.mxu0 0
        %3556 = vmatpush1.bf16.msra.mxu0 0
        %3557 = vmatprep.subr.bf16.mxu0 0
        %3558 = vmatpush1.bf16.msra.mxu0 0
        %3559 = vmatprep.subr.bf16.mxu0 0
        %3560 = vmatpush1.bf16.msra.mxu0 0
        %3561 = vmatprep.mubr.bf16.mxu0 0
        %3562 = vmatmul.mubr.bf16.gmra.mrb[0].mxu0 %v3527
        %v3563 = vpop.f32.mrb[0].mxu0
        %v3564 = vadd.f32 0.0, %v3563
        %v3565 = vpop.f32.mrb[0].mxu0
        %v3566 = vadd.f32 0.0, %v3565
        %v3567 = vpop.f32.mrb[0].mxu0
        %v3568 = vadd.f32 0.0, %v3567
        %v3569 = vpop.f32.mrb[0].mxu0
        %v3570 = vadd.f32 0.0, %v3569
        %3571 = vdwg.mxu0
        %3572 = vmatprep.subr.bf16.mxu0 %v3521
        %3573 = vmatpush1.bf16.msra.mxu0 %v3520
        %3574 = vmatprep.subr.bf16.mxu0 0
        %3575 = vmatpush1.bf16.msra.mxu0 0
        %3576 = vmatprep.subr.bf16.mxu0 0
        %3577 = vmatpush1.bf16.msra.mxu0 0
        %3578 = vmatprep.subr.bf16.mxu0 0
        %3579 = vmatpush1.bf16.msra.mxu0 0
        %3580 = vmatprep.subr.bf16.mxu0 0
        %3581 = vmatpush1.bf16.msra.mxu0 0
        %3582 = vmatprep.subr.bf16.mxu0 0
        %3583 = vmatpush1.bf16.msra.mxu0 0
        %3584 = vmatprep.subr.bf16.mxu0 0
        %3585 = vmatpush1.bf16.msra.mxu0 0
        %3586 = vmatprep.subr.bf16.mxu0 0
        %3587 = vmatpush1.bf16.msra.mxu0 0
        %3588 = vmatprep.subr.bf16.mxu0 0
        %3589 = vmatpush1.bf16.msra.mxu0 0
        %3590 = vmatprep.subr.bf16.mxu0 0
        %3591 = vmatpush1.bf16.msra.mxu0 0
        %3592 = vmatprep.subr.bf16.mxu0 0
        %3593 = vmatpush1.bf16.msra.mxu0 0
        %3594 = vmatprep.subr.bf16.mxu0 0
        %3595 = vmatpush1.bf16.msra.mxu0 0
        %3596 = vmatprep.subr.bf16.mxu0 0
        %3597 = vmatpush1.bf16.msra.mxu0 0
        %3598 = vmatprep.subr.bf16.mxu0 0
        %3599 = vmatpush1.bf16.msra.mxu0 0
        %3600 = vmatprep.subr.bf16.mxu0 0
        %3601 = vmatpush1.bf16.msra.mxu0 0
        %3602 = vmatprep.subr.bf16.mxu0 0
        %3603 = vmatpush1.bf16.msra.mxu0 0
        %3604 = vmatprep.mubr.bf16.mxu0 0
        %3605 = vmatmul.mubr.bf16.gmra.mrb[0].mxu0 %v3527
        %v3606 = vpop.f32.mrb[0].mxu0
        %v3607 = vadd.f32 0.0, %v3606
        %v3608 = vpop.f32.mrb[0].mxu0
        %v3609 = vadd.f32 0.0, %v3608
        %v3610 = vpop.f32.mrb[0].mxu0
        %v3611 = vadd.f32 0.0, %v3610
        %v3612 = vpop.f32.mrb[0].mxu0
        %v3613 = vadd.f32 0.0, %v3612
        %3614 = vdwg.mxu0
        %v3615 = vadd.f32 %v3491, %v3564
        %v3616 = vadd.f32 %v3492, %v3566
        %v3617 = vadd.f32 %v3493, %v3607
        %v3618 = vadd.f32 %v3494, %v3609
        %v3619 = vadd.f32 %v3495, %v3568
        %v3620 = vadd.f32 %v3496, %v3570
        %v3621 = vadd.f32 %v3497, %v3611
        %v3622 = vadd.f32 %v3498, %v3613
        %s3623 = scalar_lea.vmem %s0, 208
        %v3624 = vld [vmem:[%s3623] sm:$0xf]
        %v3625 = vld [vmem:[%s3623 + $0x4] sm:$0xf]
        %v3628 = vunpack.c.l.b16 %v3624
        %v3629 = vunpack.c.l.b16 %v3625
        %v3630 = vpack.c.b16 %v3629, %v3628
        %3631 = vrot.lane.b32.xlu0 %v2624, 34
        %v3632 = vpop.permute.xlu0 %3631
        %3633 = vrot.lane.b32.xlu0 %v2625, 34
        %v3634 = vpop.permute.xlu0 %3633
        %3635 = vrot.lane.b32.xlu0 %v2626, 34
        %v3636 = vpop.permute.xlu0 %3635
        %3637 = vrot.lane.b32.xlu0 %v2627, 34
        %v3638 = vpop.permute.xlu0 %3637
        %3639 = vrot.lane.b32.xlu0 %v2628, 34
        %v3640 = vpop.permute.xlu0 %3639
        %vm3641 = vcmask 277504
        %v3642 = vsel %vm3641, %v3632, %v3634
        %v3643 = vsel %vm3641, %v3634, %v3636
        %v3644 = vsel %vm3641, %v3636, %v3638
        %v3645 = vsel %vm3641, %v3638, %v3640
        %v3651 = vsel %vm453, %v3630, 0
        %3653 = vmatprep.subr.bf16.mxu0 %v3643
        %3654 = vmatpush1.bf16.msra.mxu0 %v3642
        %3655 = vmatprep.subr.bf16.mxu0 0
        %3656 = vmatpush1.bf16.msra.mxu0 0
        %3657 = vmatprep.subr.bf16.mxu0 0
        %3658 = vmatpush1.bf16.msra.mxu0 0
        %3659 = vmatprep.subr.bf16.mxu0 0
        %3660 = vmatpush1.bf16.msra.mxu0 0
        %3661 = vmatprep.subr.bf16.mxu0 0
        %3662 = vmatpush1.bf16.msra.mxu0 0
        %3663 = vmatprep.subr.bf16.mxu0 0
        %3664 = vmatpush1.bf16.msra.mxu0 0
        %3665 = vmatprep.subr.bf16.mxu0 0
        %3666 = vmatpush1.bf16.msra.mxu0 0
        %3667 = vmatprep.subr.bf16.mxu0 0
        %3668 = vmatpush1.bf16.msra.mxu0 0
        %3669 = vmatprep.subr.bf16.mxu0 0
        %3670 = vmatpush1.bf16.msra.mxu0 0
        %3671 = vmatprep.subr.bf16.mxu0 0
        %3672 = vmatpush1.bf16.msra.mxu0 0
        %3673 = vmatprep.subr.bf16.mxu0 0
        %3674 = vmatpush1.bf16.msra.mxu0 0
        %3675 = vmatprep.subr.bf16.mxu0 0
        %3676 = vmatpush1.bf16.msra.mxu0 0
        %3677 = vmatprep.subr.bf16.mxu0 0
        %3678 = vmatpush1.bf16.msra.mxu0 0
        %3679 = vmatprep.subr.bf16.mxu0 0
        %3680 = vmatpush1.bf16.msra.mxu0 0
        %3681 = vmatprep.subr.bf16.mxu0 0
        %3682 = vmatpush1.bf16.msra.mxu0 0
        %3683 = vmatprep.subr.bf16.mxu0 0
        %3684 = vmatpush1.bf16.msra.mxu0 0
        %3685 = vmatprep.mubr.bf16.mxu0 0
        %3686 = vmatmul.mubr.bf16.gmra.mrb[0].mxu0 %v3651
        %v3687 = vpop.f32.mrb[0].mxu0
        %v3688 = vadd.f32 0.0, %v3687
        %v3689 = vpop.f32.mrb[0].mxu0
        %v3690 = vadd.f32 0.0, %v3689
        %v3691 = vpop.f32.mrb[0].mxu0
        %v3692 = vadd.f32 0.0, %v3691
        %v3693 = vpop.f32.mrb[0].mxu0
        %v3694 = vadd.f32 0.0, %v3693
        %3695 = vdwg.mxu0
        %3696 = vmatprep.subr.bf16.mxu0 %v3645
        %3697 = vmatpush1.bf16.msra.mxu0 %v3644
        %3698 = vmatprep.subr.bf16.mxu0 0
        %3699 = vmatpush1.bf16.msra.mxu0 0
        %3700 = vmatprep.subr.bf16.mxu0 0
        %3701 = vmatpush1.bf16.msra.mxu0 0
        %3702 = vmatprep.subr.bf16.mxu0 0
        %3703 = vmatpush1.bf16.msra.mxu0 0
        %3704 = vmatprep.subr.bf16.mxu0 0
        %3705 = vmatpush1.bf16.msra.mxu0 0
        %3706 = vmatprep.subr.bf16.mxu0 0
        %3707 = vmatpush1.bf16.msra.mxu0 0
        %3708 = vmatprep.subr.bf16.mxu0 0
        %3709 = vmatpush1.bf16.msra.mxu0 0
        %3710 = vmatprep.subr.bf16.mxu0 0
        %3711 = vmatpush1.bf16.msra.mxu0 0
        %3712 = vmatprep.subr.bf16.mxu0 0
        %3713 = vmatpush1.bf16.msra.mxu0 0
        %3714 = vmatprep.subr.bf16.mxu0 0
        %3715 = vmatpush1.bf16.msra.mxu0 0
        %3716 = vmatprep.subr.bf16.mxu0 0
        %3717 = vmatpush1.bf16.msra.mxu0 0
        %3718 = vmatprep.subr.bf16.mxu0 0
        %3719 = vmatpush1.bf16.msra.mxu0 0
        %3720 = vmatprep.subr.bf16.mxu0 0
        %3721 = vmatpush1.bf16.msra.mxu0 0
        %3722 = vmatprep.subr.bf16.mxu0 0
        %3723 = vmatpush1.bf16.msra.mxu0 0
        %3724 = vmatprep.subr.bf16.mxu0 0
        %3725 = vmatpush1.bf16.msra.mxu0 0
        %3726 = vmatprep.subr.bf16.mxu0 0
        %3727 = vmatpush1.bf16.msra.mxu0 0
        %3728 = vmatprep.mubr.bf16.mxu0 0
        %3729 = vmatmul.mubr.bf16.gmra.mrb[0].mxu0 %v3651
        %v3730 = vpop.f32.mrb[0].mxu0
        %v3731 = vadd.f32 0.0, %v3730
        %v3732 = vpop.f32.mrb[0].mxu0
        %v3733 = vadd.f32 0.0, %v3732
        %v3734 = vpop.f32.mrb[0].mxu0
        %v3735 = vadd.f32 0.0, %v3734
        %v3736 = vpop.f32.mrb[0].mxu0
        %v3737 = vadd.f32 0.0, %v3736
        %3738 = vdwg.mxu0
        %v3739 = vadd.f32 %v3615, %v3688
        %v3740 = vadd.f32 %v3616, %v3690
        %v3741 = vadd.f32 %v3617, %v3731
        %v3742 = vadd.f32 %v3618, %v3733
        %v3743 = vadd.f32 %v3619, %v3692
        %v3744 = vadd.f32 %v3620, %v3694
        %v3745 = vadd.f32 %v3621, %v3735
        %v3746 = vadd.f32 %v3622, %v3737
        %v3747 = vld [vmem:[%s352] sm:$0xf]
        %v3749 = vlaneseq
        %v3750 = vshrl.u32 %v3749, 7
        %v3751 = vsub.s32 0, %v3750
        %v3752 = vrot.slane %v3747, %v3751
        %v3753 = vlaneseq
        %v3754 = vshrl.u32 %v3753, 7
        %v3755 = vsub.s32 1, %v3754
        %v3756 = vrot.slane %v3747, %v3755
        %v3757 = vlaneseq
        %v3758 = vshrl.u32 %v3757, 7
        %v3759 = vsub.s32 2, %v3758
        %v3760 = vrot.slane %v3747, %v3759
        %v3761 = vlaneseq
        %v3762 = vshrl.u32 %v3761, 7
        %v3763 = vsub.s32 3, %v3762
        %v3764 = vrot.slane %v3747, %v3763
        %v3769 = vmul.f32 %v3739, %v3752
        %v3770 = vmul.f32 %v3740, %v3756
        %v3771 = vmul.f32 %v3741, %v3760
        %v3772 = vmul.f32 %v3742, %v3764
        %v3773 = vmul.f32 %v3743, %v3752
        %v3774 = vmul.f32 %v3744, %v3756
        %v3775 = vmul.f32 %v3745, %v3760
        %v3776 = vmul.f32 %v3746, %v3764
        %v3777 = vadd.f32 %v3769, %v3770
        %v3778 = vadd.f32 %v3777, %v3771
        %v3779 = vadd.f32 %v3778, %v3772
        %3780 = vadd.xlane.f32.xlu0 %v3779
        %v3781 = vpop.xlane.xlu0 %3780
        %v3782 = vadd.f32 %v3773, %v3774
        %v3783 = vadd.f32 %v3782, %v3775
        %v3784 = vadd.f32 %v3783, %v3776
        %3785 = vadd.xlane.f32.xlu0 %v3784
        %v3786 = vpop.xlane.xlu0 %3785
        %vm3787 = vcmask 7168
        %3788 = vst.msk [vmem:[%s361] sm:$0xff] %vm3787, %v3781
        %3789 = vst.msk [vmem:[%s361 + $0x8] sm:$0xff] %vm3787, %v3786
        %v3790 = vmul.f32 %v3769, %v3739
        %v3791 = vmul.f32 %v3770, %v3740
        %v3792 = vmul.f32 %v3771, %v3741
        %v3793 = vmul.f32 %v3772, %v3742
        %v3794 = vmul.f32 %v3773, %v3743
        %v3795 = vmul.f32 %v3774, %v3744
        %v3796 = vmul.f32 %v3775, %v3745
        %v3797 = vmul.f32 %v3776, %v3746
        %v3798 = vadd.f32 %v3790, %v3791
        %v3799 = vadd.f32 %v3798, %v3792
        %v3800 = vadd.f32 %v3799, %v3793
        %3801 = vadd.xlane.f32.xlu0 %v3800
        %v3802 = vpop.xlane.xlu0 %3801
        %v3803 = vadd.f32 %v3794, %v3795
        %v3804 = vadd.f32 %v3803, %v3796
        %v3805 = vadd.f32 %v3804, %v3797
        %3806 = vadd.xlane.f32.xlu0 %v3805
        %v3807 = vpop.xlane.xlu0 %3806
        %3808 = vst.msk [vmem:[%s370] sm:$0xff] %vm3787, %v3802
        %3809 = vst.msk [vmem:[%s370 + $0x8] sm:$0xff] %vm3787, %v3807
        %p3810 = scmp.lt.s32.totalorder %s24, 1
        %s3811 = scalar_select %p3810, %s24, 1
        %p3812 = scmp.lt.s32.totalorder %s25, 1
        %s3813 = scalar_select %p3812, %s25, 1
        %s3814 = smul.addr %s3813, 2
        %s3815 = smul.addr %s3811, 4
        %s3816 = sadd.s32 %s3814, %s3815
        %s3817 = smul.addr %s3816, 8
        %s3818 = scalar_lea.vmem %s4, %s3817
        %p3819 = scmp.lt.s32.totalorder %s24, 1
        %s3820 = scalar_select %p3819, %s24, 1
        %p3821 = scmp.lt.s32.totalorder %s25, 1
        %s3822 = scalar_select %p3821, %s25, 1
        %s3823 = smul.addr %s3822, 2
        %s3824 = smul.addr %s3820, 4
        %s3825 = sadd.s32 %s3823, %s3824
        %s3826 = smul.addr %s3825, 8
        %s3827 = scalar_lea.vmem %s5, %s3826
        // Predicated region
        $region64: #{tpu_custom_call.1} parent=54 // pred_check
          %p3828 = pneg %p159
        $region65: #{tpu_custom_call.1} parent=54 // pred_check_branch
          %3830 = sbr.rel (%p3828) target = $region67
        $region66: #{tpu_custom_call.1} parent=54 // pred_region
          _
        $region67: #{tpu_custom_call.1} parent=54 // pred_fallthru
          _
        // Predicated region
        $region68: #{tpu_custom_call.1} parent=54 // pred_check
          %p3831 = pneg %p187
        $region69: #{tpu_custom_call.1} parent=54 // pred_check_branch
          %3833 = sbr.rel (%p3831) target = $region71
        $region70: #{tpu_custom_call.1} parent=54 // pred_region
          _
        $region71: #{tpu_custom_call.1} parent=54 // pred_fallthru
          _
      $region55: #{tpu_custom_call.1} parent=5 // pred_fallthru
        _
      %p3834 = scmp.le.s32.totalorder 2, %s15
      // Predicated region
      $region72: #{tpu_custom_call.1} parent=5 // pred_check
        %p3835 = pneg %p3834
      $region73: #{tpu_custom_call.1} parent=5 // pred_check_branch
        %3837 = sbr.rel (%p3835) target = $region75
      $region74: #{tpu_custom_call.1} parent=5 // pred_region
        %s3838 = ssub.s32 %s15, 2
        // Predicated region
        $region76: #{tpu_custom_call.1} parent=74 // pred_check
          %p3839 = pneg %p165
        $region77: #{tpu_custom_call.1} parent=74 // pred_check_branch
          %3841 = sbr.rel (%p3839) target = $region79
        $region78: #{tpu_custom_call.1} parent=74 // pred_region
          %p3842 = scmp.lt.s32.totalorder %s26, 1
          %s3843 = scalar_select %p3842, %s26, 1
          %p3844 = scmp.lt.s32.totalorder %s27, 1
          %s3845 = scalar_select %p3844, %s27, 1
          %s3846 = smul.addr %s3845, 2
          %s3847 = smul.addr %s3843, 4
          %s3848 = sadd.s32 %s3846, %s3847
          %s3849 = smul.addr %s3848, 8
          %s3850 = scalar_lea.vmem %s4, %s3849
        $region79: #{tpu_custom_call.1} parent=74 // pred_fallthru
          _
        // Predicated region
        $region80: #{tpu_custom_call.1} parent=74 // pred_check
          %p3851 = pneg %p193
        $region81: #{tpu_custom_call.1} parent=74 // pred_check_branch
          %3853 = sbr.rel (%p3851) target = $region83
        $region82: #{tpu_custom_call.1} parent=74 // pred_region
          %p3854 = scmp.lt.s32.totalorder %s26, 1
          %s3855 = scalar_select %p3854, %s26, 1
          %p3856 = scmp.lt.s32.totalorder %s27, 1
          %s3857 = scalar_select %p3856, %s27, 1
          %s3858 = smul.addr %s3857, 2
          %s3859 = smul.addr %s3855, 4
          %s3860 = sadd.s32 %s3858, %s3859
          %s3861 = smul.addr %s3860, 8
          %s3862 = scalar_lea.vmem %s5, %s3861
        $region83: #{tpu_custom_call.1} parent=74 // pred_fallthru
          _
      $region75: #{tpu_custom_call.1} parent=5 // pred_fallthru
        _
    $region6: #{tpu_custom_call.1} parent=1 // loop_footer
      %s19 = sadd.s32 1, %s15
    $region7: #{tpu_custom_call.1} parent=1 // loop_footer_branch
      %14 = sbr.rel target = $region3
    $region8: #{tpu_custom_call.1} parent=1 // loop_exit
      _
    %3863 = vsyncpa [#allocation5], 1
    %s3864 = scalar_lea.sflag [#allocation5], 1
    %3865 = vsyncpa %s3864, 1

</llo_original>
